<compile_context>
chip_gen: v7x
topology: tpu7x:2x2x1
jax: 0.10.0
libtpu: 0.0.40
codegen_flags: <defaults>
</compile_context>

<pallas_src>
import functools
import math

import jax
import jax.numpy as jnp
from jax.experimental import pallas as pl
from jax.experimental.pallas import tpu as pltpu

BN_EPS = 1e-5
_LANE = 128   # lane width: pad spatial extents to multiples of this
_CPACK = 16   # bf16 sublane packing: keep channel-block offsets aligned


# ------------------------------------------------------------------------- small utils
def _round_up(x, m):
    return (x + m - 1) // m * m


def _layer_dims(H, W):
    """Row pitch P, lane-padded spatial extent Mqp, padded-flat length Lp for HxW input."""
    P = W + 2
    Mqp = _round_up(H * P, _LANE)
    Lp = _round_up(2 * P + 2 + Mqp, _LANE)   # >= max tap start (2P+2) + slice length
    return P, Mqp, Lp


# ----------------------------------------------------------------------------- kernels
def _deconv_stacked_kernel(x_ref, w_ref, m_ref, y_ref, st_ref, *, P, Mqp):
    """Stacked-matmul ConvTranspose2d(k=4,s=2,p=1) phases + fused BN statistics.

    x_ref : (1, Cin_p, Lp)     padded-flat input (zero ring, lane padded), bf16
    w_ref : (4*Cout, 9*Cin_p)  block-sparse stacked (phase x tap) weight, bf16
    m_ref : (1, Mqp)           valid-column mask, f32
    y_ref : (1, 4*Cout, Mqp)   pre-BN phase-stacked output, bf16 (lane dense)
    st_ref: (1, 4*Cout, 2)     per-sample masked [sum, sum-of-squares], f32
    """
    # 9 distinct shifted tap slabs (deduplicated), stacked along the contraction axis.
    taps = [x_ref[0, :, pl.ds(ty * P + tx, Mqp)]
            for ty in range(3) for tx in range(3)]
    xs = jnp.concatenate(taps, axis=0)                                   # (9*Cin_p, Mqp)
    res = jnp.dot(w_ref[...], xs, preferred_element_type=jnp.float32)    # (4*Cout, Mqp)
    y_ref[0] = res.astype(y_ref.dtype)

    mask = m_ref[...]                                                    # (1, Mqp)
    v = res * mask
    st_ref[0, :, 0:1] = jnp.sum(v, axis=1, keepdims=True)                # sum(valid y)
    st_ref[0, :, 1:2] = jnp.sum(v * res, axis=1, keepdims=True)          # sum(valid y^2)


def _final_head_kernel(x_ref, sc_ref, sh_ref, w_ref, b_ref, o_ref):
    """Fused BN-apply + ReLU + 1x1 Conv (block-diagonal over the 4 phases) + Sigmoid.

    x_ref : (1, 4*NF, Mqp)   pre-BN phase-stacked activation, bf16
    sc_ref: (4*NF, 1)        gamma / sqrt(var+eps), tiled over phases, f32
    sh_ref: (4*NF, 1)        beta - mean*scale, tiled over phases, f32
    w_ref : (4*Cout, 4*NF)   block-diagonal 1x1-conv weight, bf16
    b_ref : (4*Cout, 1)      1x1-conv bias, tiled over phases, f32
    o_ref : (1, 4*Cout, Mqp) sigmoid output, bf16
    """
    x = x_ref[0].astype(jnp.float32)
    a = jnp.maximum(x * sc_ref[...] + sh_ref[...], 0.0).astype(jnp.bfloat16)
    z = jnp.dot(w_ref[...], a, preferred_element_type=jnp.float32) + b_ref[...]
    o_ref[0] = (1.0 / (1.0 + jnp.exp(-z))).astype(o_ref.dtype)


# ------------------------------------------------------------------- pallas_call wrappers
def _deconv_layer_call(xflat, w_stack, mask, P, Mqp):
    N, Cin_p, Lp = xflat.shape
    R = w_stack.shape[0]                     # 4*Cout
    kernel = functools.partial(_deconv_stacked_kernel, P=P, Mqp=Mqp)
    return pl.pallas_call(
        kernel,
        out_shape=(
            jax.ShapeDtypeStruct((N, R, Mqp), jnp.bfloat16),
            jax.ShapeDtypeStruct((N, R, 2), jnp.float32),
        ),
        grid_spec=pltpu.PrefetchScalarGridSpec(
            num_scalar_prefetch=0,
            grid=(N,),
            in_specs=[
                pl.BlockSpec((1, Cin_p, Lp), lambda n: (n, 0, 0)),
                pl.BlockSpec((R, 9 * Cin_p), lambda n: (0, 0)),
                pl.BlockSpec((1, Mqp), lambda n: (0, 0)),
            ],
            out_specs=[
                pl.BlockSpec((1, R, Mqp), lambda n: (n, 0, 0)),
                pl.BlockSpec((1, R, 2), lambda n: (n, 0, 0)),
            ],
        ),
        compiler_params=pltpu.CompilerParams(dimension_semantics=("parallel",)),
    )(xflat, w_stack, mask)


def _final_head_call(y, sc4, sh4, wb, bb):
    N, R_in, Mqp = y.shape
    R_out = wb.shape[0]
    return pl.pallas_call(
        _final_head_kernel,
        out_shape=jax.ShapeDtypeStruct((N, R_out, Mqp), jnp.bfloat16),
        grid_spec=pltpu.PrefetchScalarGridSpec(
            num_scalar_prefetch=0,
            grid=(N,),
            in_specs=[
                pl.BlockSpec((1, R_in, Mqp), lambda n: (n, 0, 0)),
                pl.BlockSpec((R_in, 1), lambda n: (0, 0)),
                pl.BlockSpec((R_in, 1), lambda n: (0, 0)),
                pl.BlockSpec((R_out, R_in), lambda n: (0, 0)),
                pl.BlockSpec((R_out, 1), lambda n: (0, 0)),
            ],
            out_specs=pl.BlockSpec((1, R_out, Mqp), lambda n: (n, 0, 0)),
        ),
        compiler_params=pltpu.CompilerParams(dimension_semantics=("parallel",)),
    )(y, sc4, sh4, wb, bb)


# ------------------------------------------------------------------------ JAX-side glue
def _to_padded_flat(x_nchw, Lp, c_pad):
    """(N, C, H, W) -> (N, c_pad, Lp) bf16 padded-flat: zero ring + front pad of 1."""
    N, C, H, W = x_nchw.shape
    xp = jnp.pad(x_nchw.astype(jnp.float32), ((0, 0), (0, 0), (1, 1), (1, 1)))
    xf = xp.reshape(N, C, (H + 2) * (W + 2))
    xf = jnp.pad(xf, ((0, 0), (0, c_pad - C), (1, Lp - (H + 2) * (W + 2) - 1)))
    return xf.astype(jnp.bfloat16)


def _valid_mask(H, W, Mqp):
    """(1, Mqp) f32 mask: 1 on real output columns, 0 on pitch/lane-padding columns."""
    P = W + 2
    m = jnp.arange(Mqp, dtype=jnp.int32)
    col = m % P
    valid = (m < H * P) & (col >= 1) & (col <= W)
    return valid.astype(jnp.float32).reshape(1, Mqp)


def _bn_scale_shift(s, q, count, gamma, beta, eps=BN_EPS):
    """Finish BatchNorm(track_running_stats=False) stats (biased var) -> affine fold."""
    mean = s / count
    var = jnp.maximum(q / count - mean * mean, 0.0)
    inv = jax.lax.rsqrt(var + eps)
    scale = gamma * inv
    shift = beta - mean * scale
    return scale, shift


def _relu_bn_phases_to_flat(y, scale, shift, H, W, Lp_next, c_pad_next):
    """(N, 4*C, Mqp) pre-BN phase slabs -> next layer's padded-flat (N, c_pad, Lp) bf16."""
    N, R, _ = y.shape
    C = R // 4
    P = W + 2
    y6 = y[:, :, :H * P].reshape(N, 2, 2, C, H, P)[..., 1:W + 1].astype(jnp.float32)
    y6 = y6 * scale.reshape(1, 1, 1, C, 1, 1) + shift.reshape(1, 1, 1, C, 1, 1)
    img = jnp.maximum(y6, 0.0).astype(jnp.bfloat16)
    # (N, dy, dx, C, H, W) -> (N, C, H, dy, W, dx) -> (N, C, 2H, 2W)
    img = jnp.transpose(img, (0, 3, 4, 1, 5, 2)).reshape(N, C, 2 * H, 2 * W)
    H2, W2 = 2 * H, 2 * W
    xp = jnp.pad(img, ((0, 0), (0, 0), (1, 1), (1, 1)))
    xf = xp.reshape(N, C, (H2 + 2) * (W2 + 2))
    xf = jnp.pad(xf, ((0, 0), (0, c_pad_next - C),
                      (1, Lp_next - (H2 + 2) * (W2 + 2) - 1)))
    return xf


def _phases_to_image(o, H, W):
    """(N, 4*C, Mqp) phase slabs -> (N, C, 2H, 2W) NCHW f32 image."""
    N, R, _ = o.shape
    C = R // 4
    P = W + 2
    o6 = o[:, :, :H * P].reshape(N, 2, 2, C, H, P)[..., 1:W + 1].astype(jnp.float32)
    return jnp.transpose(o6, (0, 3, 4, 1, 5, 2)).reshape(N, C, 2 * H, 2 * W)


# --------------------------------------------------------------------------- weight pack
def _pack_deconv_weight_stacked(wt, cin_pad):
    """(Cin, Cout, 4, 4) ConvTranspose2d weight -> block-sparse (4*Cout, 9*cin_pad)."""
    Cin, Cout = wt.shape[0], wt.shape[1]
    wp = jnp.pad(wt, ((0, cin_pad - Cin), (0, 0), (0, 0), (0, 0)))
    blocks = jnp.zeros((4, Cout, 9, cin_pad), jnp.float32)
    for dy in range(2):
        for dx in range(2):
            p = dy * 2 + dx
            for rh in range(2):
                for rw in range(2):
                    t = (dy + rh) * 3 + (dx + rw)          # tap index (ty*3 + tx)
                    w = jnp.transpose(wp[:, :, 3 - dy - 2 * rh, 3 - dx - 2 * rw])
                    blocks = blocks.at[p, :, t, :].set(w)  # (Cout, cin_pad)
    return blocks.reshape(4 * Cout, 9 * cin_pad).astype(jnp.bfloat16)


def _make_final_block_params(wf, bf):
    """(Cout, NF) 1x1 weight -> block-diag (4*Cout, 4*NF) bf16 and tiled (4*Cout,1) bias."""
    Cout, NF = wf.shape
    wb = jnp.zeros((4 * Cout, 4 * NF), jnp.float32)
    for p in range(4):
        wb = wb.at[p * Cout:(p + 1) * Cout, p * NF:(p + 1) * NF].set(wf)
    return wb.astype(jnp.bfloat16), jnp.tile(bf, 4).reshape(4 * Cout, 1)


# ------------------------------------------------------------------------------ forward
@jax.jit
def _forward_impl(layer_params, final_wb, final_bb, x):
    """x: (N, Cin, H, W) NCHW -> (N, out_c, H*2^L, W*2^L) NCHW f32, values in (0, 1)."""
    N, _, H, W = x.shape
    n_layers = len(layer_params)
    cin_pad0 = layer_params[0][0].shape[1] // 9
    _, _, Lp0 = _layer_dims(H, W)
    xflat = _to_padded_flat(x, Lp0, cin_pad0)

    h_cur, w_cur = H, W
    out = None
    for li, (w_stack, gamma, beta) in enumerate(layer_params):
        P, Mqp, _ = _layer_dims(h_cur, w_cur)
        mask = _valid_mask(h_cur, w_cur, Mqp)
        y, stats = _deconv_layer_call(xflat, w_stack, mask, P, Mqp)

        C = gamma.shape[0]
        st = stats.sum(axis=0).reshape(4, C, 2).sum(axis=0)            # (C, 2)
        count = jnp.float32(N * 4 * h_cur * w_cur)
        scale, shift = _bn_scale_shift(st[:, 0], st[:, 1], count, gamma, beta)

        if li + 1 < n_layers:
            cin_pad_next = layer_params[li + 1][0].shape[1] // 9
            _, _, Lp_next = _layer_dims(2 * h_cur, 2 * w_cur)
            # BN affine + ReLU folded into the (XLA-fused) bf16 phase-interleaving repack.
            xflat = _relu_bn_phases_to_flat(y, scale, shift, h_cur, w_cur,
                                            Lp_next, cin_pad_next)
        else:
            sc4 = jnp.tile(scale, 4).reshape(-1, 1)
            sh4 = jnp.tile(shift, 4).reshape(-1, 1)
            o = _final_head_call(y, sc4, sh4, final_wb, final_bb)
            out = _phases_to_image(o, h_cur, w_cur)
        h_cur, w_cur = 2 * h_cur, 2 * w_cur
    return out


class DeconvHeadPallas:
    """Pallas/JAX re-implementation of DeconvHead (forward + firing-counter logic)."""

    def __init__(self, in_channels, out_channels, num_filters=16, num_layers=3,
                 period=1, seed=0):
        self.in_channels = in_channels
        self.period = period
        self.counter = 0
        self.last_output = None

        key = jax.random.PRNGKey(seed)
        self.layers_ref = []      # f32 parameters (for the plain-JAX reference)
        self.layers_krn = []      # packed / bf16 kernel parameters
        for i in range(num_layers):
            cin = in_channels if i == 0 else num_filters
            cin_pad = _round_up(cin, _CPACK)
            key, k1, k2, k3, k4 = jax.random.split(key, 5)
            wt = jax.random.normal(k1, (cin, num_filters, 4, 4), jnp.float32)
            wt = (wt / math.sqrt(cin * 16.0)).astype(jnp.bfloat16).astype(jnp.float32)
            bt = 0.01 * jax.random.normal(k2, (num_filters,), jnp.float32)
            gamma = 1.0 + 0.1 * jax.random.normal(k3, (num_filters,), jnp.float32)
            beta = 0.1 * jax.random.normal(k4, (num_filters,), jnp.float32)
            self.layers_ref.append((wt, bt, gamma, beta))
            # Deconv bias is NOT passed to the kernel: it cancels exactly under the
            # following BatchNorm with batch statistics.
            self.layers_krn.append((_pack_deconv_weight_stacked(wt, cin_pad),
                                    gamma, beta))
        key, k1, k2 = jax.random.split(key, 3)
        wf = jax.random.normal(k1, (out_channels, num_filters), jnp.float32)
        wf = (wf / math.sqrt(num_filters)).astype(jnp.bfloat16).astype(jnp.float32)
        bf = 0.01 * jax.random.normal(k2, (out_channels,), jnp.float32)
        self.final_w_ref = wf
        self.final_b = bf
        self.final_wb, self.final_bb = _make_final_block_params(wf, bf)

    # -- forward ---------------------------------------------------------------
    def _forward(self, x):
        if x.ndim == 2:
            x = x.reshape(-1, self.in_channels, 1, 1)
        return _forward_impl(tuple(self.layers_krn), self.final_wb, self.final_bb, x)

    def __call__(self, x):
        should_fire = self.check_counters()
        if not should_fire:
            return self.last_output, should_fire
        out = self._forward(x)
        self.last_output = out
        return out, should_fire

    # -- counter logic (matches the PyTorch module) ------------------------------
    def check_counters(self):
        should_fire = self.counter == 0
        if should_fire:
            self.reset_counter()
        else:
            self.counter -= 1
        return should_fire

    def reset_counter(self):
        self.counter = self.period - 1

    def init_counter(self):
        self.counter = 0


# --------------------------------------------------------------------- plain-JAX reference
def _reference_deconv(x, wt, b):
    """Exact PyTorch ConvTranspose2d(k=4, s=2, p=1) in plain JAX (f32)."""
    N, Cin, H, W = x.shape
    Cout = wt.shape[1]
    out = jnp.zeros((N, Cout, 2 * H + 2, 2 * W + 2), jnp.float32)
    for kh in range(4):
        for kw in range(4):
            contrib = jnp.einsum("nchw,co->nohw", x, wt[:, :, kh, kw])
            out = out.at[:, :, kh:kh + 2 * H:2, kw:kw + 2 * W:2].add(contrib)
    return out[:, :, 1:2 * H + 1, 1:2 * W + 1] + b.reshape(1, Cout, 1, 1)


def _reference_forward(layers, final_w, final_b, x, eps=BN_EPS):
    h = x.astype(jnp.float32)
    for wt, b, gamma, beta in layers:
        h = _reference_deconv(h, wt, b)
        mean = h.mean(axis=(0, 2, 3), keepdims=True)
        var = ((h - mean) ** 2).mean(axis=(0, 2, 3), keepdims=True)
        h = (h - mean) * jax.lax.rsqrt(var + eps)
        h = jnp.maximum(h * gamma.reshape(1, -1, 1, 1) + beta.reshape(1, -1, 1, 1), 0.0)
    z = jnp.einsum("nchw,oc->nohw", h, final_w) + final_b.reshape(1, -1, 1, 1)
    return 1.0 / (1.0 + jnp.exp(-z))


if __name__ == "__main__":
    # small, deterministic example consistent with the module (NCHW input)
    N, IN_C, OUT_C, NF, NL = 2, 8, 3, 16, 3
    H = W = 4
    key = jax.random.PRNGKey(0)
    x = jax.random.normal(key, (N, IN_C, H, W), jnp.float32)

    head = DeconvHeadPallas(IN_C, OUT_C, num_filters=NF, num_layers=NL, period=1, seed=0)
    out, fired = head(x)
    out = jax.block_until_ready(out)

    expected_hw = H * (2 ** NL)
    assert fired is True
    assert out.shape == (N, OUT_C, expected_hw, expected_hw), out.shape
    assert bool(jnp.all(jnp.isfinite(out)))
    assert bool(jnp.all((out >= 0.0) & (out <= 1.0)))            # sigmoid range

    # loose check against a plain-JAX f32 reference (kernel path uses bf16 internally)
    ref = _reference_forward(head.layers_ref, head.final_w_ref, head.final_b, x)
    max_err = float(jnp.max(jnp.abs(out - ref)))
    mean_err = float(jnp.mean(jnp.abs(out - ref)))
    assert max_err < 0.15 and mean_err < 0.05, (max_err, mean_err)

    print("KERNEL_OK")
</pallas_src>

<mosaic_0001>
module attributes {stable_mosaic.version = 11 : i64} {
  func.func @_deconv_stacked_kernel(%arg0: i32, %arg1: memref<1x16x256xbf16, #tpu.memory_space<vmem>>, %arg2: memref<64x144xbf16, #tpu.memory_space<vmem>>, %arg3: memref<1x128xf32, #tpu.memory_space<vmem>>, %arg4: memref<1x64x128xbf16, #tpu.memory_space<vmem>>, %arg5: memref<1x64x2xf32, #tpu.memory_space<vmem>>) attributes {dimension_semantics = [#tpu.dimension_semantics<parallel>], iteration_bounds = array<i64: 2>, scalar_prefetch = 0 : i64, scratch_operands = 0 : i64, tpu.core_type = #tpu.core_type<tc>, window_params = [{transform_indices = @transform_0, window_bounds = array<i64: 1, 16, 256>}, {pipeline_mode = #tpu.pipeline_mode<synchronous>, transform_indices = @transform_1, window_bounds = array<i64: 64, 144>}, {pipeline_mode = #tpu.pipeline_mode<synchronous>, transform_indices = @transform_2, window_bounds = array<i64: 1, 128>}, {transform_indices = @transform_3, window_bounds = array<i64: 1, 64, 128>}, {transform_indices = @transform_4, window_bounds = array<i64: 1, 64, 2>}]} {
    %c0 = arith.constant 0 : index
    %c0_0 = arith.constant 0 : index
    %c0_1 = arith.constant 0 : index
    %0 = vector.load %arg1[%c0, %c0_0, %c0_1] : memref<1x16x256xbf16, #tpu.memory_space<vmem>>, vector<1x16x128xbf16>
    %1 = vector.shape_cast %0 : vector<1x16x128xbf16> to vector<16x128xbf16>
    %c0_2 = arith.constant 0 : index
    %c0_3 = arith.constant 0 : index
    %c1 = arith.constant 1 : index
    %2 = vector.load %arg1[%c0_2, %c0_3, %c1] : memref<1x16x256xbf16, #tpu.memory_space<vmem>>, vector<1x16x128xbf16>
    %3 = vector.shape_cast %2 : vector<1x16x128xbf16> to vector<16x128xbf16>
    %c0_4 = arith.constant 0 : index
    %c0_5 = arith.constant 0 : index
    %c2 = arith.constant 2 : index
    %4 = vector.load %arg1[%c0_4, %c0_5, %c2] : memref<1x16x256xbf16, #tpu.memory_space<vmem>>, vector<1x16x128xbf16>
    %5 = vector.shape_cast %4 : vector<1x16x128xbf16> to vector<16x128xbf16>
    %c0_6 = arith.constant 0 : index
    %c0_7 = arith.constant 0 : index
    %c6 = arith.constant 6 : index
    %6 = vector.load %arg1[%c0_6, %c0_7, %c6] : memref<1x16x256xbf16, #tpu.memory_space<vmem>>, vector<1x16x128xbf16>
    %7 = vector.shape_cast %6 : vector<1x16x128xbf16> to vector<16x128xbf16>
    %c0_8 = arith.constant 0 : index
    %c0_9 = arith.constant 0 : index
    %c7 = arith.constant 7 : index
    %8 = vector.load %arg1[%c0_8, %c0_9, %c7] : memref<1x16x256xbf16, #tpu.memory_space<vmem>>, vector<1x16x128xbf16>
    %9 = vector.shape_cast %8 : vector<1x16x128xbf16> to vector<16x128xbf16>
    %c0_10 = arith.constant 0 : index
    %c0_11 = arith.constant 0 : index
    %c8 = arith.constant 8 : index
    %10 = vector.load %arg1[%c0_10, %c0_11, %c8] : memref<1x16x256xbf16, #tpu.memory_space<vmem>>, vector<1x16x128xbf16>
    %11 = vector.shape_cast %10 : vector<1x16x128xbf16> to vector<16x128xbf16>
    %c0_12 = arith.constant 0 : index
    %c0_13 = arith.constant 0 : index
    %c12 = arith.constant 12 : index
    %12 = vector.load %arg1[%c0_12, %c0_13, %c12] : memref<1x16x256xbf16, #tpu.memory_space<vmem>>, vector<1x16x128xbf16>
    %13 = vector.shape_cast %12 : vector<1x16x128xbf16> to vector<16x128xbf16>
    %c0_14 = arith.constant 0 : index
    %c0_15 = arith.constant 0 : index
    %c13 = arith.constant 13 : index
    %14 = vector.load %arg1[%c0_14, %c0_15, %c13] : memref<1x16x256xbf16, #tpu.memory_space<vmem>>, vector<1x16x128xbf16>
    %15 = vector.shape_cast %14 : vector<1x16x128xbf16> to vector<16x128xbf16>
    %c0_16 = arith.constant 0 : index
    %c0_17 = arith.constant 0 : index
    %c14 = arith.constant 14 : index
    %16 = vector.load %arg1[%c0_16, %c0_17, %c14] : memref<1x16x256xbf16, #tpu.memory_space<vmem>>, vector<1x16x128xbf16>
    %17 = vector.shape_cast %16 : vector<1x16x128xbf16> to vector<16x128xbf16>
    %18 = tpu.concatenate %1, %3, %5, %7, %9, %11, %13, %15, %17 in 0 : vector<16x128xbf16>, vector<16x128xbf16>, vector<16x128xbf16>, vector<16x128xbf16>, vector<16x128xbf16>, vector<16x128xbf16>, vector<16x128xbf16>, vector<16x128xbf16>, vector<16x128xbf16> -> vector<144x128xbf16>
    %c0_18 = arith.constant 0 : index
    %c0_19 = arith.constant 0 : index
    %19 = vector.load %arg2[%c0_18, %c0_19] : memref<64x144xbf16, #tpu.memory_space<vmem>>, vector<64x144xbf16>
    %cst = arith.constant dense<0.000000e+00> : vector<64x128xf32>
    %20 = tpu.matmul %19, %18, %cst {dimension_numbers = #tpu.dot_dimension_numbers<[1], [0], [0], [1], [0, 0, 1, 1], [], []>} : vector<64x144xbf16>, vector<144x128xbf16>, vector<64x128xf32> -> vector<64x128xf32>
    %21 = arith.truncf %20 : vector<64x128xf32> to vector<64x128xbf16>
    %c0_20 = arith.constant 0 : index
    %c0_21 = arith.constant 0 : index
    %c0_22 = arith.constant 0 : index
    %22 = vector.load %arg4[%c0_20, %c0_21, %c0_22] : memref<1x64x128xbf16, #tpu.memory_space<vmem>>, vector<1x64x128xbf16>
    %23 = vector.shape_cast %22 : vector<1x64x128xbf16> to vector<64x128xbf16>
    %24 = vector.shape_cast %21 : vector<64x128xbf16> to vector<1x64x128xbf16>
    tpu.vector_store %arg4[%c0_20, %c0_21, %c0_22], %24 {strides = array<i32>} : memref<1x64x128xbf16, #tpu.memory_space<vmem>>, vector<1x64x128xbf16>,
    %c0_23 = arith.constant 0 : index
    %c0_24 = arith.constant 0 : index
    %25 = vector.load %arg3[%c0_23, %c0_24] : memref<1x128xf32, #tpu.memory_space<vmem>>, vector<1x128xf32>
    %26 = vector.broadcast %25 : vector<1x128xf32> to vector<64x128xf32>
    %27 = arith.mulf %20, %26 : vector<64x128xf32>
    %cst_25 = arith.constant dense<0.000000e+00> : vector<64xf32>
    %28 = vector.multi_reduction <add>, %27, %cst_25 [1] : vector<64x128xf32> to vector<64xf32>
    %29 = vector.shape_cast %28 : vector<64xf32> to vector<64x1xf32>
    %c0_26 = arith.constant 0 : index
    %c0_27 = arith.constant 0 : index
    %c0_28 = arith.constant 0 : index
    %30 = vector.load %arg5[%c0_26, %c0_27, %c0_28] : memref<1x64x2xf32, #tpu.memory_space<vmem>>, vector<1x64x1xf32>
    %31 = vector.shape_cast %30 : vector<1x64x1xf32> to vector<64x1xf32>
    %32 = vector.shape_cast %29 : vector<64x1xf32> to vector<1x64x1xf32>
    tpu.vector_store %arg5[%c0_26, %c0_27, %c0_28], %32 {strides = array<i32>} : memref<1x64x2xf32, #tpu.memory_space<vmem>>, vector<1x64x1xf32>,
    %33 = arith.mulf %27, %20 : vector<64x128xf32>
    %cst_29 = arith.constant dense<0.000000e+00> : vector<64xf32>
    %34 = vector.multi_reduction <add>, %33, %cst_29 [1] : vector<64x128xf32> to vector<64xf32>
    %35 = vector.shape_cast %34 : vector<64xf32> to vector<64x1xf32>
    %c0_30 = arith.constant 0 : index
    %c0_31 = arith.constant 0 : index
    %c1_32 = arith.constant 1 : index
    %36 = vector.load %arg5[%c0_30, %c0_31, %c1_32] : memref<1x64x2xf32, #tpu.memory_space<vmem>>, vector<1x64x1xf32>
    %37 = vector.shape_cast %36 : vector<1x64x1xf32> to vector<64x1xf32>
    %38 = vector.shape_cast %35 : vector<64x1xf32> to vector<1x64x1xf32>
    tpu.vector_store %arg5[%c0_30, %c0_31, %c1_32], %38 {strides = array<i32>} : memref<1x64x2xf32, #tpu.memory_space<vmem>>, vector<1x64x1xf32>,
    return
  }
  func.func @transform_0(%arg0: i32) -> (i32, i32, i32) {
    %c0_i32 = arith.constant 0 : i32
    %c0_i32_0 = arith.constant 0 : i32
    %c0_i32_1 = arith.constant 0 : i32
    return %arg0, %c0_i32, %c0_i32_0 : i32, i32, i32
  }
  func.func @transform_1(%arg0: i32) -> (i32, i32) {
    %c0_i32 = arith.constant 0 : i32
    %c0_i32_0 = arith.constant 0 : i32
    %c0_i32_1 = arith.constant 0 : i32
    return %c0_i32, %c0_i32_0 : i32, i32
  }
  func.func @transform_2(%arg0: i32) -> (i32, i32) {
    %c0_i32 = arith.constant 0 : i32
    %c0_i32_0 = arith.constant 0 : i32
    %c0_i32_1 = arith.constant 0 : i32
    return %c0_i32, %c0_i32_0 : i32, i32
  }
  func.func @transform_3(%arg0: i32) -> (i32, i32, i32) {
    %c0_i32 = arith.constant 0 : i32
    %c0_i32_0 = arith.constant 0 : i32
    %c0_i32_1 = arith.constant 0 : i32
    return %arg0, %c0_i32, %c0_i32_0 : i32, i32, i32
  }
  func.func @transform_4(%arg0: i32) -> (i32, i32, i32) {
    %c0_i32 = arith.constant 0 : i32
    %c0_i32_0 = arith.constant 0 : i32
    %c0_i32_1 = arith.constant 0 : i32
    return %arg0, %c0_i32, %c0_i32_0 : i32, i32, i32
  }
}

module attributes {stable_mosaic.version = 11 : i64} {
  func.func @_deconv_stacked_kernel(%arg0: i32, %arg1: memref<1x16x256xbf16, #tpu.memory_space<vmem>>, %arg2: memref<64x144xbf16, #tpu.memory_space<vmem>>, %arg3: memref<1x128xf32, #tpu.memory_space<vmem>>, %arg4: memref<1x64x128xbf16, #tpu.memory_space<vmem>>, %arg5: memref<1x64x2xf32, #tpu.memory_space<vmem>>) attributes {dimension_semantics = [#tpu.dimension_semantics<parallel>], iteration_bounds = array<i64: 2>, scalar_prefetch = 0 : i64, scratch_operands = 0 : i64, tpu.core_type = #tpu.core_type<tc>, window_params = [{transform_indices = @transform_0, window_bounds = array<i64: 1, 16, 256>}, {pipeline_mode = #tpu.pipeline_mode<synchronous>, transform_indices = @transform_1, window_bounds = array<i64: 64, 144>}, {pipeline_mode = #tpu.pipeline_mode<synchronous>, transform_indices = @transform_2, window_bounds = array<i64: 1, 128>}, {transform_indices = @transform_3, window_bounds = array<i64: 1, 64, 128>}, {transform_indices = @transform_4, window_bounds = array<i64: 1, 64, 2>}]} {
    %c0 = arith.constant 0 : index
    %c0_0 = arith.constant 0 : index
    %c0_1 = arith.constant 0 : index
    %0 = vector.load %arg1[%c0, %c0_0, %c0_1] : memref<1x16x256xbf16, #tpu.memory_space<vmem>>, vector<1x16x128xbf16>
    %1 = vector.shape_cast %0 : vector<1x16x128xbf16> to vector<16x128xbf16>
    %c0_2 = arith.constant 0 : index
    %c0_3 = arith.constant 0 : index
    %c1 = arith.constant 1 : index
    %2 = vector.load %arg1[%c0_2, %c0_3, %c1] : memref<1x16x256xbf16, #tpu.memory_space<vmem>>, vector<1x16x128xbf16>
    %3 = vector.shape_cast %2 : vector<1x16x128xbf16> to vector<16x128xbf16>
    %c0_4 = arith.constant 0 : index
    %c0_5 = arith.constant 0 : index
    %c2 = arith.constant 2 : index
    %4 = vector.load %arg1[%c0_4, %c0_5, %c2] : memref<1x16x256xbf16, #tpu.memory_space<vmem>>, vector<1x16x128xbf16>
    %5 = vector.shape_cast %4 : vector<1x16x128xbf16> to vector<16x128xbf16>
    %c0_6 = arith.constant 0 : index
    %c0_7 = arith.constant 0 : index
    %c10 = arith.constant 10 : index
    %6 = vector.load %arg1[%c0_6, %c0_7, %c10] : memref<1x16x256xbf16, #tpu.memory_space<vmem>>, vector<1x16x128xbf16>
    %7 = vector.shape_cast %6 : vector<1x16x128xbf16> to vector<16x128xbf16>
    %c0_8 = arith.constant 0 : index
    %c0_9 = arith.constant 0 : index
    %c11 = arith.constant 11 : index
    %8 = vector.load %arg1[%c0_8, %c0_9, %c11] : memref<1x16x256xbf16, #tpu.memory_space<vmem>>, vector<1x16x128xbf16>
    %9 = vector.shape_cast %8 : vector<1x16x128xbf16> to vector<16x128xbf16>
    %c0_10 = arith.constant 0 : index
    %c0_11 = arith.constant 0 : index
    %c12 = arith.constant 12 : index
    %10 = vector.load %arg1[%c0_10, %c0_11, %c12] : memref<1x16x256xbf16, #tpu.memory_space<vmem>>, vector<1x16x128xbf16>
    %11 = vector.shape_cast %10 : vector<1x16x128xbf16> to vector<16x128xbf16>
    %c0_12 = arith.constant 0 : index
    %c0_13 = arith.constant 0 : index
    %c20 = arith.constant 20 : index
    %12 = vector.load %arg1[%c0_12, %c0_13, %c20] : memref<1x16x256xbf16, #tpu.memory_space<vmem>>, vector<1x16x128xbf16>
    %13 = vector.shape_cast %12 : vector<1x16x128xbf16> to vector<16x128xbf16>
    %c0_14 = arith.constant 0 : index
    %c0_15 = arith.constant 0 : index
    %c21 = arith.constant 21 : index
    %14 = vector.load %arg1[%c0_14, %c0_15, %c21] : memref<1x16x256xbf16, #tpu.memory_space<vmem>>, vector<1x16x128xbf16>
    %15 = vector.shape_cast %14 : vector<1x16x128xbf16> to vector<16x128xbf16>
    %c0_16 = arith.constant 0 : index
    %c0_17 = arith.constant 0 : index
    %c22 = arith.constant 22 : index
    %16 = vector.load %arg1[%c0_16, %c0_17, %c22] : memref<1x16x256xbf16, #tpu.memory_space<vmem>>, vector<1x16x128xbf16>
    %17 = vector.shape_cast %16 : vector<1x16x128xbf16> to vector<16x128xbf16>
    %18 = tpu.concatenate %1, %3, %5, %7, %9, %11, %13, %15, %17 in 0 : vector<16x128xbf16>, vector<16x128xbf16>, vector<16x128xbf16>, vector<16x128xbf16>, vector<16x128xbf16>, vector<16x128xbf16>, vector<16x128xbf16>, vector<16x128xbf16>, vector<16x128xbf16> -> vector<144x128xbf16>
    %c0_18 = arith.constant 0 : index
    %c0_19 = arith.constant 0 : index
    %19 = vector.load %arg2[%c0_18, %c0_19] : memref<64x144xbf16, #tpu.memory_space<vmem>>, vector<64x144xbf16>
    %cst = arith.constant dense<0.000000e+00> : vector<64x128xf32>
    %20 = tpu.matmul %19, %18, %cst {dimension_numbers = #tpu.dot_dimension_numbers<[1], [0], [0], [1], [0, 0, 1, 1], [], []>} : vector<64x144xbf16>, vector<144x128xbf16>, vector<64x128xf32> -> vector<64x128xf32>
    %21 = arith.truncf %20 : vector<64x128xf32> to vector<64x128xbf16>
    %c0_20 = arith.constant 0 : index
    %c0_21 = arith.constant 0 : index
    %c0_22 = arith.constant 0 : index
    %22 = vector.load %arg4[%c0_20, %c0_21, %c0_22] : memref<1x64x128xbf16, #tpu.memory_space<vmem>>, vector<1x64x128xbf16>
    %23 = vector.shape_cast %22 : vector<1x64x128xbf16> to vector<64x128xbf16>
    %24 = vector.shape_cast %21 : vector<64x128xbf16> to vector<1x64x128xbf16>
    tpu.vector_store %arg4[%c0_20, %c0_21, %c0_22], %24 {strides = array<i32>} : memref<1x64x128xbf16, #tpu.memory_space<vmem>>, vector<1x64x128xbf16>,
    %c0_23 = arith.constant 0 : index
    %c0_24 = arith.constant 0 : index
    %25 = vector.load %arg3[%c0_23, %c0_24] : memref<1x128xf32, #tpu.memory_space<vmem>>, vector<1x128xf32>
    %26 = vector.broadcast %25 : vector<1x128xf32> to vector<64x128xf32>
    %27 = arith.mulf %20, %26 : vector<64x128xf32>
    %cst_25 = arith.constant dense<0.000000e+00> : vector<64xf32>
    %28 = vector.multi_reduction <add>, %27, %cst_25 [1] : vector<64x128xf32> to vector<64xf32>
    %29 = vector.shape_cast %28 : vector<64xf32> to vector<64x1xf32>
    %c0_26 = arith.constant 0 : index
    %c0_27 = arith.constant 0 : index
    %c0_28 = arith.constant 0 : index
    %30 = vector.load %arg5[%c0_26, %c0_27, %c0_28] : memref<1x64x2xf32, #tpu.memory_space<vmem>>, vector<1x64x1xf32>
    %31 = vector.shape_cast %30 : vector<1x64x1xf32> to vector<64x1xf32>
    %32 = vector.shape_cast %29 : vector<64x1xf32> to vector<1x64x1xf32>
    tpu.vector_store %arg5[%c0_26, %c0_27, %c0_28], %32 {strides = array<i32>} : memref<1x64x2xf32, #tpu.memory_space<vmem>>, vector<1x64x1xf32>,
    %33 = arith.mulf %27, %20 : vector<64x128xf32>
    %cst_29 = arith.constant dense<0.000000e+00> : vector<64xf32>
    %34 = vector.multi_reduction <add>, %33, %cst_29 [1] : vector<64x128xf32> to vector<64xf32>
    %35 = vector.shape_cast %34 : vector<64xf32> to vector<64x1xf32>
    %c0_30 = arith.constant 0 : index
    %c0_31 = arith.constant 0 : index
    %c1_32 = arith.constant 1 : index
    %36 = vector.load %arg5[%c0_30, %c0_31, %c1_32] : memref<1x64x2xf32, #tpu.memory_space<vmem>>, vector<1x64x1xf32>
    %37 = vector.shape_cast %36 : vector<1x64x1xf32> to vector<64x1xf32>
    %38 = vector.shape_cast %35 : vector<64x1xf32> to vector<1x64x1xf32>
    tpu.vector_store %arg5[%c0_30, %c0_31, %c1_32], %38 {strides = array<i32>} : memref<1x64x2xf32, #tpu.memory_space<vmem>>, vector<1x64x1xf32>,
    return
  }
  func.func @transform_0(%arg0: i32) -> (i32, i32, i32) {
    %c0_i32 = arith.constant 0 : i32
    %c0_i32_0 = arith.constant 0 : i32
    %c0_i32_1 = arith.constant 0 : i32
    return %arg0, %c0_i32, %c0_i32_0 : i32, i32, i32
  }
  func.func @transform_1(%arg0: i32) -> (i32, i32) {
    %c0_i32 = arith.constant 0 : i32
    %c0_i32_0 = arith.constant 0 : i32
    %c0_i32_1 = arith.constant 0 : i32
    return %c0_i32, %c0_i32_0 : i32, i32
  }
  func.func @transform_2(%arg0: i32) -> (i32, i32) {
    %c0_i32 = arith.constant 0 : i32
    %c0_i32_0 = arith.constant 0 : i32
    %c0_i32_1 = arith.constant 0 : i32
    return %c0_i32, %c0_i32_0 : i32, i32
  }
  func.func @transform_3(%arg0: i32) -> (i32, i32, i32) {
    %c0_i32 = arith.constant 0 : i32
    %c0_i32_0 = arith.constant 0 : i32
    %c0_i32_1 = arith.constant 0 : i32
    return %arg0, %c0_i32, %c0_i32_0 : i32, i32, i32
  }
  func.func @transform_4(%arg0: i32) -> (i32, i32, i32) {
    %c0_i32 = arith.constant 0 : i32
    %c0_i32_0 = arith.constant 0 : i32
    %c0_i32_1 = arith.constant 0 : i32
    return %arg0, %c0_i32, %c0_i32_0 : i32, i32, i32
  }
}

module attributes {stable_mosaic.version = 11 : i64} {
  func.func @_deconv_stacked_kernel(%arg0: i32, %arg1: memref<1x16x512xbf16, #tpu.memory_space<vmem>>, %arg2: memref<64x144xbf16, #tpu.memory_space<vmem>>, %arg3: memref<1x384xf32, #tpu.memory_space<vmem>>, %arg4: memref<1x64x384xbf16, #tpu.memory_space<vmem>>, %arg5: memref<1x64x2xf32, #tpu.memory_space<vmem>>) attributes {dimension_semantics = [#tpu.dimension_semantics<parallel>], iteration_bounds = array<i64: 2>, scalar_prefetch = 0 : i64, scratch_operands = 0 : i64, tpu.core_type = #tpu.core_type<tc>, window_params = [{transform_indices = @transform_0, window_bounds = array<i64: 1, 16, 512>}, {pipeline_mode = #tpu.pipeline_mode<synchronous>, transform_indices = @transform_1, window_bounds = array<i64: 64, 144>}, {pipeline_mode = #tpu.pipeline_mode<synchronous>, transform_indices = @transform_2, window_bounds = array<i64: 1, 384>}, {transform_indices = @transform_3, window_bounds = array<i64: 1, 64, 384>}, {transform_indices = @transform_4, window_bounds = array<i64: 1, 64, 2>}]} {
    %c0 = arith.constant 0 : index
    %c0_0 = arith.constant 0 : index
    %c0_1 = arith.constant 0 : index
    %0 = vector.load %arg1[%c0, %c0_0, %c0_1] : memref<1x16x512xbf16, #tpu.memory_space<vmem>>, vector<1x16x384xbf16>
    %1 = vector.shape_cast %0 : vector<1x16x384xbf16> to vector<16x384xbf16>
    %c0_2 = arith.constant 0 : index
    %c0_3 = arith.constant 0 : index
    %c1 = arith.constant 1 : index
    %2 = vector.load %arg1[%c0_2, %c0_3, %c1] : memref<1x16x512xbf16, #tpu.memory_space<vmem>>, vector<1x16x384xbf16>
    %3 = vector.shape_cast %2 : vector<1x16x384xbf16> to vector<16x384xbf16>
    %c0_4 = arith.constant 0 : index
    %c0_5 = arith.constant 0 : index
    %c2 = arith.constant 2 : index
    %4 = vector.load %arg1[%c0_4, %c0_5, %c2] : memref<1x16x512xbf16, #tpu.memory_space<vmem>>, vector<1x16x384xbf16>
    %5 = vector.shape_cast %4 : vector<1x16x384xbf16> to vector<16x384xbf16>
    %c0_6 = arith.constant 0 : index
    %c0_7 = arith.constant 0 : index
    %c18 = arith.constant 18 : index
    %6 = vector.load %arg1[%c0_6, %c0_7, %c18] : memref<1x16x512xbf16, #tpu.memory_space<vmem>>, vector<1x16x384xbf16>
    %7 = vector.shape_cast %6 : vector<1x16x384xbf16> to vector<16x384xbf16>
    %c0_8 = arith.constant 0 : index
    %c0_9 = arith.constant 0 : index
    %c19 = arith.constant 19 : index
    %8 = vector.load %arg1[%c0_8, %c0_9, %c19] : memref<1x16x512xbf16, #tpu.memory_space<vmem>>, vector<1x16x384xbf16>
    %9 = vector.shape_cast %8 : vector<1x16x384xbf16> to vector<16x384xbf16>
    %c0_10 = arith.constant 0 : index
    %c0_11 = arith.constant 0 : index
    %c20 = arith.constant 20 : index
    %10 = vector.load %arg1[%c0_10, %c0_11, %c20] : memref<1x16x512xbf16, #tpu.memory_space<vmem>>, vector<1x16x384xbf16>
    %11 = vector.shape_cast %10 : vector<1x16x384xbf16> to vector<16x384xbf16>
    %c0_12 = arith.constant 0 : index
    %c0_13 = arith.constant 0 : index
    %c36 = arith.constant 36 : index
    %12 = vector.load %arg1[%c0_12, %c0_13, %c36] : memref<1x16x512xbf16, #tpu.memory_space<vmem>>, vector<1x16x384xbf16>
    %13 = vector.shape_cast %12 : vector<1x16x384xbf16> to vector<16x384xbf16>
    %c0_14 = arith.constant 0 : index
    %c0_15 = arith.constant 0 : index
    %c37 = arith.constant 37 : index
    %14 = vector.load %arg1[%c0_14, %c0_15, %c37] : memref<1x16x512xbf16, #tpu.memory_space<vmem>>, vector<1x16x384xbf16>
    %15 = vector.shape_cast %14 : vector<1x16x384xbf16> to vector<16x384xbf16>
    %c0_16 = arith.constant 0 : index
    %c0_17 = arith.constant 0 : index
    %c38 = arith.constant 38 : index
    %16 = vector.load %arg1[%c0_16, %c0_17, %c38] : memref<1x16x512xbf16, #tpu.memory_space<vmem>>, vector<1x16x384xbf16>
    %17 = vector.shape_cast %16 : vector<1x16x384xbf16> to vector<16x384xbf16>
    %18 = tpu.concatenate %1, %3, %5, %7, %9, %11, %13, %15, %17 in 0 : vector<16x384xbf16>, vector<16x384xbf16>, vector<16x384xbf16>, vector<16x384xbf16>, vector<16x384xbf16>, vector<16x384xbf16>, vector<16x384xbf16>, vector<16x384xbf16>, vector<16x384xbf16> -> vector<144x384xbf16>
    %c0_18 = arith.constant 0 : index
    %c0_19 = arith.constant 0 : index
    %19 = vector.load %arg2[%c0_18, %c0_19] : memref<64x144xbf16, #tpu.memory_space<vmem>>, vector<64x144xbf16>
    %cst = arith.constant dense<0.000000e+00> : vector<64x384xf32>
    %20 = tpu.matmul %19, %18, %cst {dimension_numbers = #tpu.dot_dimension_numbers<[1], [0], [0], [1], [0, 0, 1, 1], [], []>} : vector<64x144xbf16>, vector<144x384xbf16>, vector<64x384xf32> -> vector<64x384xf32>
    %21 = arith.truncf %20 : vector<64x384xf32> to vector<64x384xbf16>
    %c0_20 = arith.constant 0 : index
    %c0_21 = arith.constant 0 : index
    %c0_22 = arith.constant 0 : index
    %22 = vector.load %arg4[%c0_20, %c0_21, %c0_22] : memref<1x64x384xbf16, #tpu.memory_space<vmem>>, vector<1x64x384xbf16>
    %23 = vector.shape_cast %22 : vector<1x64x384xbf16> to vector<64x384xbf16>
    %24 = vector.shape_cast %21 : vector<64x384xbf16> to vector<1x64x384xbf16>
    tpu.vector_store %arg4[%c0_20, %c0_21, %c0_22], %24 {strides = array<i32>} : memref<1x64x384xbf16, #tpu.memory_space<vmem>>, vector<1x64x384xbf16>,
    %c0_23 = arith.constant 0 : index
    %c0_24 = arith.constant 0 : index
    %25 = vector.load %arg3[%c0_23, %c0_24] : memref<1x384xf32, #tpu.memory_space<vmem>>, vector<1x384xf32>
    %26 = vector.broadcast %25 : vector<1x384xf32> to vector<64x384xf32>
    %27 = arith.mulf %20, %26 : vector<64x384xf32>
    %cst_25 = arith.constant dense<0.000000e+00> : vector<64xf32>
    %28 = vector.multi_reduction <add>, %27, %cst_25 [1] : vector<64x384xf32> to vector<64xf32>
    %29 = vector.shape_cast %28 : vector<64xf32> to vector<64x1xf32>
    %c0_26 = arith.constant 0 : index
    %c0_27 = arith.constant 0 : index
    %c0_28 = arith.constant 0 : index
    %30 = vector.load %arg5[%c0_26, %c0_27, %c0_28] : memref<1x64x2xf32, #tpu.memory_space<vmem>>, vector<1x64x1xf32>
    %31 = vector.shape_cast %30 : vector<1x64x1xf32> to vector<64x1xf32>
    %32 = vector.shape_cast %29 : vector<64x1xf32> to vector<1x64x1xf32>
    tpu.vector_store %arg5[%c0_26, %c0_27, %c0_28], %32 {strides = array<i32>} : memref<1x64x2xf32, #tpu.memory_space<vmem>>, vector<1x64x1xf32>,
    %33 = arith.mulf %27, %20 : vector<64x384xf32>
    %cst_29 = arith.constant dense<0.000000e+00> : vector<64xf32>
    %34 = vector.multi_reduction <add>, %33, %cst_29 [1] : vector<64x384xf32> to vector<64xf32>
    %35 = vector.shape_cast %34 : vector<64xf32> to vector<64x1xf32>
    %c0_30 = arith.constant 0 : index
    %c0_31 = arith.constant 0 : index
    %c1_32 = arith.constant 1 : index
    %36 = vector.load %arg5[%c0_30, %c0_31, %c1_32] : memref<1x64x2xf32, #tpu.memory_space<vmem>>, vector<1x64x1xf32>
    %37 = vector.shape_cast %36 : vector<1x64x1xf32> to vector<64x1xf32>
    %38 = vector.shape_cast %35 : vector<64x1xf32> to vector<1x64x1xf32>
    tpu.vector_store %arg5[%c0_30, %c0_31, %c1_32], %38 {strides = array<i32>} : memref<1x64x2xf32, #tpu.memory_space<vmem>>, vector<1x64x1xf32>,
    return
  }
  func.func @transform_0(%arg0: i32) -> (i32, i32, i32) {
    %c0_i32 = arith.constant 0 : i32
    %c0_i32_0 = arith.constant 0 : i32
    %c0_i32_1 = arith.constant 0 : i32
    return %arg0, %c0_i32, %c0_i32_0 : i32, i32, i32
  }
  func.func @transform_1(%arg0: i32) -> (i32, i32) {
    %c0_i32 = arith.constant 0 : i32
    %c0_i32_0 = arith.constant 0 : i32
    %c0_i32_1 = arith.constant 0 : i32
    return %c0_i32, %c0_i32_0 : i32, i32
  }
  func.func @transform_2(%arg0: i32) -> (i32, i32) {
    %c0_i32 = arith.constant 0 : i32
    %c0_i32_0 = arith.constant 0 : i32
    %c0_i32_1 = arith.constant 0 : i32
    return %c0_i32, %c0_i32_0 : i32, i32
  }
  func.func @transform_3(%arg0: i32) -> (i32, i32, i32) {
    %c0_i32 = arith.constant 0 : i32
    %c0_i32_0 = arith.constant 0 : i32
    %c0_i32_1 = arith.constant 0 : i32
    return %arg0, %c0_i32, %c0_i32_0 : i32, i32, i32
  }
  func.func @transform_4(%arg0: i32) -> (i32, i32, i32) {
    %c0_i32 = arith.constant 0 : i32
    %c0_i32_0 = arith.constant 0 : i32
    %c0_i32_1 = arith.constant 0 : i32
    return %arg0, %c0_i32, %c0_i32_0 : i32, i32, i32
  }
}

module attributes {stable_mosaic.version = 11 : i64} {
  func.func @_final_head_kernel(%arg0: i32, %arg1: memref<1x64x384xbf16, #tpu.memory_space<vmem>>, %arg2: memref<64x1xf32, #tpu.memory_space<vmem>>, %arg3: memref<64x1xf32, #tpu.memory_space<vmem>>, %arg4: memref<12x64xbf16, #tpu.memory_space<vmem>>, %arg5: memref<12x1xf32, #tpu.memory_space<vmem>>, %arg6: memref<1x12x384xbf16, #tpu.memory_space<vmem>>) attributes {dimension_semantics = [#tpu.dimension_semantics<parallel>], iteration_bounds = array<i64: 2>, scalar_prefetch = 0 : i64, scratch_operands = 0 : i64, tpu.core_type = #tpu.core_type<tc>, window_params = [{transform_indices = @transform_0, window_bounds = array<i64: 1, 64, 384>}, {pipeline_mode = #tpu.pipeline_mode<synchronous>, transform_indices = @transform_1, window_bounds = array<i64: 64, 1>}, {pipeline_mode = #tpu.pipeline_mode<synchronous>, transform_indices = @transform_2, window_bounds = array<i64: 64, 1>}, {pipeline_mode = #tpu.pipeline_mode<synchronous>, transform_indices = @transform_3, window_bounds = array<i64: 12, 64>}, {pipeline_mode = #tpu.pipeline_mode<synchronous>, transform_indices = @transform_4, window_bounds = array<i64: 12, 1>}, {transform_indices = @transform_5, window_bounds = array<i64: 1, 12, 384>}]} {
    %c0 = arith.constant 0 : index
    %c0_0 = arith.constant 0 : index
    %c0_1 = arith.constant 0 : index
    %0 = vector.load %arg1[%c0, %c0_0, %c0_1] : memref<1x64x384xbf16, #tpu.memory_space<vmem>>, vector<1x64x384xbf16>
    %1 = vector.shape_cast %0 : vector<1x64x384xbf16> to vector<64x384xbf16>
    %2 = arith.extf %1 : vector<64x384xbf16> to vector<64x384xf32>
    %c0_2 = arith.constant 0 : index
    %c0_3 = arith.constant 0 : index
    %3 = vector.load %arg2[%c0_2, %c0_3] : memref<64x1xf32, #tpu.memory_space<vmem>>, vector<64x1xf32>
    %4 = vector.broadcast %3 : vector<64x1xf32> to vector<64x384xf32>
    %5 = arith.mulf %2, %4 : vector<64x384xf32>
    %c0_4 = arith.constant 0 : index
    %c0_5 = arith.constant 0 : index
    %6 = vector.load %arg3[%c0_4, %c0_5] : memref<64x1xf32, #tpu.memory_space<vmem>>, vector<64x1xf32>
    %7 = vector.broadcast %6 : vector<64x1xf32> to vector<64x384xf32>
    %8 = arith.addf %5, %7 : vector<64x384xf32>
    %cst = arith.constant 0.000000e+00 : f32
    %9 = vector.broadcast %cst : f32 to vector<64x384xf32>
    %10 = arith.maximumf %8, %9 : vector<64x384xf32>
    %11 = arith.truncf %10 : vector<64x384xf32> to vector<64x384xbf16>
    %c0_6 = arith.constant 0 : index
    %c0_7 = arith.constant 0 : index
    %12 = vector.load %arg4[%c0_6, %c0_7] : memref<12x64xbf16, #tpu.memory_space<vmem>>, vector<12x64xbf16>
    %cst_8 = arith.constant dense<0.000000e+00> : vector<12x384xf32>
    %13 = tpu.matmul %12, %11, %cst_8 {dimension_numbers = #tpu.dot_dimension_numbers<[1], [0], [0], [1], [0, 0, 1, 1], [], []>} : vector<12x64xbf16>, vector<64x384xbf16>, vector<12x384xf32> -> vector<12x384xf32>
    %c0_9 = arith.constant 0 : index
    %c0_10 = arith.constant 0 : index
    %14 = vector.load %arg5[%c0_9, %c0_10] : memref<12x1xf32, #tpu.memory_space<vmem>>, vector<12x1xf32>
    %15 = vector.broadcast %14 : vector<12x1xf32> to vector<12x384xf32>
    %16 = arith.addf %13, %15 : vector<12x384xf32>
    %cst_11 = arith.constant 0.000000e+00 : f32
    %17 = vector.broadcast %cst_11 : f32 to vector<12x384xf32>
    %18 = arith.subf %17, %16 : vector<12x384xf32>
    %19 = math.exp %18 : vector<12x384xf32>
    %cst_12 = arith.constant 1.000000e+00 : f32
    %20 = vector.broadcast %cst_12 : f32 to vector<12x384xf32>
    %21 = arith.addf %20, %19 : vector<12x384xf32>
    %cst_13 = arith.constant 1.000000e+00 : f32
    %22 = vector.broadcast %cst_13 : f32 to vector<12x384xf32>
    %23 = arith.divf %22, %21 : vector<12x384xf32>
    %24 = arith.truncf %23 : vector<12x384xf32> to vector<12x384xbf16>
    %c0_14 = arith.constant 0 : index
    %c0_15 = arith.constant 0 : index
    %c0_16 = arith.constant 0 : index
    %25 = vector.load %arg6[%c0_14, %c0_15, %c0_16] : memref<1x12x384xbf16, #tpu.memory_space<vmem>>, vector<1x12x384xbf16>
    %26 = vector.shape_cast %25 : vector<1x12x384xbf16> to vector<12x384xbf16>
    %27 = vector.shape_cast %24 : vector<12x384xbf16> to vector<1x12x384xbf16>
    tpu.vector_store %arg6[%c0_14, %c0_15, %c0_16], %27 {strides = array<i32>} : memref<1x12x384xbf16, #tpu.memory_space<vmem>>, vector<1x12x384xbf16>,
    return
  }
  func.func @transform_0(%arg0: i32) -> (i32, i32, i32) {
    %c0_i32 = arith.constant 0 : i32
    %c0_i32_0 = arith.constant 0 : i32
    %c0_i32_1 = arith.constant 0 : i32
    return %arg0, %c0_i32, %c0_i32_0 : i32, i32, i32
  }
  func.func @transform_1(%arg0: i32) -> (i32, i32) {
    %c0_i32 = arith.constant 0 : i32
    %c0_i32_0 = arith.constant 0 : i32
    %c0_i32_1 = arith.constant 0 : i32
    return %c0_i32, %c0_i32_0 : i32, i32
  }
  func.func @transform_2(%arg0: i32) -> (i32, i32) {
    %c0_i32 = arith.constant 0 : i32
    %c0_i32_0 = arith.constant 0 : i32
    %c0_i32_1 = arith.constant 0 : i32
    return %c0_i32, %c0_i32_0 : i32, i32
  }
  func.func @transform_3(%arg0: i32) -> (i32, i32) {
    %c0_i32 = arith.constant 0 : i32
    %c0_i32_0 = arith.constant 0 : i32
    %c0_i32_1 = arith.constant 0 : i32
    return %c0_i32, %c0_i32_0 : i32, i32
  }
  func.func @transform_4(%arg0: i32) -> (i32, i32) {
    %c0_i32 = arith.constant 0 : i32
    %c0_i32_0 = arith.constant 0 : i32
    %c0_i32_1 = arith.constant 0 : i32
    return %c0_i32, %c0_i32_0 : i32, i32
  }
  func.func @transform_5(%arg0: i32) -> (i32, i32, i32) {
    %c0_i32 = arith.constant 0 : i32
    %c0_i32_0 = arith.constant 0 : i32
    %c0_i32_1 = arith.constant 0 : i32
    return %arg0, %c0_i32, %c0_i32_0 : i32, i32, i32
  }
}

</mosaic_0001>

<llo_original>
// kernel: _forward_impl.4
$region0: #{_forward_impl.4}
  #allocation0 [shape = 'u32[]', space=smem, size = 0x4, offset = 0x4, fixed_abs, tag = 'smem constant byte address 0x4 - core index']
  #allocation1 [shape = 'u32[144,128]{1,0:T(1,128)}', space=vmem, size = 0x12000, scoped, tag = 'internal scratch']
  %s0 = inlined_call_operand.vmem [shape: bf16[2,16,256], index: 0, kind: input, shape index: {}]
  %s1 = inlined_call_operand.hbm [shape: bf16[64,144], index: 1, kind: input, shape index: {}]
  %s2 = inlined_call_operand.vmem [shape: f32[1,128], index: 2, kind: input, shape index: {}]
  %s3 = inlined_call_operand.vmem [shape: bf16[2,64,128], index: 3, kind: output, shape index: {0}]
  %s4 = inlined_call_operand.vmem [shape: f32[2,64,2], index: 4, kind: output, shape index: {1}]
  %5 = xla_tuple %s3, %s4
  %s6 = sld [smem:[#allocation0]]
  $region57: #{_forward_impl.4} parent=0
    _
  %s8 = ssub.s32 1, %s6
  %s9 = scalar_select 0, %s8, %s6
  $region1: #{_forward_impl.4} parent=0
    #allocation2 [shape = 'u8[32768]{0}', space=vmem, size = 0x8000, scoped, tag = 'input window, operand 1, single buffered']
    #allocation3 [shape = 's32[2]{0}', space=sflag, size = 0x8, scoped, tag = 'scoped memory for _forward_impl.4']
    %10 = vsyncpa [#allocation3], 0
    loop: start=0, step=1, limit=4
    $region2: #{_forward_impl.4} parent=1 // loop_pre_header
      _
    $region3: #{_forward_impl.4} parent=1 // loop_header
      %s12 = sphi 0, %s16
      %p13 = scmp.ge.s32.totalorder %s12, 4
      %s22 = sphi 0, %s24
      %s25 = sphi 0, %s22
      %s26 = sphi 0, %s25
      %s42 = sphi 0, %s26
      %s46 = sphi 0, %s46
      %s48 = sphi 0, %s46
      %s49 = sphi 0, %s48
      %s63 = sphi 0, %s49
      %s67 = sphi 0, %s67
      %s69 = sphi 0, %s67
      %s70 = sphi 0, %s69
      %s84 = sphi 0, %s70
      %s90 = sphi 0, %s92
      %s93 = sphi 0, %s90
      %s94 = sphi 0, %s93
      %s110 = sphi 0, %s94
      %s116 = sphi 0, %s118
      %s119 = sphi 0, %s116
      %s120 = sphi 0, %s119
      %s136 = sphi 0, %s120
    $region4: #{_forward_impl.4} parent=1 // loop_header_branch
      %15 = sbr.rel (%p13) target = $region8
    $region5: #{_forward_impl.4} parent=1 // loop_body
      %s17 = ssub.s32 %s12, 1
      %s18 = ssub.s32 %s12, 2
      %s19 = sadd.s32 %s12, 1
      %s20 = ssub.s32 %s12, %s19
      %p21 = scmp.eq.s32.totalorder %s20, 0
      %s23 = sadd.s32 %s22, 1
      %s24 = scalar_select %p21, %s22, %s23
      %p27 = pneg %p21
      %p28 = scmp.eq.s32.totalorder %s12, 1
      %p29 = por %p27, %p28
      %p30 = scmp.ne.s32.totalorder %s22, %s25
      %p31 = scmp.eq.s32.totalorder %s12, 0
      %p32 = por %p30, %p31
      %p33 = scmp.ne.s32.totalorder %s22, %s25
      %p34 = scmp.eq.s32.totalorder %s17, 1
      %p35 = por %p33, %p34
      %p36 = scmp.ne.s32.totalorder %s25, %s26
      %p37 = scmp.eq.s32.totalorder %s17, 0
      %p38 = por %p36, %p37
      %p39 = scmp.ne.s32.totalorder %s25, %s26
      %p40 = scmp.eq.s32.totalorder %s18, 1
      %p41 = por %p39, %p40
      %p43 = scmp.ne.s32.totalorder %s26, %s42
      %p44 = scmp.eq.s32.totalorder %s18, 0
      %p45 = por %p43, %p44
      %s47 = sadd.s32 %s46, 1
      %p50 = scmp.eq.s32.totalorder %s12, 1
      %p51 = scmp.ne.s32.totalorder %s46, %s48
      %p52 = scmp.eq.s32.totalorder %s12, 0
      %p53 = por %p51, %p52
      %p54 = scmp.ne.s32.totalorder %s46, %s48
      %p55 = scmp.eq.s32.totalorder %s17, 1
      %p56 = por %p54, %p55
      %p57 = scmp.ne.s32.totalorder %s48, %s49
      %p58 = scmp.eq.s32.totalorder %s17, 0
      %p59 = por %p57, %p58
      %p60 = scmp.ne.s32.totalorder %s48, %s49
      %p61 = scmp.eq.s32.totalorder %s18, 1
      %p62 = por %p60, %p61
      %p64 = scmp.ne.s32.totalorder %s49, %s63
      %p65 = scmp.eq.s32.totalorder %s18, 0
      %p66 = por %p64, %p65
      %s68 = sadd.s32 %s67, 1
      %p71 = scmp.eq.s32.totalorder %s12, 1
      %p72 = scmp.ne.s32.totalorder %s67, %s69
      %p73 = scmp.eq.s32.totalorder %s12, 0
      %p74 = por %p72, %p73
      %p75 = scmp.ne.s32.totalorder %s67, %s69
      %p76 = scmp.eq.s32.totalorder %s17, 1
      %p77 = por %p75, %p76
      %p78 = scmp.ne.s32.totalorder %s69, %s70
      %p79 = scmp.eq.s32.totalorder %s17, 0
      %p80 = por %p78, %p79
      %p81 = scmp.ne.s32.totalorder %s69, %s70
      %p82 = scmp.eq.s32.totalorder %s18, 1
      %p83 = por %p81, %p82
      %p85 = scmp.ne.s32.totalorder %s70, %s84
      %p86 = scmp.eq.s32.totalorder %s18, 0
      %p87 = por %p85, %p86
      %s88 = ssub.s32 %s12, %s19
      %p89 = scmp.eq.s32.totalorder %s88, 0
      %s91 = sadd.s32 %s90, 1
      %s92 = scalar_select %p89, %s90, %s91
      %p95 = pneg %p89
      %p96 = scmp.eq.s32.totalorder %s12, 1
      %p97 = por %p95, %p96
      %p98 = scmp.ne.s32.totalorder %s90, %s93
      %p99 = scmp.eq.s32.totalorder %s12, 0
      %p100 = por %p98, %p99
      %p101 = scmp.ne.s32.totalorder %s90, %s93
      %p102 = scmp.eq.s32.totalorder %s17, 1
      %p103 = por %p101, %p102
      %p104 = scmp.ne.s32.totalorder %s93, %s94
      %p105 = scmp.eq.s32.totalorder %s17, 0
      %p106 = por %p104, %p105
      %p107 = scmp.ne.s32.totalorder %s93, %s94
      %p108 = scmp.eq.s32.totalorder %s18, 1
      %p109 = por %p107, %p108
      %p111 = scmp.ne.s32.totalorder %s94, %s110
      %p112 = scmp.eq.s32.totalorder %s18, 0
      %p113 = por %p111, %p112
      %s114 = ssub.s32 %s12, %s19
      %p115 = scmp.eq.s32.totalorder %s114, 0
      %s117 = sadd.s32 %s116, 1
      %s118 = scalar_select %p115, %s116, %s117
      %p121 = pneg %p115
      %p122 = scmp.eq.s32.totalorder %s12, 1
      %p123 = por %p121, %p122
      %p124 = scmp.ne.s32.totalorder %s116, %s119
      %p125 = scmp.eq.s32.totalorder %s12, 0
      %p126 = por %p124, %p125
      %p127 = scmp.ne.s32.totalorder %s116, %s119
      %p128 = scmp.eq.s32.totalorder %s17, 1
      %p129 = por %p127, %p128
      %p130 = scmp.ne.s32.totalorder %s119, %s120
      %p131 = scmp.eq.s32.totalorder %s17, 0
      %p132 = por %p130, %p131
      %p133 = scmp.ne.s32.totalorder %s119, %s120
      %p134 = scmp.eq.s32.totalorder %s18, 1
      %p135 = por %p133, %p134
      %p137 = scmp.ne.s32.totalorder %s120, %s136
      %p138 = scmp.eq.s32.totalorder %s18, 0
      %p139 = por %p137, %p138
      %p140 = scmp.le.s32.totalorder 1, %s12
      %p141 = scmp.lt.s32.totalorder %s12, 3
      %p142 = pnand %p140, %p141
      %p143 = pneg %p142
      // Predicated region
      $region9: #{_forward_impl.4} parent=5 // pred_check
        _
      $region10: #{_forward_impl.4} parent=5 // pred_check_branch
        %145 = sbr.rel (%p142) target = $region12
      $region11: #{_forward_impl.4} parent=5 // pred_region
        %s146 = ssub.s32 %s12, 1
        // Predicated region
        $region13: #{_forward_impl.4} parent=11 // pred_check
          %p147 = pneg %p59
        $region14: #{_forward_impl.4} parent=11 // pred_check_branch
          %149 = sbr.rel (%p147) target = $region16
        $region15: #{_forward_impl.4} parent=11 // pred_region
          %s151 = ssub.s32 1024, 1024
          %152 = vsyncadd [#allocation3], %s151
          %s153 = sshll.u32 [#allocation2], 4
          %s154 = int_to_ptr.vmem [resolvable:$true] %s153
          %159 = dma.hbm_to_vmem [thread:$0]  %s1, 1024, %s154, [#allocation3], 128, 128, 8
        $region16: #{_forward_impl.4} parent=11 // pred_fallthru
          _
        // Predicated region
        $region17: #{_forward_impl.4} parent=11 // pred_check
          %p160 = pneg %p80
        $region18: #{_forward_impl.4} parent=11 // pred_check_branch
          %162 = sbr.rel (%p160) target = $region20
        $region19: #{_forward_impl.4} parent=11 // pred_region
          _
        $region20: #{_forward_impl.4} parent=11 // pred_fallthru
          _
      $region12: #{_forward_impl.4} parent=5 // pred_fallthru
        _
      %p163 = scmp.lt.s32.totalorder %s12, 2
      // Predicated region
      $region21: #{_forward_impl.4} parent=5 // pred_check
        %p164 = pneg %p163
      $region22: #{_forward_impl.4} parent=5 // pred_check_branch
        %166 = sbr.rel (%p164) target = $region24
      $region23: #{_forward_impl.4} parent=5 // pred_region
        // Predicated region
        $region25: #{_forward_impl.4} parent=23 // pred_check
          %p167 = pneg %p32
        $region26: #{_forward_impl.4} parent=23 // pred_check_branch
          %169 = sbr.rel (%p167) target = $region28
        $region27: #{_forward_impl.4} parent=23 // pred_region
          %p170 = scmp.lt.s32.totalorder %s12, 1
          %s171 = scalar_select %p170, %s12, 1
          %s172 = smul.addr %s171, 4
          %s173 = smul.addr %s172, 4
          %s174 = scalar_lea.vmem %s0, %s173
        $region28: #{_forward_impl.4} parent=23 // pred_fallthru
          _
      $region24: #{_forward_impl.4} parent=5 // pred_fallthru
        _
      %p175 = scmp.le.s32.totalorder 1, %s12
      %p176 = scmp.lt.s32.totalorder %s12, 3
      %p177 = pnand %p175, %p176
      %p178 = pneg %p177
      // Predicated region
      $region29: #{_forward_impl.4} parent=5 // pred_check
        _
      $region30: #{_forward_impl.4} parent=5 // pred_check_branch
        %180 = sbr.rel (%p177) target = $region32
      $region31: #{_forward_impl.4} parent=5 // pred_region
        %s181 = ssub.s32 %s12, 1
        // Predicated region
        $region33: #{_forward_impl.4} parent=31 // pred_check
          %p182 = pneg %p59
        $region34: #{_forward_impl.4} parent=31 // pred_check_branch
          %184 = sbr.rel (%p182) target = $region36
        $region35: #{_forward_impl.4} parent=31 // pred_region
          %185 = dma.done [#allocation3], 1024
        $region36: #{_forward_impl.4} parent=31 // pred_fallthru
          _
        %p186 = scmp.lt.s32.totalorder %s17, 1
        %s187 = scalar_select %p186, %s17, 1
        %s188 = smul.addr %s187, 4
        %s189 = smul.addr %s188, 4
        %s190 = scalar_lea.vmem %s0, %s189
        %p191 = pneg %p38
        %p192 = pneg %p35
        %p193 = pneg %p59
        %p194 = pneg %p56
        %p195 = pneg %p80
        %p196 = pneg %p77
        %p197 = pneg %p106
        %p198 = pneg %p103
        %p199 = scmp.lt.s32.totalorder %s17, 1
        %s200 = scalar_select %p199, %s17, 1
        %s201 = smul.addr %s200, 8
        %s202 = smul.addr %s201, 4
        %s203 = scalar_lea.vmem %s3, %s202
        %p204 = pneg %p132
        %p205 = pneg %p129
        %p206 = scmp.lt.s32.totalorder %s17, 1
        %s207 = scalar_select %p206, %s17, 1
        %s208 = smul.addr %s207, 8
        %s209 = smul.addr %s208, 8
        %s210 = scalar_lea.vmem %s4, %s209
        %p211 = scmp.lt.s32.totalorder %s17, 1
        %s212 = scalar_select %p211, %s17, 1
        %s213 = smul.addr %s212, 4
        %s214 = smul.addr %s213, 4
        %s215 = scalar_lea.vmem %s0, %s214
        %p216 = scmp.lt.s32.totalorder %s17, 1
        %s217 = scalar_select %p216, %s17, 1
        %s218 = smul.addr %s217, 8
        %s219 = smul.addr %s218, 4
        %s220 = scalar_lea.vmem %s3, %s219
        %p221 = scmp.lt.s32.totalorder %s17, 1
        %s222 = scalar_select %p221, %s17, 1
        %s223 = smul.addr %s222, 8
        %s224 = smul.addr %s223, 8
        %s225 = scalar_lea.vmem %s4, %s224
        %v227 = vld [vmem:[%s215] sm:$0xf]
        %v228 = vld [vmem:[%s215 + $0x8] sm:$0xf]
        %v229 = vld [vmem:[%s215] sm:$0xff]
        %v230 = vld [vmem:[%s215 + $0x8] sm:$0xff]
        %v233 = vunpack.c.l.b16 %v227
        %v234 = vunpack.c.l.b16 %v228
        %v235 = vpack.c.b16 %v234, %v233
        %v239 = vunpack.c.l.b16 %v229
        %v240 = vunpack.c.h.b16 %v229
        %v241 = vunpack.c.l.b16 %v230
        %v242 = vunpack.c.h.b16 %v230
        %v243 = vpack.c.b16 %v241, %v239
        %v244 = vpack.c.b16 %v242, %v240
        %245 = vrot.lane.b32.xlu0 %v243, 127
        %v246 = vpop.permute.xlu0 %245
        %247 = vrot.lane.b32.xlu0 %v244, 127
        %v248 = vpop.permute.xlu0 %247
        %vm249 = vcmask 1039360
        %v250 = vsel %vm249, %v246, %v248
        %252 = vrot.lane.b32.xlu0 %v243, 126
        %v253 = vpop.permute.xlu0 %252
        %254 = vrot.lane.b32.xlu0 %v244, 126
        %v255 = vpop.permute.xlu0 %254
        %vm256 = vcmask 1031168
        %v257 = vsel %vm256, %v253, %v255
        %259 = vrot.lane.b32.xlu0 %v243, 122
        %v260 = vpop.permute.xlu0 %259
        %261 = vrot.lane.b32.xlu0 %v244, 122
        %v262 = vpop.permute.xlu0 %261
        %vm263 = vcmask 998400
        %v264 = vsel %vm263, %v260, %v262
        %266 = vrot.lane.b32.xlu0 %v243, 121
        %v267 = vpop.permute.xlu0 %266
        %268 = vrot.lane.b32.xlu0 %v244, 121
        %v269 = vpop.permute.xlu0 %268
        %vm270 = vcmask 990208
        %v271 = vsel %vm270, %v267, %v269
        %273 = vrot.lane.b32.xlu0 %v243, 120
        %v274 = vpop.permute.xlu0 %273
        %275 = vrot.lane.b32.xlu0 %v244, 120
        %v276 = vpop.permute.xlu0 %275
        %vm277 = vcmask 982016
        %v278 = vsel %vm277, %v274, %v276
        %280 = vrot.lane.b32.xlu0 %v243, 116
        %v281 = vpop.permute.xlu0 %280
        %282 = vrot.lane.b32.xlu0 %v244, 116
        %v283 = vpop.permute.xlu0 %282
        %vm284 = vcmask 949248
        %v285 = vsel %vm284, %v281, %v283
        %287 = vrot.lane.b32.xlu0 %v243, 115
        %v288 = vpop.permute.xlu0 %287
        %289 = vrot.lane.b32.xlu0 %v244, 115
        %v290 = vpop.permute.xlu0 %289
        %vm291 = vcmask 941056
        %v292 = vsel %vm291, %v288, %v290
        %294 = vrot.lane.b32.xlu0 %v243, 114
        %v295 = vpop.permute.xlu0 %294
        %296 = vrot.lane.b32.xlu0 %v244, 114
        %v297 = vpop.permute.xlu0 %296
        %vm298 = vcmask 932864
        %v299 = vsel %vm298, %v295, %v297
        %v301 = vld [vmem:[#allocation2] sm:$0xff]
        %v302 = vld [vmem:[#allocation2 + $0x8] sm:$0xff]
        %v303 = vld [vmem:[#allocation2 + $0x10] sm:$0xff]
        %v304 = vld [vmem:[#allocation2 + $0x18] sm:$0xff]
        %v305 = vld [vmem:[#allocation2 + $0x20] sm:$0xff]
        %v306 = vld [vmem:[#allocation2 + $0x28] sm:$0xff]
        %v307 = vld [vmem:[#allocation2 + $0x30] sm:$0xff]
        %v308 = vld [vmem:[#allocation2 + $0x38] sm:$0xff]
        %v317 = vunpack.c.l.b16 %v301
        %v318 = vunpack.c.h.b16 %v301
        %v319 = vunpack.c.l.b16 %v302
        %v320 = vunpack.c.h.b16 %v302
        %v321 = vunpack.c.l.b16 %v303
        %v322 = vunpack.c.h.b16 %v303
        %v323 = vunpack.c.l.b16 %v304
        %v324 = vunpack.c.h.b16 %v304
        %v325 = vunpack.c.l.b16 %v305
        %v326 = vunpack.c.h.b16 %v305
        %v327 = vunpack.c.l.b16 %v306
        %v328 = vunpack.c.h.b16 %v306
        %v329 = vunpack.c.l.b16 %v307
        %v330 = vunpack.c.h.b16 %v307
        %v331 = vunpack.c.l.b16 %v308
        %v332 = vunpack.c.h.b16 %v308
        %v333 = vpack.c.b16 %v319, %v317
        %v334 = vpack.c.b16 %v320, %v318
        %v335 = vpack.c.b16 %v323, %v321
        %v336 = vpack.c.b16 %v324, %v322
        %v337 = vpack.c.b16 %v327, %v325
        %v338 = vpack.c.b16 %v328, %v326
        %v339 = vpack.c.b16 %v331, %v329
        %v340 = vpack.c.b16 %v332, %v330
        %vm345 = vcmask 130048
        %v347 = vsel %vm345, %v334, 0
        %v350 = vsel %vm345, %v336, 0
        %v353 = vsel %vm345, %v338, 0
        %v356 = vsel %vm345, %v340, 0
        %358 = vmatprep.subr.bf16.mxu0 0
        %359 = vmatpush1.bf16.msra.mxu0 %v235
        %360 = vmatprep.subr.bf16.mxu0 0
        %361 = vmatpush1.bf16.msra.mxu0 %v250
        %362 = vmatprep.subr.bf16.mxu0 0
        %363 = vmatpush1.bf16.msra.mxu0 %v257
        %364 = vmatprep.subr.bf16.mxu0 0
        %365 = vmatpush1.bf16.msra.mxu0 %v264
        %366 = vmatprep.subr.bf16.mxu0 0
        %367 = vmatpush1.bf16.msra.mxu0 %v271
        %368 = vmatprep.subr.bf16.mxu0 0
        %369 = vmatpush1.bf16.msra.mxu0 %v278
        %370 = vmatprep.subr.bf16.mxu0 0
        %371 = vmatpush1.bf16.msra.mxu0 %v285
        %372 = vmatprep.subr.bf16.mxu0 0
        %373 = vmatpush1.bf16.msra.mxu0 %v292
        %374 = vmatprep.subr.bf16.mxu0 0
        %375 = vmatpush1.bf16.msra.mxu0 %v299
        %376 = vmatprep.subr.bf16.mxu0 0
        %377 = vmatpush1.bf16.msra.mxu0 0
        %378 = vmatprep.subr.bf16.mxu0 0
        %379 = vmatpush1.bf16.msra.mxu0 0
        %380 = vmatprep.subr.bf16.mxu0 0
        %381 = vmatpush1.bf16.msra.mxu0 0
        %382 = vmatprep.subr.bf16.mxu0 0
        %383 = vmatpush1.bf16.msra.mxu0 0
        %384 = vmatprep.subr.bf16.mxu0 0
        %385 = vmatpush1.bf16.msra.mxu0 0
        %386 = vmatprep.subr.bf16.mxu0 0
        %387 = vmatpush1.bf16.msra.mxu0 0
        %388 = vmatprep.subr.bf16.mxu0 0
        %389 = vmatpush1.bf16.msra.mxu0 0
        %390 = vmatprep.mubr.bf16.mxu0 %v347
        %391 = vmatmul.mubr.bf16.gmra.mrb[0].mxu0 %v333
        %v392 = vpop.f32.mrb[0].mxu0
        %v393 = vadd.f32 0.0, %v392
        %v394 = vpop.f32.mrb[0].mxu0
        %v395 = vpop.f32.mrb[0].mxu0
        %v396 = vadd.f32 0.0, %v395
        %v397 = vpop.f32.mrb[0].mxu0
        %398 = vmatprep.mubr.bf16.mxu0 %v350
        %399 = vmatmul.mubr.bf16.gmra.mrb[0].mxu0 %v335
        %v400 = vpop.f32.mrb[0].mxu0
        %v401 = vadd.f32 0.0, %v400
        %v402 = vpop.f32.mrb[0].mxu0
        %v403 = vpop.f32.mrb[0].mxu0
        %v404 = vadd.f32 0.0, %v403
        %v405 = vpop.f32.mrb[0].mxu0
        %406 = vmatprep.mubr.bf16.mxu0 %v353
        %407 = vmatmul.mubr.bf16.gmra.mrb[0].mxu0 %v337
        %v408 = vpop.f32.mrb[0].mxu0
        %v409 = vadd.f32 0.0, %v408
        %v410 = vpop.f32.mrb[0].mxu0
        %v411 = vpop.f32.mrb[0].mxu0
        %v412 = vadd.f32 0.0, %v411
        %v413 = vpop.f32.mrb[0].mxu0
        %414 = vmatprep.mubr.bf16.mxu0 %v356
        %415 = vmatmul.mubr.bf16.gmra.mrb[0].mxu0 %v339
        %v416 = vpop.f32.mrb[0].mxu0
        %v417 = vadd.f32 0.0, %v416
        %v418 = vpop.f32.mrb[0].mxu0
        %v419 = vpop.f32.mrb[0].mxu0
        %v420 = vadd.f32 0.0, %v419
        %v421 = vpop.f32.mrb[0].mxu0
        %422 = vdwg.mxu0
        %v423 = vpack.c.bf16 %v396, %v393
        %v424 = vpack.c.bf16 %v404, %v401
        %v425 = vpack.c.bf16 %v412, %v409
        %v426 = vpack.c.bf16 %v420, %v417
        %v431 = vunpack.c.l.b16 %v423
        %v432 = vunpack.c.h.b16 %v423
        %v433 = vunpack.c.l.b16 %v424
        %v434 = vunpack.c.h.b16 %v424
        %v435 = vunpack.c.l.b16 %v425
        %v436 = vunpack.c.h.b16 %v425
        %v437 = vunpack.c.l.b16 %v426
        %v438 = vunpack.c.h.b16 %v426
        %v439 = vpack.c.b16 %v431, %v431
        %v440 = vpack.c.b16 %v432, %v432
        %v441 = vpack.c.b16 %v433, %v433
        %v442 = vpack.c.b16 %v434, %v434
        %v443 = vpack.c.b16 %v435, %v435
        %v444 = vpack.c.b16 %v436, %v436
        %v445 = vpack.c.b16 %v437, %v437
        %v446 = vpack.c.b16 %v438, %v438
        %455 = vst [vmem:[%s220] sm:$0xf] %v439
        %456 = vst [vmem:[%s220 + $0x4] sm:$0xf] %v440
        %457 = vst [vmem:[%s220 + $0x8] sm:$0xf] %v441
        %458 = vst [vmem:[%s220 + $0xc] sm:$0xf] %v442
        %459 = vst [vmem:[%s220 + $0x10] sm:$0xf] %v443
        %460 = vst [vmem:[%s220 + $0x14] sm:$0xf] %v444
        %461 = vst [vmem:[%s220 + $0x18] sm:$0xf] %v445
        %462 = vst [vmem:[%s220 + $0x1c] sm:$0xf] %v446
        %v463 = vld [vmem:[%s2] sm:$0x1]
        %v465 = vlaneseq
        %v466 = vshrl.u32 %v465, 7
        %v467 = vsub.s32 0, %v466
        %v468 = vrot.slane %v463, %v467
        %v470 = vmul.f32 %v393, %v468
        %v471 = vmul.f32 %v396, %v468
        %v472 = vmul.f32 %v401, %v468
        %v473 = vmul.f32 %v404, %v468
        %v474 = vmul.f32 %v409, %v468
        %v475 = vmul.f32 %v412, %v468
        %v476 = vmul.f32 %v417, %v468
        %v477 = vmul.f32 %v420, %v468
        %478 = vadd.xlane.f32.xlu0 %v470
        %v479 = vpop.xlane.xlu0 %478
        %480 = vadd.xlane.f32.xlu0 %v471
        %v481 = vpop.xlane.xlu0 %480
        %482 = vadd.xlane.f32.xlu0 %v472
        %v483 = vpop.xlane.xlu0 %482
        %484 = vadd.xlane.f32.xlu0 %v473
        %v485 = vpop.xlane.xlu0 %484
        %486 = vadd.xlane.f32.xlu0 %v474
        %v487 = vpop.xlane.xlu0 %486
        %488 = vadd.xlane.f32.xlu0 %v475
        %v489 = vpop.xlane.xlu0 %488
        %490 = vadd.xlane.f32.xlu0 %v476
        %v491 = vpop.xlane.xlu0 %490
        %492 = vadd.xlane.f32.xlu0 %v477
        %v493 = vpop.xlane.xlu0 %492
        %vm494 = vcmask 7168
        %495 = vst.msk [vmem:[%s225] sm:$0xff] %vm494, %v479
        %496 = vst.msk [vmem:[%s225 + $0x8] sm:$0xff] %vm494, %v481
        %497 = vst.msk [vmem:[%s225 + $0x10] sm:$0xff] %vm494, %v483
        %498 = vst.msk [vmem:[%s225 + $0x18] sm:$0xff] %vm494, %v485
        %499 = vst.msk [vmem:[%s225 + $0x20] sm:$0xff] %vm494, %v487
        %500 = vst.msk [vmem:[%s225 + $0x28] sm:$0xff] %vm494, %v489
        %501 = vst.msk [vmem:[%s225 + $0x30] sm:$0xff] %vm494, %v491
        %502 = vst.msk [vmem:[%s225 + $0x38] sm:$0xff] %vm494, %v493
        %v503 = vmul.f32 %v470, %v393
        %v504 = vmul.f32 %v471, %v396
        %v505 = vmul.f32 %v472, %v401
        %v506 = vmul.f32 %v473, %v404
        %v507 = vmul.f32 %v474, %v409
        %v508 = vmul.f32 %v475, %v412
        %v509 = vmul.f32 %v476, %v417
        %v510 = vmul.f32 %v477, %v420
        %511 = vadd.xlane.f32.xlu0 %v503
        %v512 = vpop.xlane.xlu0 %511
        %513 = vadd.xlane.f32.xlu0 %v504
        %v514 = vpop.xlane.xlu0 %513
        %515 = vadd.xlane.f32.xlu0 %v505
        %v516 = vpop.xlane.xlu0 %515
        %517 = vadd.xlane.f32.xlu0 %v506
        %v518 = vpop.xlane.xlu0 %517
        %519 = vadd.xlane.f32.xlu0 %v507
        %v520 = vpop.xlane.xlu0 %519
        %521 = vadd.xlane.f32.xlu0 %v508
        %v522 = vpop.xlane.xlu0 %521
        %523 = vadd.xlane.f32.xlu0 %v509
        %v524 = vpop.xlane.xlu0 %523
        %525 = vadd.xlane.f32.xlu0 %v510
        %v526 = vpop.xlane.xlu0 %525
        %vm527 = vcmask 15368
        %528 = vst.msk [vmem:[%s225] sm:$0xff] %vm527, %v512
        %529 = vst.msk [vmem:[%s225 + $0x8] sm:$0xff] %vm527, %v514
        %530 = vst.msk [vmem:[%s225 + $0x10] sm:$0xff] %vm527, %v516
        %531 = vst.msk [vmem:[%s225 + $0x18] sm:$0xff] %vm527, %v518
        %532 = vst.msk [vmem:[%s225 + $0x20] sm:$0xff] %vm527, %v520
        %533 = vst.msk [vmem:[%s225 + $0x28] sm:$0xff] %vm527, %v522
        %534 = vst.msk [vmem:[%s225 + $0x30] sm:$0xff] %vm527, %v524
        %535 = vst.msk [vmem:[%s225 + $0x38] sm:$0xff] %vm527, %v526
        %p536 = scmp.lt.s32.totalorder %s17, 1
        %s537 = scalar_select %p536, %s17, 1
        %s538 = smul.addr %s537, 8
        %s539 = smul.addr %s538, 4
        %s540 = scalar_lea.vmem %s3, %s539
        %p541 = scmp.lt.s32.totalorder %s17, 1
        %s542 = scalar_select %p541, %s17, 1
        %s543 = smul.addr %s542, 8
        %s544 = smul.addr %s543, 8
        %s545 = scalar_lea.vmem %s4, %s544
        // Predicated region
        $region37: #{_forward_impl.4} parent=31 // pred_check
          %p546 = pneg %p103
        $region38: #{_forward_impl.4} parent=31 // pred_check_branch
          %548 = sbr.rel (%p546) target = $region40
        $region39: #{_forward_impl.4} parent=31 // pred_region
          _
        $region40: #{_forward_impl.4} parent=31 // pred_fallthru
          _
        // Predicated region
        $region41: #{_forward_impl.4} parent=31 // pred_check
          %p549 = pneg %p129
        $region42: #{_forward_impl.4} parent=31 // pred_check_branch
          %551 = sbr.rel (%p549) target = $region44
        $region43: #{_forward_impl.4} parent=31 // pred_region
          _
        $region44: #{_forward_impl.4} parent=31 // pred_fallthru
          _
      $region32: #{_forward_impl.4} parent=5 // pred_fallthru
        _
      %p552 = scmp.le.s32.totalorder 2, %s12
      // Predicated region
      $region45: #{_forward_impl.4} parent=5 // pred_check
        %p553 = pneg %p552
      $region46: #{_forward_impl.4} parent=5 // pred_check_branch
        %555 = sbr.rel (%p553) target = $region48
      $region47: #{_forward_impl.4} parent=5 // pred_region
        %s556 = ssub.s32 %s12, 2
        // Predicated region
        $region49: #{_forward_impl.4} parent=47 // pred_check
          %p557 = pneg %p109
        $region50: #{_forward_impl.4} parent=47 // pred_check_branch
          %559 = sbr.rel (%p557) target = $region52
        $region51: #{_forward_impl.4} parent=47 // pred_region
          %p560 = scmp.lt.s32.totalorder %s18, 1
          %s561 = scalar_select %p560, %s18, 1
          %s562 = smul.addr %s561, 8
          %s563 = smul.addr %s562, 4
          %s564 = scalar_lea.vmem %s3, %s563
        $region52: #{_forward_impl.4} parent=47 // pred_fallthru
          _
        // Predicated region
        $region53: #{_forward_impl.4} parent=47 // pred_check
          %p565 = pneg %p135
        $region54: #{_forward_impl.4} parent=47 // pred_check_branch
          %567 = sbr.rel (%p565) target = $region56
        $region55: #{_forward_impl.4} parent=47 // pred_region
          %p568 = scmp.lt.s32.totalorder %s18, 1
          %s569 = scalar_select %p568, %s18, 1
          %s570 = smul.addr %s569, 8
          %s571 = smul.addr %s570, 8
          %s572 = scalar_lea.vmem %s4, %s571
        $region56: #{_forward_impl.4} parent=47 // pred_fallthru
          _
      $region48: #{_forward_impl.4} parent=5 // pred_fallthru
        _
    $region6: #{_forward_impl.4} parent=1 // loop_footer
      %s16 = sadd.s32 1, %s12
    $region7: #{_forward_impl.4} parent=1 // loop_footer_branch
      %11 = sbr.rel target = $region3
    $region8: #{_forward_impl.4} parent=1 // loop_exit
      _
    %573 = vsyncpa [#allocation3], 1
    %s574 = scalar_lea.sflag [#allocation3], 1
    %575 = vsyncpa %s574, 1

// kernel: _forward_impl.5
$region0: #{_forward_impl.5}
  #allocation0 [shape = 'u32[]', space=smem, size = 0x4, offset = 0x4, fixed_abs, tag = 'smem constant byte address 0x4 - core index']
  #allocation1 [shape = 'u32[144,128]{1,0:T(1,128)}', space=vmem, size = 0x12000, scoped, tag = 'internal scratch']
  %s0 = inlined_call_operand.vmem [shape: bf16[2,16,256], index: 0, kind: input, shape index: {}]
  %s1 = inlined_call_operand.hbm [shape: bf16[64,144], index: 1, kind: input, shape index: {}]
  %s2 = inlined_call_operand.vmem [shape: f32[1,128], index: 2, kind: input, shape index: {}]
  %s3 = inlined_call_operand.vmem [shape: bf16[2,64,128], index: 3, kind: output, shape index: {0}]
  %s4 = inlined_call_operand.vmem [shape: f32[2,64,2], index: 4, kind: output, shape index: {1}]
  %5 = xla_tuple %s3, %s4
  %s6 = sld [smem:[#allocation0]]
  $region57: #{_forward_impl.5} parent=0
    _
  %s8 = ssub.s32 1, %s6
  %s9 = scalar_select 0, %s8, %s6
  $region1: #{_forward_impl.5} parent=0
    #allocation2 [shape = 'u8[32768]{0}', space=vmem, size = 0x8000, scoped, tag = 'input window, operand 1, single buffered']
    #allocation3 [shape = 's32[2]{0}', space=sflag, size = 0x8, scoped, tag = 'scoped memory for _forward_impl.5']
    %10 = vsyncpa [#allocation3], 0
    loop: start=0, step=1, limit=4
    $region2: #{_forward_impl.5} parent=1 // loop_pre_header
      _
    $region3: #{_forward_impl.5} parent=1 // loop_header
      %s12 = sphi 0, %s16
      %p13 = scmp.ge.s32.totalorder %s12, 4
      %s22 = sphi 0, %s24
      %s25 = sphi 0, %s22
      %s26 = sphi 0, %s25
      %s42 = sphi 0, %s26
      %s46 = sphi 0, %s46
      %s48 = sphi 0, %s46
      %s49 = sphi 0, %s48
      %s63 = sphi 0, %s49
      %s67 = sphi 0, %s67
      %s69 = sphi 0, %s67
      %s70 = sphi 0, %s69
      %s84 = sphi 0, %s70
      %s90 = sphi 0, %s92
      %s93 = sphi 0, %s90
      %s94 = sphi 0, %s93
      %s110 = sphi 0, %s94
      %s116 = sphi 0, %s118
      %s119 = sphi 0, %s116
      %s120 = sphi 0, %s119
      %s136 = sphi 0, %s120
    $region4: #{_forward_impl.5} parent=1 // loop_header_branch
      %15 = sbr.rel (%p13) target = $region8
    $region5: #{_forward_impl.5} parent=1 // loop_body
      %s17 = ssub.s32 %s12, 1
      %s18 = ssub.s32 %s12, 2
      %s19 = sadd.s32 %s12, 1
      %s20 = ssub.s32 %s12, %s19
      %p21 = scmp.eq.s32.totalorder %s20, 0
      %s23 = sadd.s32 %s22, 1
      %s24 = scalar_select %p21, %s22, %s23
      %p27 = pneg %p21
      %p28 = scmp.eq.s32.totalorder %s12, 1
      %p29 = por %p27, %p28
      %p30 = scmp.ne.s32.totalorder %s22, %s25
      %p31 = scmp.eq.s32.totalorder %s12, 0
      %p32 = por %p30, %p31
      %p33 = scmp.ne.s32.totalorder %s22, %s25
      %p34 = scmp.eq.s32.totalorder %s17, 1
      %p35 = por %p33, %p34
      %p36 = scmp.ne.s32.totalorder %s25, %s26
      %p37 = scmp.eq.s32.totalorder %s17, 0
      %p38 = por %p36, %p37
      %p39 = scmp.ne.s32.totalorder %s25, %s26
      %p40 = scmp.eq.s32.totalorder %s18, 1
      %p41 = por %p39, %p40
      %p43 = scmp.ne.s32.totalorder %s26, %s42
      %p44 = scmp.eq.s32.totalorder %s18, 0
      %p45 = por %p43, %p44
      %s47 = sadd.s32 %s46, 1
      %p50 = scmp.eq.s32.totalorder %s12, 1
      %p51 = scmp.ne.s32.totalorder %s46, %s48
      %p52 = scmp.eq.s32.totalorder %s12, 0
      %p53 = por %p51, %p52
      %p54 = scmp.ne.s32.totalorder %s46, %s48
      %p55 = scmp.eq.s32.totalorder %s17, 1
      %p56 = por %p54, %p55
      %p57 = scmp.ne.s32.totalorder %s48, %s49
      %p58 = scmp.eq.s32.totalorder %s17, 0
      %p59 = por %p57, %p58
      %p60 = scmp.ne.s32.totalorder %s48, %s49
      %p61 = scmp.eq.s32.totalorder %s18, 1
      %p62 = por %p60, %p61
      %p64 = scmp.ne.s32.totalorder %s49, %s63
      %p65 = scmp.eq.s32.totalorder %s18, 0
      %p66 = por %p64, %p65
      %s68 = sadd.s32 %s67, 1
      %p71 = scmp.eq.s32.totalorder %s12, 1
      %p72 = scmp.ne.s32.totalorder %s67, %s69
      %p73 = scmp.eq.s32.totalorder %s12, 0
      %p74 = por %p72, %p73
      %p75 = scmp.ne.s32.totalorder %s67, %s69
      %p76 = scmp.eq.s32.totalorder %s17, 1
      %p77 = por %p75, %p76
      %p78 = scmp.ne.s32.totalorder %s69, %s70
      %p79 = scmp.eq.s32.totalorder %s17, 0
      %p80 = por %p78, %p79
      %p81 = scmp.ne.s32.totalorder %s69, %s70
      %p82 = scmp.eq.s32.totalorder %s18, 1
      %p83 = por %p81, %p82
      %p85 = scmp.ne.s32.totalorder %s70, %s84
      %p86 = scmp.eq.s32.totalorder %s18, 0
      %p87 = por %p85, %p86
      %s88 = ssub.s32 %s12, %s19
      %p89 = scmp.eq.s32.totalorder %s88, 0
      %s91 = sadd.s32 %s90, 1
      %s92 = scalar_select %p89, %s90, %s91
      %p95 = pneg %p89
      %p96 = scmp.eq.s32.totalorder %s12, 1
      %p97 = por %p95, %p96
      %p98 = scmp.ne.s32.totalorder %s90, %s93
      %p99 = scmp.eq.s32.totalorder %s12, 0
      %p100 = por %p98, %p99
      %p101 = scmp.ne.s32.totalorder %s90, %s93
      %p102 = scmp.eq.s32.totalorder %s17, 1
      %p103 = por %p101, %p102
      %p104 = scmp.ne.s32.totalorder %s93, %s94
      %p105 = scmp.eq.s32.totalorder %s17, 0
      %p106 = por %p104, %p105
      %p107 = scmp.ne.s32.totalorder %s93, %s94
      %p108 = scmp.eq.s32.totalorder %s18, 1
      %p109 = por %p107, %p108
      %p111 = scmp.ne.s32.totalorder %s94, %s110
      %p112 = scmp.eq.s32.totalorder %s18, 0
      %p113 = por %p111, %p112
      %s114 = ssub.s32 %s12, %s19
      %p115 = scmp.eq.s32.totalorder %s114, 0
      %s117 = sadd.s32 %s116, 1
      %s118 = scalar_select %p115, %s116, %s117
      %p121 = pneg %p115
      %p122 = scmp.eq.s32.totalorder %s12, 1
      %p123 = por %p121, %p122
      %p124 = scmp.ne.s32.totalorder %s116, %s119
      %p125 = scmp.eq.s32.totalorder %s12, 0
      %p126 = por %p124, %p125
      %p127 = scmp.ne.s32.totalorder %s116, %s119
      %p128 = scmp.eq.s32.totalorder %s17, 1
      %p129 = por %p127, %p128
      %p130 = scmp.ne.s32.totalorder %s119, %s120
      %p131 = scmp.eq.s32.totalorder %s17, 0
      %p132 = por %p130, %p131
      %p133 = scmp.ne.s32.totalorder %s119, %s120
      %p134 = scmp.eq.s32.totalorder %s18, 1
      %p135 = por %p133, %p134
      %p137 = scmp.ne.s32.totalorder %s120, %s136
      %p138 = scmp.eq.s32.totalorder %s18, 0
      %p139 = por %p137, %p138
      %p140 = scmp.le.s32.totalorder 1, %s12
      %p141 = scmp.lt.s32.totalorder %s12, 3
      %p142 = pnand %p140, %p141
      %p143 = pneg %p142
      // Predicated region
      $region9: #{_forward_impl.5} parent=5 // pred_check
        _
      $region10: #{_forward_impl.5} parent=5 // pred_check_branch
        %145 = sbr.rel (%p142) target = $region12
      $region11: #{_forward_impl.5} parent=5 // pred_region
        %s146 = ssub.s32 %s12, 1
        // Predicated region
        $region13: #{_forward_impl.5} parent=11 // pred_check
          %p147 = pneg %p59
        $region14: #{_forward_impl.5} parent=11 // pred_check_branch
          %149 = sbr.rel (%p147) target = $region16
        $region15: #{_forward_impl.5} parent=11 // pred_region
          %s151 = ssub.s32 1024, 1024
          %152 = vsyncadd [#allocation3], %s151
          %s153 = sshll.u32 [#allocation2], 4
          %s154 = int_to_ptr.vmem [resolvable:$true] %s153
          %159 = dma.hbm_to_vmem [thread:$0]  %s1, 1024, %s154, [#allocation3], 128, 128, 8
        $region16: #{_forward_impl.5} parent=11 // pred_fallthru
          _
        // Predicated region
        $region17: #{_forward_impl.5} parent=11 // pred_check
          %p160 = pneg %p80
        $region18: #{_forward_impl.5} parent=11 // pred_check_branch
          %162 = sbr.rel (%p160) target = $region20
        $region19: #{_forward_impl.5} parent=11 // pred_region
          _
        $region20: #{_forward_impl.5} parent=11 // pred_fallthru
          _
      $region12: #{_forward_impl.5} parent=5 // pred_fallthru
        _
      %p163 = scmp.lt.s32.totalorder %s12, 2
      // Predicated region
      $region21: #{_forward_impl.5} parent=5 // pred_check
        %p164 = pneg %p163
      $region22: #{_forward_impl.5} parent=5 // pred_check_branch
        %166 = sbr.rel (%p164) target = $region24
      $region23: #{_forward_impl.5} parent=5 // pred_region
        // Predicated region
        $region25: #{_forward_impl.5} parent=23 // pred_check
          %p167 = pneg %p32
        $region26: #{_forward_impl.5} parent=23 // pred_check_branch
          %169 = sbr.rel (%p167) target = $region28
        $region27: #{_forward_impl.5} parent=23 // pred_region
          %p170 = scmp.lt.s32.totalorder %s12, 1
          %s171 = scalar_select %p170, %s12, 1
          %s172 = smul.addr %s171, 4
          %s173 = smul.addr %s172, 4
          %s174 = scalar_lea.vmem %s0, %s173
        $region28: #{_forward_impl.5} parent=23 // pred_fallthru
          _
      $region24: #{_forward_impl.5} parent=5 // pred_fallthru
        _
      %p175 = scmp.le.s32.totalorder 1, %s12
      %p176 = scmp.lt.s32.totalorder %s12, 3
      %p177 = pnand %p175, %p176
      %p178 = pneg %p177
      // Predicated region
      $region29: #{_forward_impl.5} parent=5 // pred_check
        _
      $region30: #{_forward_impl.5} parent=5 // pred_check_branch
        %180 = sbr.rel (%p177) target = $region32
      $region31: #{_forward_impl.5} parent=5 // pred_region
        %s181 = ssub.s32 %s12, 1
        // Predicated region
        $region33: #{_forward_impl.5} parent=31 // pred_check
          %p182 = pneg %p59
        $region34: #{_forward_impl.5} parent=31 // pred_check_branch
          %184 = sbr.rel (%p182) target = $region36
        $region35: #{_forward_impl.5} parent=31 // pred_region
          %185 = dma.done [#allocation3], 1024
        $region36: #{_forward_impl.5} parent=31 // pred_fallthru
          _
        %p186 = scmp.lt.s32.totalorder %s17, 1
        %s187 = scalar_select %p186, %s17, 1
        %s188 = smul.addr %s187, 4
        %s189 = smul.addr %s188, 4
        %s190 = scalar_lea.vmem %s0, %s189
        %p191 = pneg %p38
        %p192 = pneg %p35
        %p193 = pneg %p59
        %p194 = pneg %p56
        %p195 = pneg %p80
        %p196 = pneg %p77
        %p197 = pneg %p106
        %p198 = pneg %p103
        %p199 = scmp.lt.s32.totalorder %s17, 1
        %s200 = scalar_select %p199, %s17, 1
        %s201 = smul.addr %s200, 8
        %s202 = smul.addr %s201, 4
        %s203 = scalar_lea.vmem %s3, %s202
        %p204 = pneg %p132
        %p205 = pneg %p129
        %p206 = scmp.lt.s32.totalorder %s17, 1
        %s207 = scalar_select %p206, %s17, 1
        %s208 = smul.addr %s207, 8
        %s209 = smul.addr %s208, 8
        %s210 = scalar_lea.vmem %s4, %s209
        %p211 = scmp.lt.s32.totalorder %s17, 1
        %s212 = scalar_select %p211, %s17, 1
        %s213 = smul.addr %s212, 4
        %s214 = smul.addr %s213, 4
        %s215 = scalar_lea.vmem %s0, %s214
        %p216 = scmp.lt.s32.totalorder %s17, 1
        %s217 = scalar_select %p216, %s17, 1
        %s218 = smul.addr %s217, 8
        %s219 = smul.addr %s218, 4
        %s220 = scalar_lea.vmem %s3, %s219
        %p221 = scmp.lt.s32.totalorder %s17, 1
        %s222 = scalar_select %p221, %s17, 1
        %s223 = smul.addr %s222, 8
        %s224 = smul.addr %s223, 8
        %s225 = scalar_lea.vmem %s4, %s224
        %v227 = vld [vmem:[%s215] sm:$0xf]
        %v228 = vld [vmem:[%s215 + $0x8] sm:$0xf]
        %v229 = vld [vmem:[%s215] sm:$0xff]
        %v230 = vld [vmem:[%s215 + $0x8] sm:$0xff]
        %v233 = vunpack.c.l.b16 %v227
        %v234 = vunpack.c.l.b16 %v228
        %v235 = vpack.c.b16 %v234, %v233
        %v239 = vunpack.c.l.b16 %v229
        %v240 = vunpack.c.h.b16 %v229
        %v241 = vunpack.c.l.b16 %v230
        %v242 = vunpack.c.h.b16 %v230
        %v243 = vpack.c.b16 %v241, %v239
        %v244 = vpack.c.b16 %v242, %v240
        %245 = vrot.lane.b32.xlu0 %v243, 127
        %v246 = vpop.permute.xlu0 %245
        %247 = vrot.lane.b32.xlu0 %v244, 127
        %v248 = vpop.permute.xlu0 %247
        %vm249 = vcmask 1039360
        %v250 = vsel %vm249, %v246, %v248
        %252 = vrot.lane.b32.xlu0 %v243, 126
        %v253 = vpop.permute.xlu0 %252
        %254 = vrot.lane.b32.xlu0 %v244, 126
        %v255 = vpop.permute.xlu0 %254
        %vm256 = vcmask 1031168
        %v257 = vsel %vm256, %v253, %v255
        %259 = vrot.lane.b32.xlu0 %v243, 118
        %v260 = vpop.permute.xlu0 %259
        %261 = vrot.lane.b32.xlu0 %v244, 118
        %v262 = vpop.permute.xlu0 %261
        %vm263 = vcmask 965632
        %v264 = vsel %vm263, %v260, %v262
        %266 = vrot.lane.b32.xlu0 %v243, 117
        %v267 = vpop.permute.xlu0 %266
        %268 = vrot.lane.b32.xlu0 %v244, 117
        %v269 = vpop.permute.xlu0 %268
        %vm270 = vcmask 957440
        %v271 = vsel %vm270, %v267, %v269
        %273 = vrot.lane.b32.xlu0 %v243, 116
        %v274 = vpop.permute.xlu0 %273
        %275 = vrot.lane.b32.xlu0 %v244, 116
        %v276 = vpop.permute.xlu0 %275
        %vm277 = vcmask 949248
        %v278 = vsel %vm277, %v274, %v276
        %280 = vrot.lane.b32.xlu0 %v243, 108
        %v281 = vpop.permute.xlu0 %280
        %282 = vrot.lane.b32.xlu0 %v244, 108
        %v283 = vpop.permute.xlu0 %282
        %vm284 = vcmask 883712
        %v285 = vsel %vm284, %v281, %v283
        %287 = vrot.lane.b32.xlu0 %v243, 107
        %v288 = vpop.permute.xlu0 %287
        %289 = vrot.lane.b32.xlu0 %v244, 107
        %v290 = vpop.permute.xlu0 %289
        %vm291 = vcmask 875520
        %v292 = vsel %vm291, %v288, %v290
        %294 = vrot.lane.b32.xlu0 %v243, 106
        %v295 = vpop.permute.xlu0 %294
        %296 = vrot.lane.b32.xlu0 %v244, 106
        %v297 = vpop.permute.xlu0 %296
        %vm298 = vcmask 867328
        %v299 = vsel %vm298, %v295, %v297
        %v301 = vld [vmem:[#allocation2] sm:$0xff]
        %v302 = vld [vmem:[#allocation2 + $0x8] sm:$0xff]
        %v303 = vld [vmem:[#allocation2 + $0x10] sm:$0xff]
        %v304 = vld [vmem:[#allocation2 + $0x18] sm:$0xff]
        %v305 = vld [vmem:[#allocation2 + $0x20] sm:$0xff]
        %v306 = vld [vmem:[#allocation2 + $0x28] sm:$0xff]
        %v307 = vld [vmem:[#allocation2 + $0x30] sm:$0xff]
        %v308 = vld [vmem:[#allocation2 + $0x38] sm:$0xff]
        %v317 = vunpack.c.l.b16 %v301
        %v318 = vunpack.c.h.b16 %v301
        %v319 = vunpack.c.l.b16 %v302
        %v320 = vunpack.c.h.b16 %v302
        %v321 = vunpack.c.l.b16 %v303
        %v322 = vunpack.c.h.b16 %v303
        %v323 = vunpack.c.l.b16 %v304
        %v324 = vunpack.c.h.b16 %v304
        %v325 = vunpack.c.l.b16 %v305
        %v326 = vunpack.c.h.b16 %v305
        %v327 = vunpack.c.l.b16 %v306
        %v328 = vunpack.c.h.b16 %v306
        %v329 = vunpack.c.l.b16 %v307
        %v330 = vunpack.c.h.b16 %v307
        %v331 = vunpack.c.l.b16 %v308
        %v332 = vunpack.c.h.b16 %v308
        %v333 = vpack.c.b16 %v319, %v317
        %v334 = vpack.c.b16 %v320, %v318
        %v335 = vpack.c.b16 %v323, %v321
        %v336 = vpack.c.b16 %v324, %v322
        %v337 = vpack.c.b16 %v327, %v325
        %v338 = vpack.c.b16 %v328, %v326
        %v339 = vpack.c.b16 %v331, %v329
        %v340 = vpack.c.b16 %v332, %v330
        %vm345 = vcmask 130048
        %v347 = vsel %vm345, %v334, 0
        %v350 = vsel %vm345, %v336, 0
        %v353 = vsel %vm345, %v338, 0
        %v356 = vsel %vm345, %v340, 0
        %358 = vmatprep.subr.bf16.mxu0 0
        %359 = vmatpush1.bf16.msra.mxu0 %v235
        %360 = vmatprep.subr.bf16.mxu0 0
        %361 = vmatpush1.bf16.msra.mxu0 %v250
        %362 = vmatprep.subr.bf16.mxu0 0
        %363 = vmatpush1.bf16.msra.mxu0 %v257
        %364 = vmatprep.subr.bf16.mxu0 0
        %365 = vmatpush1.bf16.msra.mxu0 %v264
        %366 = vmatprep.subr.bf16.mxu0 0
        %367 = vmatpush1.bf16.msra.mxu0 %v271
        %368 = vmatprep.subr.bf16.mxu0 0
        %369 = vmatpush1.bf16.msra.mxu0 %v278
        %370 = vmatprep.subr.bf16.mxu0 0
        %371 = vmatpush1.bf16.msra.mxu0 %v285
        %372 = vmatprep.subr.bf16.mxu0 0
        %373 = vmatpush1.bf16.msra.mxu0 %v292
        %374 = vmatprep.subr.bf16.mxu0 0
        %375 = vmatpush1.bf16.msra.mxu0 %v299
        %376 = vmatprep.subr.bf16.mxu0 0
        %377 = vmatpush1.bf16.msra.mxu0 0
        %378 = vmatprep.subr.bf16.mxu0 0
        %379 = vmatpush1.bf16.msra.mxu0 0
        %380 = vmatprep.subr.bf16.mxu0 0
        %381 = vmatpush1.bf16.msra.mxu0 0
        %382 = vmatprep.subr.bf16.mxu0 0
        %383 = vmatpush1.bf16.msra.mxu0 0
        %384 = vmatprep.subr.bf16.mxu0 0
        %385 = vmatpush1.bf16.msra.mxu0 0
        %386 = vmatprep.subr.bf16.mxu0 0
        %387 = vmatpush1.bf16.msra.mxu0 0
        %388 = vmatprep.subr.bf16.mxu0 0
        %389 = vmatpush1.bf16.msra.mxu0 0
        %390 = vmatprep.mubr.bf16.mxu0 %v347
        %391 = vmatmul.mubr.bf16.gmra.mrb[0].mxu0 %v333
        %v392 = vpop.f32.mrb[0].mxu0
        %v393 = vadd.f32 0.0, %v392
        %v394 = vpop.f32.mrb[0].mxu0
        %v395 = vpop.f32.mrb[0].mxu0
        %v396 = vadd.f32 0.0, %v395
        %v397 = vpop.f32.mrb[0].mxu0
        %398 = vmatprep.mubr.bf16.mxu0 %v350
        %399 = vmatmul.mubr.bf16.gmra.mrb[0].mxu0 %v335
        %v400 = vpop.f32.mrb[0].mxu0
        %v401 = vadd.f32 0.0, %v400
        %v402 = vpop.f32.mrb[0].mxu0
        %v403 = vpop.f32.mrb[0].mxu0
        %v404 = vadd.f32 0.0, %v403
        %v405 = vpop.f32.mrb[0].mxu0
        %406 = vmatprep.mubr.bf16.mxu0 %v353
        %407 = vmatmul.mubr.bf16.gmra.mrb[0].mxu0 %v337
        %v408 = vpop.f32.mrb[0].mxu0
        %v409 = vadd.f32 0.0, %v408
        %v410 = vpop.f32.mrb[0].mxu0
        %v411 = vpop.f32.mrb[0].mxu0
        %v412 = vadd.f32 0.0, %v411
        %v413 = vpop.f32.mrb[0].mxu0
        %414 = vmatprep.mubr.bf16.mxu0 %v356
        %415 = vmatmul.mubr.bf16.gmra.mrb[0].mxu0 %v339
        %v416 = vpop.f32.mrb[0].mxu0
        %v417 = vadd.f32 0.0, %v416
        %v418 = vpop.f32.mrb[0].mxu0
        %v419 = vpop.f32.mrb[0].mxu0
        %v420 = vadd.f32 0.0, %v419
        %v421 = vpop.f32.mrb[0].mxu0
        %422 = vdwg.mxu0
        %v423 = vpack.c.bf16 %v396, %v393
        %v424 = vpack.c.bf16 %v404, %v401
        %v425 = vpack.c.bf16 %v412, %v409
        %v426 = vpack.c.bf16 %v420, %v417
        %v431 = vunpack.c.l.b16 %v423
        %v432 = vunpack.c.h.b16 %v423
        %v433 = vunpack.c.l.b16 %v424
        %v434 = vunpack.c.h.b16 %v424
        %v435 = vunpack.c.l.b16 %v425
        %v436 = vunpack.c.h.b16 %v425
        %v437 = vunpack.c.l.b16 %v426
        %v438 = vunpack.c.h.b16 %v426
        %v439 = vpack.c.b16 %v431, %v431
        %v440 = vpack.c.b16 %v432, %v432
        %v441 = vpack.c.b16 %v433, %v433
        %v442 = vpack.c.b16 %v434, %v434
        %v443 = vpack.c.b16 %v435, %v435
        %v444 = vpack.c.b16 %v436, %v436
        %v445 = vpack.c.b16 %v437, %v437
        %v446 = vpack.c.b16 %v438, %v438
        %455 = vst [vmem:[%s220] sm:$0xf] %v439
        %456 = vst [vmem:[%s220 + $0x4] sm:$0xf] %v440
        %457 = vst [vmem:[%s220 + $0x8] sm:$0xf] %v441
        %458 = vst [vmem:[%s220 + $0xc] sm:$0xf] %v442
        %459 = vst [vmem:[%s220 + $0x10] sm:$0xf] %v443
        %460 = vst [vmem:[%s220 + $0x14] sm:$0xf] %v444
        %461 = vst [vmem:[%s220 + $0x18] sm:$0xf] %v445
        %462 = vst [vmem:[%s220 + $0x1c] sm:$0xf] %v446
        %v463 = vld [vmem:[%s2] sm:$0x1]
        %v465 = vlaneseq
        %v466 = vshrl.u32 %v465, 7
        %v467 = vsub.s32 0, %v466
        %v468 = vrot.slane %v463, %v467
        %v470 = vmul.f32 %v393, %v468
        %v471 = vmul.f32 %v396, %v468
        %v472 = vmul.f32 %v401, %v468
        %v473 = vmul.f32 %v404, %v468
        %v474 = vmul.f32 %v409, %v468
        %v475 = vmul.f32 %v412, %v468
        %v476 = vmul.f32 %v417, %v468
        %v477 = vmul.f32 %v420, %v468
        %478 = vadd.xlane.f32.xlu0 %v470
        %v479 = vpop.xlane.xlu0 %478
        %480 = vadd.xlane.f32.xlu0 %v471
        %v481 = vpop.xlane.xlu0 %480
        %482 = vadd.xlane.f32.xlu0 %v472
        %v483 = vpop.xlane.xlu0 %482
        %484 = vadd.xlane.f32.xlu0 %v473
        %v485 = vpop.xlane.xlu0 %484
        %486 = vadd.xlane.f32.xlu0 %v474
        %v487 = vpop.xlane.xlu0 %486
        %488 = vadd.xlane.f32.xlu0 %v475
        %v489 = vpop.xlane.xlu0 %488
        %490 = vadd.xlane.f32.xlu0 %v476
        %v491 = vpop.xlane.xlu0 %490
        %492 = vadd.xlane.f32.xlu0 %v477
        %v493 = vpop.xlane.xlu0 %492
        %vm494 = vcmask 7168
        %495 = vst.msk [vmem:[%s225] sm:$0xff] %vm494, %v479
        %496 = vst.msk [vmem:[%s225 + $0x8] sm:$0xff] %vm494, %v481
        %497 = vst.msk [vmem:[%s225 + $0x10] sm:$0xff] %vm494, %v483
        %498 = vst.msk [vmem:[%s225 + $0x18] sm:$0xff] %vm494, %v485
        %499 = vst.msk [vmem:[%s225 + $0x20] sm:$0xff] %vm494, %v487
        %500 = vst.msk [vmem:[%s225 + $0x28] sm:$0xff] %vm494, %v489
        %501 = vst.msk [vmem:[%s225 + $0x30] sm:$0xff] %vm494, %v491
        %502 = vst.msk [vmem:[%s225 + $0x38] sm:$0xff] %vm494, %v493
        %v503 = vmul.f32 %v470, %v393
        %v504 = vmul.f32 %v471, %v396
        %v505 = vmul.f32 %v472, %v401
        %v506 = vmul.f32 %v473, %v404
        %v507 = vmul.f32 %v474, %v409
        %v508 = vmul.f32 %v475, %v412
        %v509 = vmul.f32 %v476, %v417
        %v510 = vmul.f32 %v477, %v420
        %511 = vadd.xlane.f32.xlu0 %v503
        %v512 = vpop.xlane.xlu0 %511
        %513 = vadd.xlane.f32.xlu0 %v504
        %v514 = vpop.xlane.xlu0 %513
        %515 = vadd.xlane.f32.xlu0 %v505
        %v516 = vpop.xlane.xlu0 %515
        %517 = vadd.xlane.f32.xlu0 %v506
        %v518 = vpop.xlane.xlu0 %517
        %519 = vadd.xlane.f32.xlu0 %v507
        %v520 = vpop.xlane.xlu0 %519
        %521 = vadd.xlane.f32.xlu0 %v508
        %v522 = vpop.xlane.xlu0 %521
        %523 = vadd.xlane.f32.xlu0 %v509
        %v524 = vpop.xlane.xlu0 %523
        %525 = vadd.xlane.f32.xlu0 %v510
        %v526 = vpop.xlane.xlu0 %525
        %vm527 = vcmask 15368
        %528 = vst.msk [vmem:[%s225] sm:$0xff] %vm527, %v512
        %529 = vst.msk [vmem:[%s225 + $0x8] sm:$0xff] %vm527, %v514
        %530 = vst.msk [vmem:[%s225 + $0x10] sm:$0xff] %vm527, %v516
        %531 = vst.msk [vmem:[%s225 + $0x18] sm:$0xff] %vm527, %v518
        %532 = vst.msk [vmem:[%s225 + $0x20] sm:$0xff] %vm527, %v520
        %533 = vst.msk [vmem:[%s225 + $0x28] sm:$0xff] %vm527, %v522
        %534 = vst.msk [vmem:[%s225 + $0x30] sm:$0xff] %vm527, %v524
        %535 = vst.msk [vmem:[%s225 + $0x38] sm:$0xff] %vm527, %v526
        %p536 = scmp.lt.s32.totalorder %s17, 1
        %s537 = scalar_select %p536, %s17, 1
        %s538 = smul.addr %s537, 8
        %s539 = smul.addr %s538, 4
        %s540 = scalar_lea.vmem %s3, %s539
        %p541 = scmp.lt.s32.totalorder %s17, 1
        %s542 = scalar_select %p541, %s17, 1
        %s543 = smul.addr %s542, 8
        %s544 = smul.addr %s543, 8
        %s545 = scalar_lea.vmem %s4, %s544
        // Predicated region
        $region37: #{_forward_impl.5} parent=31 // pred_check
          %p546 = pneg %p103
        $region38: #{_forward_impl.5} parent=31 // pred_check_branch
          %548 = sbr.rel (%p546) target = $region40
        $region39: #{_forward_impl.5} parent=31 // pred_region
          _
        $region40: #{_forward_impl.5} parent=31 // pred_fallthru
          _
        // Predicated region
        $region41: #{_forward_impl.5} parent=31 // pred_check
          %p549 = pneg %p129
        $region42: #{_forward_impl.5} parent=31 // pred_check_branch
          %551 = sbr.rel (%p549) target = $region44
        $region43: #{_forward_impl.5} parent=31 // pred_region
          _
        $region44: #{_forward_impl.5} parent=31 // pred_fallthru
          _
      $region32: #{_forward_impl.5} parent=5 // pred_fallthru
        _
      %p552 = scmp.le.s32.totalorder 2, %s12
      // Predicated region
      $region45: #{_forward_impl.5} parent=5 // pred_check
        %p553 = pneg %p552
      $region46: #{_forward_impl.5} parent=5 // pred_check_branch
        %555 = sbr.rel (%p553) target = $region48
      $region47: #{_forward_impl.5} parent=5 // pred_region
        %s556 = ssub.s32 %s12, 2
        // Predicated region
        $region49: #{_forward_impl.5} parent=47 // pred_check
          %p557 = pneg %p109
        $region50: #{_forward_impl.5} parent=47 // pred_check_branch
          %559 = sbr.rel (%p557) target = $region52
        $region51: #{_forward_impl.5} parent=47 // pred_region
          %p560 = scmp.lt.s32.totalorder %s18, 1
          %s561 = scalar_select %p560, %s18, 1
          %s562 = smul.addr %s561, 8
          %s563 = smul.addr %s562, 4
          %s564 = scalar_lea.vmem %s3, %s563
        $region52: #{_forward_impl.5} parent=47 // pred_fallthru
          _
        // Predicated region
        $region53: #{_forward_impl.5} parent=47 // pred_check
          %p565 = pneg %p135
        $region54: #{_forward_impl.5} parent=47 // pred_check_branch
          %567 = sbr.rel (%p565) target = $region56
        $region55: #{_forward_impl.5} parent=47 // pred_region
          %p568 = scmp.lt.s32.totalorder %s18, 1
          %s569 = scalar_select %p568, %s18, 1
          %s570 = smul.addr %s569, 8
          %s571 = smul.addr %s570, 8
          %s572 = scalar_lea.vmem %s4, %s571
        $region56: #{_forward_impl.5} parent=47 // pred_fallthru
          _
      $region48: #{_forward_impl.5} parent=5 // pred_fallthru
        _
    $region6: #{_forward_impl.5} parent=1 // loop_footer
      %s16 = sadd.s32 1, %s12
    $region7: #{_forward_impl.5} parent=1 // loop_footer_branch
      %11 = sbr.rel target = $region3
    $region8: #{_forward_impl.5} parent=1 // loop_exit
      _
    %573 = vsyncpa [#allocation3], 1
    %s574 = scalar_lea.sflag [#allocation3], 1
    %575 = vsyncpa %s574, 1

// kernel: tile.18
$region0: #{tile.18}
  #allocation0 [shape = 's32[1]{0}', space=sflag, size = 0x4, scoped, tag = 'scoped memory for tile.18']
  %s0 = inlined_call_operand.vmem [shape: f32[16], index: 0, kind: input, shape index: {}]
  %s1 = inlined_call_operand.vmem [shape: f32[4,16], index: 1, kind: output, shape index: {}]
  // Predicated region
  $region2: #{tile.18} parent=0 // pred_check
    _
  $region3: #{tile.18} parent=0 // pred_check_branch
    %3 = sbr.rel (0) target = $region5
  $region4: #{tile.18} parent=0 // pred_region
    _
  $region5: #{tile.18} parent=0 // pred_fallthru
    _
  %v4 = vld [vmem:[%s0] ss:$0 sm:$0xff]
  %5 = vst [vmem:[%s1] sm:$0xf] %v4

// kernel: tile.0
$region0: #{tile.0}
  %s0 = inlined_call_operand.vmem [shape: f32[4,16], index: 0, kind: input, shape index: {}]
  %s1 = inlined_call_operand.vmem [shape: f32[64,1], index: 1, kind: output, shape index: {}]
  $region1: #{tile.0} parent=0
    #allocation0 [shape = 'u8[4096]{0}', space=vmem, size = 0x1000, scoped, tag = 'scoped mem for input reshape']
    %s3 = sshllo.u32 0, 4
    %v4 = vld [vmem:[%s0] sm:%s3]
    %5 = vst [vmem:[#allocation0] sm:%s3] %v4
    %v6 = vld [vmem:[#allocation0] sm:$0xf]
    %vm7 = vcmask 7168
    %8 = vst.msk [vmem:[%s1] ss:$16 sm:$0x3] %vm7, %v6
    %9 = vst.msk [vmem:[%s1] ss:$16 sm:$0xc] %vm7, %v6
    %v10 = vld [vmem:[#allocation0] sm:$0xf]
    %11 = vrot.lane.b32.xlu0 %v10, 127
    %v12 = vpop.permute.xlu0 %11
    %vm13 = vcmask 7168
    %s14 = scalar_lea.vmem %s1, 1
    %15 = vst.msk [vmem:[%s14] ss:$16 sm:$0x3] %vm13, %v12
    %s16 = scalar_lea.vmem %s1, 1
    %17 = vst.msk [vmem:[%s16] ss:$16 sm:$0xc] %vm13, %v12
    %v18 = vld [vmem:[#allocation0] sm:$0xf]
    %19 = vrot.lane.b32.xlu0 %v18, 126
    %v20 = vpop.permute.xlu0 %19
    %vm21 = vcmask 7168
    %s22 = scalar_lea.vmem %s1, 2
    %23 = vst.msk [vmem:[%s22] ss:$16 sm:$0x3] %vm21, %v20
    %s24 = scalar_lea.vmem %s1, 2
    %25 = vst.msk [vmem:[%s24] ss:$16 sm:$0xc] %vm21, %v20
    %v26 = vld [vmem:[#allocation0] sm:$0xf]
    %27 = vrot.lane.b32.xlu0 %v26, 125
    %v28 = vpop.permute.xlu0 %27
    %vm29 = vcmask 7168
    %s30 = scalar_lea.vmem %s1, 3
    %31 = vst.msk [vmem:[%s30] ss:$16 sm:$0x3] %vm29, %v28
    %s32 = scalar_lea.vmem %s1, 3
    %33 = vst.msk [vmem:[%s32] ss:$16 sm:$0xc] %vm29, %v28
    %v34 = vld [vmem:[#allocation0] sm:$0xf]
    %35 = vrot.lane.b32.xlu0 %v34, 124
    %v36 = vpop.permute.xlu0 %35
    %vm37 = vcmask 7168
    %s38 = scalar_lea.vmem %s1, 4
    %39 = vst.msk [vmem:[%s38] ss:$16 sm:$0x3] %vm37, %v36
    %s40 = scalar_lea.vmem %s1, 4
    %41 = vst.msk [vmem:[%s40] ss:$16 sm:$0xc] %vm37, %v36
    %v42 = vld [vmem:[#allocation0] sm:$0xf]
    %43 = vrot.lane.b32.xlu0 %v42, 123
    %v44 = vpop.permute.xlu0 %43
    %vm45 = vcmask 7168
    %s46 = scalar_lea.vmem %s1, 5
    %47 = vst.msk [vmem:[%s46] ss:$16 sm:$0x3] %vm45, %v44
    %s48 = scalar_lea.vmem %s1, 5
    %49 = vst.msk [vmem:[%s48] ss:$16 sm:$0xc] %vm45, %v44
    %v50 = vld [vmem:[#allocation0] sm:$0xf]
    %51 = vrot.lane.b32.xlu0 %v50, 122
    %v52 = vpop.permute.xlu0 %51
    %vm53 = vcmask 7168
    %s54 = scalar_lea.vmem %s1, 6
    %55 = vst.msk [vmem:[%s54] ss:$16 sm:$0x3] %vm53, %v52
    %s56 = scalar_lea.vmem %s1, 6
    %57 = vst.msk [vmem:[%s56] ss:$16 sm:$0xc] %vm53, %v52
    %v58 = vld [vmem:[#allocation0] sm:$0xf]
    %59 = vrot.lane.b32.xlu0 %v58, 121
    %v60 = vpop.permute.xlu0 %59
    %vm61 = vcmask 7168
    %s62 = scalar_lea.vmem %s1, 7
    %63 = vst.msk [vmem:[%s62] ss:$16 sm:$0x3] %vm61, %v60
    %s64 = scalar_lea.vmem %s1, 7
    %65 = vst.msk [vmem:[%s64] ss:$16 sm:$0xc] %vm61, %v60
    %v66 = vld [vmem:[#allocation0] sm:$0xf]
    %67 = vrot.lane.b32.xlu0 %v66, 120
    %v68 = vpop.permute.xlu0 %67
    %vm69 = vcmask 7168
    %s70 = scalar_lea.vmem %s1, 8
    %71 = vst.msk [vmem:[%s70] ss:$16 sm:$0x3] %vm69, %v68
    %s72 = scalar_lea.vmem %s1, 8
    %73 = vst.msk [vmem:[%s72] ss:$16 sm:$0xc] %vm69, %v68
    %v74 = vld [vmem:[#allocation0] sm:$0xf]
    %75 = vrot.lane.b32.xlu0 %v74, 119
    %v76 = vpop.permute.xlu0 %75
    %vm77 = vcmask 7168
    %s78 = scalar_lea.vmem %s1, 9
    %79 = vst.msk [vmem:[%s78] ss:$16 sm:$0x3] %vm77, %v76
    %s80 = scalar_lea.vmem %s1, 9
    %81 = vst.msk [vmem:[%s80] ss:$16 sm:$0xc] %vm77, %v76
    %v82 = vld [vmem:[#allocation0] sm:$0xf]
    %83 = vrot.lane.b32.xlu0 %v82, 118
    %v84 = vpop.permute.xlu0 %83
    %vm85 = vcmask 7168
    %s86 = scalar_lea.vmem %s1, 10
    %87 = vst.msk [vmem:[%s86] ss:$16 sm:$0x3] %vm85, %v84
    %s88 = scalar_lea.vmem %s1, 10
    %89 = vst.msk [vmem:[%s88] ss:$16 sm:$0xc] %vm85, %v84
    %v90 = vld [vmem:[#allocation0] sm:$0xf]
    %91 = vrot.lane.b32.xlu0 %v90, 117
    %v92 = vpop.permute.xlu0 %91
    %vm93 = vcmask 7168
    %s94 = scalar_lea.vmem %s1, 11
    %95 = vst.msk [vmem:[%s94] ss:$16 sm:$0x3] %vm93, %v92
    %s96 = scalar_lea.vmem %s1, 11
    %97 = vst.msk [vmem:[%s96] ss:$16 sm:$0xc] %vm93, %v92
    %v98 = vld [vmem:[#allocation0] sm:$0xf]
    %99 = vrot.lane.b32.xlu0 %v98, 116
    %v100 = vpop.permute.xlu0 %99
    %vm101 = vcmask 7168
    %s102 = scalar_lea.vmem %s1, 12
    %103 = vst.msk [vmem:[%s102] ss:$16 sm:$0x3] %vm101, %v100
    %s104 = scalar_lea.vmem %s1, 12
    %105 = vst.msk [vmem:[%s104] ss:$16 sm:$0xc] %vm101, %v100
    %v106 = vld [vmem:[#allocation0] sm:$0xf]
    %107 = vrot.lane.b32.xlu0 %v106, 115
    %v108 = vpop.permute.xlu0 %107
    %vm109 = vcmask 7168
    %s110 = scalar_lea.vmem %s1, 13
    %111 = vst.msk [vmem:[%s110] ss:$16 sm:$0x3] %vm109, %v108
    %s112 = scalar_lea.vmem %s1, 13
    %113 = vst.msk [vmem:[%s112] ss:$16 sm:$0xc] %vm109, %v108
    %v114 = vld [vmem:[#allocation0] sm:$0xf]
    %115 = vrot.lane.b32.xlu0 %v114, 114
    %v116 = vpop.permute.xlu0 %115
    %vm117 = vcmask 7168
    %s118 = scalar_lea.vmem %s1, 14
    %119 = vst.msk [vmem:[%s118] ss:$16 sm:$0x3] %vm117, %v116
    %s120 = scalar_lea.vmem %s1, 14
    %121 = vst.msk [vmem:[%s120] ss:$16 sm:$0xc] %vm117, %v116
    %v122 = vld [vmem:[#allocation0] sm:$0xf]
    %123 = vrot.lane.b32.xlu0 %v122, 113
    %v124 = vpop.permute.xlu0 %123
    %vm125 = vcmask 7168
    %s126 = scalar_lea.vmem %s1, 15
    %127 = vst.msk [vmem:[%s126] ss:$16 sm:$0x3] %vm125, %v124
    %s128 = scalar_lea.vmem %s1, 15
    %129 = vst.msk [vmem:[%s128] ss:$16 sm:$0xc] %vm125, %v124

// kernel: _forward_impl.6
$region0: #{_forward_impl.6}
  #allocation0 [shape = 'u32[]', space=smem, size = 0x4, offset = 0x4, fixed_abs, tag = 'smem constant byte address 0x4 - core index']
  #allocation1 [shape = 'u32[144,128]{1,0:T(1,128)}', space=vmem, size = 0x12000, scoped, tag = 'internal scratch']
  %s0 = inlined_call_operand.vmem [shape: bf16[2,16,512], index: 0, kind: input, shape index: {}]
  %s1 = inlined_call_operand.vmem [shape: bf16[64,144], index: 1, kind: input, shape index: {}]
  %s2 = inlined_call_operand.vmem [shape: f32[1,384], index: 2, kind: input, shape index: {}]
  %s3 = inlined_call_operand.vmem [shape: bf16[2,64,384], index: 3, kind: output, shape index: {0}]
  %s4 = inlined_call_operand.vmem [shape: f32[2,64,2], index: 4, kind: output, shape index: {1}]
  %5 = xla_tuple %s3, %s4
  %s6 = sld [smem:[#allocation0]]
  $region53: #{_forward_impl.6} parent=0
    _
  %s8 = ssub.s32 1, %s6
  %s9 = scalar_select 0, %s8, %s6
  loop: start=0, step=1, limit=4
  $region2: #{_forward_impl.6} parent=0 // loop_pre_header
    _
  $region3: #{_forward_impl.6} parent=0 // loop_header
    %s11 = sphi 0, %s15
    %p12 = scmp.ge.s32.totalorder %s11, 4
    %s21 = sphi 0, %s23
    %s24 = sphi 0, %s21
    %s25 = sphi 0, %s24
    %s41 = sphi 0, %s25
    %s45 = sphi 0, %s45
    %s47 = sphi 0, %s45
    %s48 = sphi 0, %s47
    %s62 = sphi 0, %s48
    %s66 = sphi 0, %s66
    %s68 = sphi 0, %s66
    %s69 = sphi 0, %s68
    %s83 = sphi 0, %s69
    %s89 = sphi 0, %s91
    %s92 = sphi 0, %s89
    %s93 = sphi 0, %s92
    %s109 = sphi 0, %s93
    %s115 = sphi 0, %s117
    %s118 = sphi 0, %s115
    %s119 = sphi 0, %s118
    %s135 = sphi 0, %s119
  $region4: #{_forward_impl.6} parent=0 // loop_header_branch
    %14 = sbr.rel (%p12) target = $region8
  $region5: #{_forward_impl.6} parent=0 // loop_body
    %s16 = ssub.s32 %s11, 1
    %s17 = ssub.s32 %s11, 2
    %s18 = sadd.s32 %s11, 1
    %s19 = ssub.s32 %s11, %s18
    %p20 = scmp.eq.s32.totalorder %s19, 0
    %s22 = sadd.s32 %s21, 1
    %s23 = scalar_select %p20, %s21, %s22
    %p26 = pneg %p20
    %p27 = scmp.eq.s32.totalorder %s11, 1
    %p28 = por %p26, %p27
    %p29 = scmp.ne.s32.totalorder %s21, %s24
    %p30 = scmp.eq.s32.totalorder %s11, 0
    %p31 = por %p29, %p30
    %p32 = scmp.ne.s32.totalorder %s21, %s24
    %p33 = scmp.eq.s32.totalorder %s16, 1
    %p34 = por %p32, %p33
    %p35 = scmp.ne.s32.totalorder %s24, %s25
    %p36 = scmp.eq.s32.totalorder %s16, 0
    %p37 = por %p35, %p36
    %p38 = scmp.ne.s32.totalorder %s24, %s25
    %p39 = scmp.eq.s32.totalorder %s17, 1
    %p40 = por %p38, %p39
    %p42 = scmp.ne.s32.totalorder %s25, %s41
    %p43 = scmp.eq.s32.totalorder %s17, 0
    %p44 = por %p42, %p43
    %s46 = sadd.s32 %s45, 1
    %p49 = scmp.eq.s32.totalorder %s11, 1
    %p50 = scmp.ne.s32.totalorder %s45, %s47
    %p51 = scmp.eq.s32.totalorder %s11, 0
    %p52 = por %p50, %p51
    %p53 = scmp.ne.s32.totalorder %s45, %s47
    %p54 = scmp.eq.s32.totalorder %s16, 1
    %p55 = por %p53, %p54
    %p56 = scmp.ne.s32.totalorder %s47, %s48
    %p57 = scmp.eq.s32.totalorder %s16, 0
    %p58 = por %p56, %p57
    %p59 = scmp.ne.s32.totalorder %s47, %s48
    %p60 = scmp.eq.s32.totalorder %s17, 1
    %p61 = por %p59, %p60
    %p63 = scmp.ne.s32.totalorder %s48, %s62
    %p64 = scmp.eq.s32.totalorder %s17, 0
    %p65 = por %p63, %p64
    %s67 = sadd.s32 %s66, 1
    %p70 = scmp.eq.s32.totalorder %s11, 1
    %p71 = scmp.ne.s32.totalorder %s66, %s68
    %p72 = scmp.eq.s32.totalorder %s11, 0
    %p73 = por %p71, %p72
    %p74 = scmp.ne.s32.totalorder %s66, %s68
    %p75 = scmp.eq.s32.totalorder %s16, 1
    %p76 = por %p74, %p75
    %p77 = scmp.ne.s32.totalorder %s68, %s69
    %p78 = scmp.eq.s32.totalorder %s16, 0
    %p79 = por %p77, %p78
    %p80 = scmp.ne.s32.totalorder %s68, %s69
    %p81 = scmp.eq.s32.totalorder %s17, 1
    %p82 = por %p80, %p81
    %p84 = scmp.ne.s32.totalorder %s69, %s83
    %p85 = scmp.eq.s32.totalorder %s17, 0
    %p86 = por %p84, %p85
    %s87 = ssub.s32 %s11, %s18
    %p88 = scmp.eq.s32.totalorder %s87, 0
    %s90 = sadd.s32 %s89, 1
    %s91 = scalar_select %p88, %s89, %s90
    %p94 = pneg %p88
    %p95 = scmp.eq.s32.totalorder %s11, 1
    %p96 = por %p94, %p95
    %p97 = scmp.ne.s32.totalorder %s89, %s92
    %p98 = scmp.eq.s32.totalorder %s11, 0
    %p99 = por %p97, %p98
    %p100 = scmp.ne.s32.totalorder %s89, %s92
    %p101 = scmp.eq.s32.totalorder %s16, 1
    %p102 = por %p100, %p101
    %p103 = scmp.ne.s32.totalorder %s92, %s93
    %p104 = scmp.eq.s32.totalorder %s16, 0
    %p105 = por %p103, %p104
    %p106 = scmp.ne.s32.totalorder %s92, %s93
    %p107 = scmp.eq.s32.totalorder %s17, 1
    %p108 = por %p106, %p107
    %p110 = scmp.ne.s32.totalorder %s93, %s109
    %p111 = scmp.eq.s32.totalorder %s17, 0
    %p112 = por %p110, %p111
    %s113 = ssub.s32 %s11, %s18
    %p114 = scmp.eq.s32.totalorder %s113, 0
    %s116 = sadd.s32 %s115, 1
    %s117 = scalar_select %p114, %s115, %s116
    %p120 = pneg %p114
    %p121 = scmp.eq.s32.totalorder %s11, 1
    %p122 = por %p120, %p121
    %p123 = scmp.ne.s32.totalorder %s115, %s118
    %p124 = scmp.eq.s32.totalorder %s11, 0
    %p125 = por %p123, %p124
    %p126 = scmp.ne.s32.totalorder %s115, %s118
    %p127 = scmp.eq.s32.totalorder %s16, 1
    %p128 = por %p126, %p127
    %p129 = scmp.ne.s32.totalorder %s118, %s119
    %p130 = scmp.eq.s32.totalorder %s16, 0
    %p131 = por %p129, %p130
    %p132 = scmp.ne.s32.totalorder %s118, %s119
    %p133 = scmp.eq.s32.totalorder %s17, 1
    %p134 = por %p132, %p133
    %p136 = scmp.ne.s32.totalorder %s119, %s135
    %p137 = scmp.eq.s32.totalorder %s17, 0
    %p138 = por %p136, %p137
    %p139 = scmp.le.s32.totalorder 1, %s11
    %p140 = scmp.lt.s32.totalorder %s11, 3
    %p141 = pnand %p139, %p140
    %p142 = pneg %p141
    // Predicated region
    $region9: #{_forward_impl.6} parent=5 // pred_check
      _
    $region10: #{_forward_impl.6} parent=5 // pred_check_branch
      %144 = sbr.rel (%p141) target = $region12
    $region11: #{_forward_impl.6} parent=5 // pred_region
      %s145 = ssub.s32 %s11, 1
      // Predicated region
      $region13: #{_forward_impl.6} parent=11 // pred_check
        %p146 = pneg %p58
      $region14: #{_forward_impl.6} parent=11 // pred_check_branch
        %148 = sbr.rel (%p146) target = $region16
      $region15: #{_forward_impl.6} parent=11 // pred_region
        _
      $region16: #{_forward_impl.6} parent=11 // pred_fallthru
        _
      // Predicated region
      $region17: #{_forward_impl.6} parent=11 // pred_check
        %p149 = pneg %p79
      $region18: #{_forward_impl.6} parent=11 // pred_check_branch
        %151 = sbr.rel (%p149) target = $region20
      $region19: #{_forward_impl.6} parent=11 // pred_region
        _
      $region20: #{_forward_impl.6} parent=11 // pred_fallthru
        _
    $region12: #{_forward_impl.6} parent=5 // pred_fallthru
      _
    %p152 = scmp.lt.s32.totalorder %s11, 2
    // Predicated region
    $region21: #{_forward_impl.6} parent=5 // pred_check
      %p153 = pneg %p152
    $region22: #{_forward_impl.6} parent=5 // pred_check_branch
      %155 = sbr.rel (%p153) target = $region24
    $region23: #{_forward_impl.6} parent=5 // pred_region
      // Predicated region
      $region25: #{_forward_impl.6} parent=23 // pred_check
        %p156 = pneg %p31
      $region26: #{_forward_impl.6} parent=23 // pred_check_branch
        %158 = sbr.rel (%p156) target = $region28
      $region27: #{_forward_impl.6} parent=23 // pred_region
        %p159 = scmp.lt.s32.totalorder %s11, 1
        %s160 = scalar_select %p159, %s11, 1
        %s161 = smul.addr %s160, 8
        %s162 = smul.addr %s161, 4
        %s163 = scalar_lea.vmem %s0, %s162
      $region28: #{_forward_impl.6} parent=23 // pred_fallthru
        _
    $region24: #{_forward_impl.6} parent=5 // pred_fallthru
      _
    %p164 = scmp.le.s32.totalorder 1, %s11
    %p165 = scmp.lt.s32.totalorder %s11, 3
    %p166 = pnand %p164, %p165
    %p167 = pneg %p166
    // Predicated region
    $region29: #{_forward_impl.6} parent=5 // pred_check
      _
    $region30: #{_forward_impl.6} parent=5 // pred_check_branch
      %169 = sbr.rel (%p166) target = $region32
    $region31: #{_forward_impl.6} parent=5 // pred_region
      %s170 = ssub.s32 %s11, 1
      %p171 = scmp.lt.s32.totalorder %s16, 1
      %s172 = scalar_select %p171, %s16, 1
      %s173 = smul.addr %s172, 8
      %s174 = smul.addr %s173, 4
      %s175 = scalar_lea.vmem %s0, %s174
      %p176 = pneg %p37
      %p177 = pneg %p34
      %p178 = pneg %p58
      %p179 = pneg %p55
      %p180 = pneg %p79
      %p181 = pneg %p76
      %p182 = pneg %p105
      %p183 = pneg %p102
      %p184 = scmp.lt.s32.totalorder %s16, 1
      %s185 = scalar_select %p184, %s16, 1
      %s186 = smul.addr %s185, 24
      %s187 = smul.addr %s186, 4
      %s188 = scalar_lea.vmem %s3, %s187
      %p189 = pneg %p131
      %p190 = pneg %p128
      %p191 = scmp.lt.s32.totalorder %s16, 1
      %s192 = scalar_select %p191, %s16, 1
      %s193 = smul.addr %s192, 8
      %s194 = smul.addr %s193, 8
      %s195 = scalar_lea.vmem %s4, %s194
      %p196 = scmp.lt.s32.totalorder %s16, 1
      %s197 = scalar_select %p196, %s16, 1
      %s198 = smul.addr %s197, 8
      %s199 = smul.addr %s198, 4
      %s200 = scalar_lea.vmem %s0, %s199
      %p201 = scmp.lt.s32.totalorder %s16, 1
      %s202 = scalar_select %p201, %s16, 1
      %s203 = smul.addr %s202, 24
      %s204 = smul.addr %s203, 4
      %s205 = scalar_lea.vmem %s3, %s204
      %p206 = scmp.lt.s32.totalorder %s16, 1
      %s207 = scalar_select %p206, %s16, 1
      %s208 = smul.addr %s207, 8
      %s209 = smul.addr %s208, 8
      %s210 = scalar_lea.vmem %s4, %s209
      %v212 = vld [vmem:[%s200] sm:$0xff]
      %v213 = vld [vmem:[%s200 + $0x8] sm:$0xf]
      %v214 = vld [vmem:[%s200 + $0x10] sm:$0xff]
      %v215 = vld [vmem:[%s200 + $0x18] sm:$0xf]
      %v216 = vld [vmem:[%s200] sm:$0xff]
      %v217 = vld [vmem:[%s200 + $0x8] sm:$0xff]
      %v218 = vld [vmem:[%s200 + $0x10] sm:$0xff]
      %v219 = vld [vmem:[%s200 + $0x18] sm:$0xff]
      %v224 = vunpack.c.l.b16 %v212
      %v225 = vunpack.c.h.b16 %v212
      %v226 = vunpack.c.l.b16 %v213
      %v227 = vunpack.c.l.b16 %v214
      %v228 = vunpack.c.h.b16 %v214
      %v229 = vunpack.c.l.b16 %v215
      %v230 = vpack.c.b16 %v227, %v224
      %v231 = vpack.c.b16 %v228, %v225
      %v232 = vpack.c.b16 %v229, %v226
      %v240 = vunpack.c.l.b16 %v216
      %v241 = vunpack.c.h.b16 %v216
      %v242 = vunpack.c.l.b16 %v217
      %v243 = vunpack.c.h.b16 %v217
      %v244 = vunpack.c.l.b16 %v218
      %v245 = vunpack.c.h.b16 %v218
      %v246 = vunpack.c.l.b16 %v219
      %v247 = vunpack.c.h.b16 %v219
      %v248 = vpack.c.b16 %v244, %v240
      %v249 = vpack.c.b16 %v245, %v241
      %v250 = vpack.c.b16 %v246, %v242
      %v251 = vpack.c.b16 %v247, %v243
      %252 = vrot.lane.b32.xlu0 %v248, 127
      %v253 = vpop.permute.xlu0 %252
      %254 = vrot.lane.b32.xlu0 %v249, 127
      %v255 = vpop.permute.xlu0 %254
      %256 = vrot.lane.b32.xlu0 %v250, 127
      %v257 = vpop.permute.xlu0 %256
      %258 = vrot.lane.b32.xlu0 %v251, 127
      %v259 = vpop.permute.xlu0 %258
      %vm260 = vcmask 1039360
      %v261 = vsel %vm260, %v253, %v255
      %v262 = vsel %vm260, %v255, %v257
      %v263 = vsel %vm260, %v257, %v259
      %267 = vrot.lane.b32.xlu0 %v248, 126
      %v268 = vpop.permute.xlu0 %267
      %269 = vrot.lane.b32.xlu0 %v249, 126
      %v270 = vpop.permute.xlu0 %269
      %271 = vrot.lane.b32.xlu0 %v250, 126
      %v272 = vpop.permute.xlu0 %271
      %273 = vrot.lane.b32.xlu0 %v251, 126
      %v274 = vpop.permute.xlu0 %273
      %vm275 = vcmask 1031168
      %v276 = vsel %vm275, %v268, %v270
      %v277 = vsel %vm275, %v270, %v272
      %v278 = vsel %vm275, %v272, %v274
      %282 = vrot.lane.b32.xlu0 %v248, 110
      %v283 = vpop.permute.xlu0 %282
      %284 = vrot.lane.b32.xlu0 %v249, 110
      %v285 = vpop.permute.xlu0 %284
      %286 = vrot.lane.b32.xlu0 %v250, 110
      %v287 = vpop.permute.xlu0 %286
      %288 = vrot.lane.b32.xlu0 %v251, 110
      %v289 = vpop.permute.xlu0 %288
      %vm290 = vcmask 900096
      %v291 = vsel %vm290, %v283, %v285
      %v292 = vsel %vm290, %v285, %v287
      %v293 = vsel %vm290, %v287, %v289
      %297 = vrot.lane.b32.xlu0 %v248, 109
      %v298 = vpop.permute.xlu0 %297
      %299 = vrot.lane.b32.xlu0 %v249, 109
      %v300 = vpop.permute.xlu0 %299
      %301 = vrot.lane.b32.xlu0 %v250, 109
      %v302 = vpop.permute.xlu0 %301
      %303 = vrot.lane.b32.xlu0 %v251, 109
      %v304 = vpop.permute.xlu0 %303
      %vm305 = vcmask 891904
      %v306 = vsel %vm305, %v298, %v300
      %v307 = vsel %vm305, %v300, %v302
      %v308 = vsel %vm305, %v302, %v304
      %312 = vrot.lane.b32.xlu0 %v248, 108
      %v313 = vpop.permute.xlu0 %312
      %314 = vrot.lane.b32.xlu0 %v249, 108
      %v315 = vpop.permute.xlu0 %314
      %316 = vrot.lane.b32.xlu0 %v250, 108
      %v317 = vpop.permute.xlu0 %316
      %318 = vrot.lane.b32.xlu0 %v251, 108
      %v319 = vpop.permute.xlu0 %318
      %vm320 = vcmask 883712
      %v321 = vsel %vm320, %v313, %v315
      %v322 = vsel %vm320, %v315, %v317
      %v323 = vsel %vm320, %v317, %v319
      %327 = vrot.lane.b32.xlu0 %v248, 92
      %v328 = vpop.permute.xlu0 %327
      %329 = vrot.lane.b32.xlu0 %v249, 92
      %v330 = vpop.permute.xlu0 %329
      %331 = vrot.lane.b32.xlu0 %v250, 92
      %v332 = vpop.permute.xlu0 %331
      %333 = vrot.lane.b32.xlu0 %v251, 92
      %v334 = vpop.permute.xlu0 %333
      %vm335 = vcmask 752640
      %v336 = vsel %vm335, %v328, %v330
      %v337 = vsel %vm335, %v330, %v332
      %v338 = vsel %vm335, %v332, %v334
      %342 = vrot.lane.b32.xlu0 %v248, 91
      %v343 = vpop.permute.xlu0 %342
      %344 = vrot.lane.b32.xlu0 %v249, 91
      %v345 = vpop.permute.xlu0 %344
      %346 = vrot.lane.b32.xlu0 %v250, 91
      %v347 = vpop.permute.xlu0 %346
      %348 = vrot.lane.b32.xlu0 %v251, 91
      %v349 = vpop.permute.xlu0 %348
      %vm350 = vcmask 744448
      %v351 = vsel %vm350, %v343, %v345
      %v352 = vsel %vm350, %v345, %v347
      %v353 = vsel %vm350, %v347, %v349
      %357 = vrot.lane.b32.xlu0 %v248, 90
      %v358 = vpop.permute.xlu0 %357
      %359 = vrot.lane.b32.xlu0 %v249, 90
      %v360 = vpop.permute.xlu0 %359
      %361 = vrot.lane.b32.xlu0 %v250, 90
      %v362 = vpop.permute.xlu0 %361
      %363 = vrot.lane.b32.xlu0 %v251, 90
      %v364 = vpop.permute.xlu0 %363
      %vm365 = vcmask 736256
      %v366 = vsel %vm365, %v358, %v360
      %v367 = vsel %vm365, %v360, %v362
      %v368 = vsel %vm365, %v362, %v364
      %v372 = vld [vmem:[%s1] sm:$0xff]
      %v373 = vld [vmem:[%s1 + $0x8] sm:$0xff]
      %v374 = vld [vmem:[%s1 + $0x10] sm:$0xff]
      %v375 = vld [vmem:[%s1 + $0x18] sm:$0xff]
      %v376 = vld [vmem:[%s1 + $0x20] sm:$0xff]
      %v377 = vld [vmem:[%s1 + $0x28] sm:$0xff]
      %v378 = vld [vmem:[%s1 + $0x30] sm:$0xff]
      %v379 = vld [vmem:[%s1 + $0x38] sm:$0xff]
      %v388 = vunpack.c.l.b16 %v372
      %v389 = vunpack.c.h.b16 %v372
      %v390 = vunpack.c.l.b16 %v373
      %v391 = vunpack.c.h.b16 %v373
      %v392 = vunpack.c.l.b16 %v374
      %v393 = vunpack.c.h.b16 %v374
      %v394 = vunpack.c.l.b16 %v375
      %v395 = vunpack.c.h.b16 %v375
      %v396 = vunpack.c.l.b16 %v376
      %v397 = vunpack.c.h.b16 %v376
      %v398 = vunpack.c.l.b16 %v377
      %v399 = vunpack.c.h.b16 %v377
      %v400 = vunpack.c.l.b16 %v378
      %v401 = vunpack.c.h.b16 %v378
      %v402 = vunpack.c.l.b16 %v379
      %v403 = vunpack.c.h.b16 %v379
      %v404 = vpack.c.b16 %v390, %v388
      %v405 = vpack.c.b16 %v391, %v389
      %v406 = vpack.c.b16 %v394, %v392
      %v407 = vpack.c.b16 %v395, %v393
      %v408 = vpack.c.b16 %v398, %v396
      %v409 = vpack.c.b16 %v399, %v397
      %v410 = vpack.c.b16 %v402, %v400
      %v411 = vpack.c.b16 %v403, %v401
      %vm416 = vcmask 130048
      %v418 = vsel %vm416, %v405, 0
      %v421 = vsel %vm416, %v407, 0
      %v424 = vsel %vm416, %v409, 0
      %v427 = vsel %vm416, %v411, 0
      %429 = vmatprep.subr.bf16.mxu0 %v231
      %430 = vmatpush1.bf16.msra.mxu0 %v230
      %431 = vmatprep.subr.bf16.mxu0 %v262
      %432 = vmatpush1.bf16.msra.mxu0 %v261
      %433 = vmatprep.subr.bf16.mxu0 %v277
      %434 = vmatpush1.bf16.msra.mxu0 %v276
      %435 = vmatprep.subr.bf16.mxu0 %v292
      %436 = vmatpush1.bf16.msra.mxu0 %v291
      %437 = vmatprep.subr.bf16.mxu0 %v307
      %438 = vmatpush1.bf16.msra.mxu0 %v306
      %439 = vmatprep.subr.bf16.mxu0 %v322
      %440 = vmatpush1.bf16.msra.mxu0 %v321
      %441 = vmatprep.subr.bf16.mxu0 %v337
      %442 = vmatpush1.bf16.msra.mxu0 %v336
      %443 = vmatprep.subr.bf16.mxu0 %v352
      %444 = vmatpush1.bf16.msra.mxu0 %v351
      %445 = vmatprep.subr.bf16.mxu0 %v367
      %446 = vmatpush1.bf16.msra.mxu0 %v366
      %447 = vmatprep.subr.bf16.mxu0 0
      %448 = vmatpush1.bf16.msra.mxu0 0
      %449 = vmatprep.subr.bf16.mxu0 0
      %450 = vmatpush1.bf16.msra.mxu0 0
      %451 = vmatprep.subr.bf16.mxu0 0
      %452 = vmatpush1.bf16.msra.mxu0 0
      %453 = vmatprep.subr.bf16.mxu0 0
      %454 = vmatpush1.bf16.msra.mxu0 0
      %455 = vmatprep.subr.bf16.mxu0 0
      %456 = vmatpush1.bf16.msra.mxu0 0
      %457 = vmatprep.subr.bf16.mxu0 0
      %458 = vmatpush1.bf16.msra.mxu0 0
      %459 = vmatprep.subr.bf16.mxu0 0
      %460 = vmatpush1.bf16.msra.mxu0 0
      %461 = vmatprep.mubr.bf16.mxu0 %v418
      %462 = vmatmul.mubr.bf16.gmra.mrb[0].mxu0 %v404
      %v463 = vpop.f32.mrb[0].mxu0
      %v464 = vadd.f32 0.0, %v463
      %v465 = vpop.f32.mrb[0].mxu0
      %v466 = vadd.f32 0.0, %v465
      %v467 = vpop.f32.mrb[0].mxu0
      %v468 = vadd.f32 0.0, %v467
      %v469 = vpop.f32.mrb[0].mxu0
      %v470 = vadd.f32 0.0, %v469
      %471 = vmatprep.mubr.bf16.mxu0 %v421
      %472 = vmatmul.mubr.bf16.gmra.mrb[0].mxu0 %v406
      %v473 = vpop.f32.mrb[0].mxu0
      %v474 = vadd.f32 0.0, %v473
      %v475 = vpop.f32.mrb[0].mxu0
      %v476 = vadd.f32 0.0, %v475
      %v477 = vpop.f32.mrb[0].mxu0
      %v478 = vadd.f32 0.0, %v477
      %v479 = vpop.f32.mrb[0].mxu0
      %v480 = vadd.f32 0.0, %v479
      %481 = vmatprep.mubr.bf16.mxu0 %v424
      %482 = vmatmul.mubr.bf16.gmra.mrb[0].mxu0 %v408
      %v483 = vpop.f32.mrb[0].mxu0
      %v484 = vadd.f32 0.0, %v483
      %v485 = vpop.f32.mrb[0].mxu0
      %v486 = vadd.f32 0.0, %v485
      %v487 = vpop.f32.mrb[0].mxu0
      %v488 = vadd.f32 0.0, %v487
      %v489 = vpop.f32.mrb[0].mxu0
      %v490 = vadd.f32 0.0, %v489
      %491 = vmatprep.mubr.bf16.mxu0 %v427
      %492 = vmatmul.mubr.bf16.gmra.mrb[0].mxu0 %v410
      %v493 = vpop.f32.mrb[0].mxu0
      %v494 = vadd.f32 0.0, %v493
      %v495 = vpop.f32.mrb[0].mxu0
      %v496 = vadd.f32 0.0, %v495
      %v497 = vpop.f32.mrb[0].mxu0
      %v498 = vadd.f32 0.0, %v497
      %v499 = vpop.f32.mrb[0].mxu0
      %v500 = vadd.f32 0.0, %v499
      %501 = vdwg.mxu0
      %502 = vmatprep.subr.bf16.mxu0 0
      %503 = vmatpush1.bf16.msra.mxu0 %v232
      %504 = vmatprep.subr.bf16.mxu0 0
      %505 = vmatpush1.bf16.msra.mxu0 %v263
      %506 = vmatprep.subr.bf16.mxu0 0
      %507 = vmatpush1.bf16.msra.mxu0 %v278
      %508 = vmatprep.subr.bf16.mxu0 0
      %509 = vmatpush1.bf16.msra.mxu0 %v293
      %510 = vmatprep.subr.bf16.mxu0 0
      %511 = vmatpush1.bf16.msra.mxu0 %v308
      %512 = vmatprep.subr.bf16.mxu0 0
      %513 = vmatpush1.bf16.msra.mxu0 %v323
      %514 = vmatprep.subr.bf16.mxu0 0
      %515 = vmatpush1.bf16.msra.mxu0 %v338
      %516 = vmatprep.subr.bf16.mxu0 0
      %517 = vmatpush1.bf16.msra.mxu0 %v353
      %518 = vmatprep.subr.bf16.mxu0 0
      %519 = vmatpush1.bf16.msra.mxu0 %v368
      %520 = vmatprep.subr.bf16.mxu0 0
      %521 = vmatpush1.bf16.msra.mxu0 0
      %522 = vmatprep.subr.bf16.mxu0 0
      %523 = vmatpush1.bf16.msra.mxu0 0
      %524 = vmatprep.subr.bf16.mxu0 0
      %525 = vmatpush1.bf16.msra.mxu0 0
      %526 = vmatprep.subr.bf16.mxu0 0
      %527 = vmatpush1.bf16.msra.mxu0 0
      %528 = vmatprep.subr.bf16.mxu0 0
      %529 = vmatpush1.bf16.msra.mxu0 0
      %530 = vmatprep.subr.bf16.mxu0 0
      %531 = vmatpush1.bf16.msra.mxu0 0
      %532 = vmatprep.subr.bf16.mxu0 0
      %533 = vmatpush1.bf16.msra.mxu0 0
      %534 = vmatprep.mubr.bf16.mxu0 %v418
      %535 = vmatmul.mubr.bf16.gmra.mrb[0].mxu0 %v404
      %v536 = vpop.f32.mrb[0].mxu0
      %v537 = vadd.f32 0.0, %v536
      %v538 = vpop.f32.mrb[0].mxu0
      %v539 = vpop.f32.mrb[0].mxu0
      %v540 = vadd.f32 0.0, %v539
      %v541 = vpop.f32.mrb[0].mxu0
      %542 = vmatprep.mubr.bf16.mxu0 %v421
      %543 = vmatmul.mubr.bf16.gmra.mrb[0].mxu0 %v406
      %v544 = vpop.f32.mrb[0].mxu0
      %v545 = vadd.f32 0.0, %v544
      %v546 = vpop.f32.mrb[0].mxu0
      %v547 = vpop.f32.mrb[0].mxu0
      %v548 = vadd.f32 0.0, %v547
      %v549 = vpop.f32.mrb[0].mxu0
      %550 = vmatprep.mubr.bf16.mxu0 %v424
      %551 = vmatmul.mubr.bf16.gmra.mrb[0].mxu0 %v408
      %v552 = vpop.f32.mrb[0].mxu0
      %v553 = vadd.f32 0.0, %v552
      %v554 = vpop.f32.mrb[0].mxu0
      %v555 = vpop.f32.mrb[0].mxu0
      %v556 = vadd.f32 0.0, %v555
      %v557 = vpop.f32.mrb[0].mxu0
      %558 = vmatprep.mubr.bf16.mxu0 %v427
      %559 = vmatmul.mubr.bf16.gmra.mrb[0].mxu0 %v410
      %v560 = vpop.f32.mrb[0].mxu0
      %v561 = vadd.f32 0.0, %v560
      %v562 = vpop.f32.mrb[0].mxu0
      %v563 = vpop.f32.mrb[0].mxu0
      %v564 = vadd.f32 0.0, %v563
      %v565 = vpop.f32.mrb[0].mxu0
      %566 = vdwg.mxu0
      %v567 = vpack.c.bf16 %v468, %v464
      %v568 = vpack.c.bf16 %v470, %v466
      %v569 = vpack.c.bf16 %v540, %v537
      %v570 = vpack.c.bf16 %v478, %v474
      %v571 = vpack.c.bf16 %v480, %v476
      %v572 = vpack.c.bf16 %v548, %v545
      %v573 = vpack.c.bf16 %v488, %v484
      %v574 = vpack.c.bf16 %v490, %v486
      %v575 = vpack.c.bf16 %v556, %v553
      %v576 = vpack.c.bf16 %v498, %v494
      %v577 = vpack.c.bf16 %v500, %v496
      %v578 = vpack.c.bf16 %v564, %v561
      %v591 = vunpack.c.l.b16 %v567
      %v592 = vunpack.c.l.b16 %v568
      %v593 = vunpack.c.l.b16 %v569
      %v594 = vunpack.c.h.b16 %v567
      %v595 = vunpack.c.h.b16 %v568
      %v596 = vunpack.c.h.b16 %v569
      %v597 = vunpack.c.l.b16 %v570
      %v598 = vunpack.c.l.b16 %v571
      %v599 = vunpack.c.l.b16 %v572
      %v600 = vunpack.c.h.b16 %v570
      %v601 = vunpack.c.h.b16 %v571
      %v602 = vunpack.c.h.b16 %v572
      %v603 = vunpack.c.l.b16 %v573
      %v604 = vunpack.c.l.b16 %v574
      %v605 = vunpack.c.l.b16 %v575
      %v606 = vunpack.c.h.b16 %v573
      %v607 = vunpack.c.h.b16 %v574
      %v608 = vunpack.c.h.b16 %v575
      %v609 = vunpack.c.l.b16 %v576
      %v610 = vunpack.c.l.b16 %v577
      %v611 = vunpack.c.l.b16 %v578
      %v612 = vunpack.c.h.b16 %v576
      %v613 = vunpack.c.h.b16 %v577
      %v614 = vunpack.c.h.b16 %v578
      %v615 = vpack.c.b16 %v592, %v591
      %v616 = vpack.c.b16 %v593, %v593
      %v617 = vpack.c.b16 %v595, %v594
      %v618 = vpack.c.b16 %v596, %v596
      %v619 = vpack.c.b16 %v598, %v597
      %v620 = vpack.c.b16 %v599, %v599
      %v621 = vpack.c.b16 %v601, %v600
      %v622 = vpack.c.b16 %v602, %v602
      %v623 = vpack.c.b16 %v604, %v603
      %v624 = vpack.c.b16 %v605, %v605
      %v625 = vpack.c.b16 %v607, %v606
      %v626 = vpack.c.b16 %v608, %v608
      %v627 = vpack.c.b16 %v610, %v609
      %v628 = vpack.c.b16 %v611, %v611
      %v629 = vpack.c.b16 %v613, %v612
      %v630 = vpack.c.b16 %v614, %v614
      %647 = vst [vmem:[%s205] sm:$0xff] %v615
      %648 = vst [vmem:[%s205 + $0x8] sm:$0xf] %v616
      %649 = vst [vmem:[%s205 + $0xc] sm:$0xff] %v617
      %650 = vst [vmem:[%s205 + $0x14] sm:$0xf] %v618
      %651 = vst [vmem:[%s205 + $0x18] sm:$0xff] %v619
      %652 = vst [vmem:[%s205 + $0x20] sm:$0xf] %v620
      %653 = vst [vmem:[%s205 + $0x24] sm:$0xff] %v621
      %654 = vst [vmem:[%s205 + $0x2c] sm:$0xf] %v622
      %655 = vst [vmem:[%s205 + $0x30] sm:$0xff] %v623
      %656 = vst [vmem:[%s205 + $0x38] sm:$0xf] %v624
      %657 = vst [vmem:[%s205 + $0x3c] sm:$0xff] %v625
      %658 = vst [vmem:[%s205 + $0x44] sm:$0xf] %v626
      %659 = vst [vmem:[%s205 + $0x48] sm:$0xff] %v627
      %660 = vst [vmem:[%s205 + $0x50] sm:$0xf] %v628
      %661 = vst [vmem:[%s205 + $0x54] sm:$0xff] %v629
      %662 = vst [vmem:[%s205 + $0x5c] sm:$0xf] %v630
      %v663 = vld [vmem:[%s2] sm:$0x7]
      %v665 = vlaneseq
      %v666 = vshrl.u32 %v665, 7
      %v667 = vsub.s32 0, %v666
      %v668 = vrot.slane %v663, %v667
      %v669 = vlaneseq
      %v670 = vshrl.u32 %v669, 7
      %v671 = vsub.s32 1, %v670
      %v672 = vrot.slane %v663, %v671
      %v673 = vlaneseq
      %v674 = vshrl.u32 %v673, 7
      %v675 = vsub.s32 2, %v674
      %v676 = vrot.slane %v663, %v675
      %v680 = vmul.f32 %v464, %v668
      %v681 = vmul.f32 %v466, %v672
      %v682 = vmul.f32 %v537, %v676
      %v683 = vmul.f32 %v468, %v668
      %v684 = vmul.f32 %v470, %v672
      %v685 = vmul.f32 %v540, %v676
      %v686 = vmul.f32 %v474, %v668
      %v687 = vmul.f32 %v476, %v672
      %v688 = vmul.f32 %v545, %v676
      %v689 = vmul.f32 %v478, %v668
      %v690 = vmul.f32 %v480, %v672
      %v691 = vmul.f32 %v548, %v676
      %v692 = vmul.f32 %v484, %v668
      %v693 = vmul.f32 %v486, %v672
      %v694 = vmul.f32 %v553, %v676
      %v695 = vmul.f32 %v488, %v668
      %v696 = vmul.f32 %v490, %v672
      %v697 = vmul.f32 %v556, %v676
      %v698 = vmul.f32 %v494, %v668
      %v699 = vmul.f32 %v496, %v672
      %v700 = vmul.f32 %v561, %v676
      %v701 = vmul.f32 %v498, %v668
      %v702 = vmul.f32 %v500, %v672
      %v703 = vmul.f32 %v564, %v676
      %v704 = vadd.f32 %v680, %v681
      %v705 = vadd.f32 %v704, %v682
      %706 = vadd.xlane.f32.xlu0 %v705
      %v707 = vpop.xlane.xlu0 %706
      %v708 = vadd.f32 %v683, %v684
      %v709 = vadd.f32 %v708, %v685
      %710 = vadd.xlane.f32.xlu0 %v709
      %v711 = vpop.xlane.xlu0 %710
      %v712 = vadd.f32 %v686, %v687
      %v713 = vadd.f32 %v712, %v688
      %714 = vadd.xlane.f32.xlu0 %v713
      %v715 = vpop.xlane.xlu0 %714
      %v716 = vadd.f32 %v689, %v690
      %v717 = vadd.f32 %v716, %v691
      %718 = vadd.xlane.f32.xlu0 %v717
      %v719 = vpop.xlane.xlu0 %718
      %v720 = vadd.f32 %v692, %v693
      %v721 = vadd.f32 %v720, %v694
      %722 = vadd.xlane.f32.xlu0 %v721
      %v723 = vpop.xlane.xlu0 %722
      %v724 = vadd.f32 %v695, %v696
      %v725 = vadd.f32 %v724, %v697
      %726 = vadd.xlane.f32.xlu0 %v725
      %v727 = vpop.xlane.xlu0 %726
      %v728 = vadd.f32 %v698, %v699
      %v729 = vadd.f32 %v728, %v700
      %730 = vadd.xlane.f32.xlu0 %v729
      %v731 = vpop.xlane.xlu0 %730
      %v732 = vadd.f32 %v701, %v702
      %v733 = vadd.f32 %v732, %v703
      %734 = vadd.xlane.f32.xlu0 %v733
      %v735 = vpop.xlane.xlu0 %734
      %vm736 = vcmask 7168
      %737 = vst.msk [vmem:[%s210] sm:$0xff] %vm736, %v707
      %738 = vst.msk [vmem:[%s210 + $0x8] sm:$0xff] %vm736, %v711
      %739 = vst.msk [vmem:[%s210 + $0x10] sm:$0xff] %vm736, %v715
      %740 = vst.msk [vmem:[%s210 + $0x18] sm:$0xff] %vm736, %v719
      %741 = vst.msk [vmem:[%s210 + $0x20] sm:$0xff] %vm736, %v723
      %742 = vst.msk [vmem:[%s210 + $0x28] sm:$0xff] %vm736, %v727
      %743 = vst.msk [vmem:[%s210 + $0x30] sm:$0xff] %vm736, %v731
      %744 = vst.msk [vmem:[%s210 + $0x38] sm:$0xff] %vm736, %v735
      %v745 = vmul.f32 %v680, %v464
      %v746 = vmul.f32 %v681, %v466
      %v747 = vmul.f32 %v682, %v537
      %v748 = vmul.f32 %v683, %v468
      %v749 = vmul.f32 %v684, %v470
      %v750 = vmul.f32 %v685, %v540
      %v751 = vmul.f32 %v686, %v474
      %v752 = vmul.f32 %v687, %v476
      %v753 = vmul.f32 %v688, %v545
      %v754 = vmul.f32 %v689, %v478
      %v755 = vmul.f32 %v690, %v480
      %v756 = vmul.f32 %v691, %v548
      %v757 = vmul.f32 %v692, %v484
      %v758 = vmul.f32 %v693, %v486
      %v759 = vmul.f32 %v694, %v553
      %v760 = vmul.f32 %v695, %v488
      %v761 = vmul.f32 %v696, %v490
      %v762 = vmul.f32 %v697, %v556
      %v763 = vmul.f32 %v698, %v494
      %v764 = vmul.f32 %v699, %v496
      %v765 = vmul.f32 %v700, %v561
      %v766 = vmul.f32 %v701, %v498
      %v767 = vmul.f32 %v702, %v500
      %v768 = vmul.f32 %v703, %v564
      %v769 = vadd.f32 %v745, %v746
      %v770 = vadd.f32 %v769, %v747
      %771 = vadd.xlane.f32.xlu0 %v770
      %v772 = vpop.xlane.xlu0 %771
      %v773 = vadd.f32 %v748, %v749
      %v774 = vadd.f32 %v773, %v750
      %775 = vadd.xlane.f32.xlu0 %v774
      %v776 = vpop.xlane.xlu0 %775
      %v777 = vadd.f32 %v751, %v752
      %v778 = vadd.f32 %v777, %v753
      %779 = vadd.xlane.f32.xlu0 %v778
      %v780 = vpop.xlane.xlu0 %779
      %v781 = vadd.f32 %v754, %v755
      %v782 = vadd.f32 %v781, %v756
      %783 = vadd.xlane.f32.xlu0 %v782
      %v784 = vpop.xlane.xlu0 %783
      %v785 = vadd.f32 %v757, %v758
      %v786 = vadd.f32 %v785, %v759
      %787 = vadd.xlane.f32.xlu0 %v786
      %v788 = vpop.xlane.xlu0 %787
      %v789 = vadd.f32 %v760, %v761
      %v790 = vadd.f32 %v789, %v762
      %791 = vadd.xlane.f32.xlu0 %v790
      %v792 = vpop.xlane.xlu0 %791
      %v793 = vadd.f32 %v763, %v764
      %v794 = vadd.f32 %v793, %v765
      %795 = vadd.xlane.f32.xlu0 %v794
      %v796 = vpop.xlane.xlu0 %795
      %v797 = vadd.f32 %v766, %v767
      %v798 = vadd.f32 %v797, %v768
      %799 = vadd.xlane.f32.xlu0 %v798
      %v800 = vpop.xlane.xlu0 %799
      %vm801 = vcmask 15368
      %802 = vst.msk [vmem:[%s210] sm:$0xff] %vm801, %v772
      %803 = vst.msk [vmem:[%s210 + $0x8] sm:$0xff] %vm801, %v776
      %804 = vst.msk [vmem:[%s210 + $0x10] sm:$0xff] %vm801, %v780
      %805 = vst.msk [vmem:[%s210 + $0x18] sm:$0xff] %vm801, %v784
      %806 = vst.msk [vmem:[%s210 + $0x20] sm:$0xff] %vm801, %v788
      %807 = vst.msk [vmem:[%s210 + $0x28] sm:$0xff] %vm801, %v792
      %808 = vst.msk [vmem:[%s210 + $0x30] sm:$0xff] %vm801, %v796
      %809 = vst.msk [vmem:[%s210 + $0x38] sm:$0xff] %vm801, %v800
      %p810 = scmp.lt.s32.totalorder %s16, 1
      %s811 = scalar_select %p810, %s16, 1
      %s812 = smul.addr %s811, 24
      %s813 = smul.addr %s812, 4
      %s814 = scalar_lea.vmem %s3, %s813
      %p815 = scmp.lt.s32.totalorder %s16, 1
      %s816 = scalar_select %p815, %s16, 1
      %s817 = smul.addr %s816, 8
      %s818 = smul.addr %s817, 8
      %s819 = scalar_lea.vmem %s4, %s818
      // Predicated region
      $region33: #{_forward_impl.6} parent=31 // pred_check
        %p820 = pneg %p102
      $region34: #{_forward_impl.6} parent=31 // pred_check_branch
        %822 = sbr.rel (%p820) target = $region36
      $region35: #{_forward_impl.6} parent=31 // pred_region
        _
      $region36: #{_forward_impl.6} parent=31 // pred_fallthru
        _
      // Predicated region
      $region37: #{_forward_impl.6} parent=31 // pred_check
        %p823 = pneg %p128
      $region38: #{_forward_impl.6} parent=31 // pred_check_branch
        %825 = sbr.rel (%p823) target = $region40
      $region39: #{_forward_impl.6} parent=31 // pred_region
        _
      $region40: #{_forward_impl.6} parent=31 // pred_fallthru
        _
    $region32: #{_forward_impl.6} parent=5 // pred_fallthru
      _
    %p826 = scmp.le.s32.totalorder 2, %s11
    // Predicated region
    $region41: #{_forward_impl.6} parent=5 // pred_check
      %p827 = pneg %p826
    $region42: #{_forward_impl.6} parent=5 // pred_check_branch
      %829 = sbr.rel (%p827) target = $region44
    $region43: #{_forward_impl.6} parent=5 // pred_region
      %s830 = ssub.s32 %s11, 2
      // Predicated region
      $region45: #{_forward_impl.6} parent=43 // pred_check
        %p831 = pneg %p108
      $region46: #{_forward_impl.6} parent=43 // pred_check_branch
        %833 = sbr.rel (%p831) target = $region48
      $region47: #{_forward_impl.6} parent=43 // pred_region
        %p834 = scmp.lt.s32.totalorder %s17, 1
        %s835 = scalar_select %p834, %s17, 1
        %s836 = smul.addr %s835, 24
        %s837 = smul.addr %s836, 4
        %s838 = scalar_lea.vmem %s3, %s837
      $region48: #{_forward_impl.6} parent=43 // pred_fallthru
        _
      // Predicated region
      $region49: #{_forward_impl.6} parent=43 // pred_check
        %p839 = pneg %p134
      $region50: #{_forward_impl.6} parent=43 // pred_check_branch
        %841 = sbr.rel (%p839) target = $region52
      $region51: #{_forward_impl.6} parent=43 // pred_region
        %p842 = scmp.lt.s32.totalorder %s17, 1
        %s843 = scalar_select %p842, %s17, 1
        %s844 = smul.addr %s843, 8
        %s845 = smul.addr %s844, 8
        %s846 = scalar_lea.vmem %s4, %s845
      $region52: #{_forward_impl.6} parent=43 // pred_fallthru
        _
    $region44: #{_forward_impl.6} parent=5 // pred_fallthru
      _
  $region6: #{_forward_impl.6} parent=0 // loop_footer
    %s15 = sadd.s32 1, %s11
  $region7: #{_forward_impl.6} parent=0 // loop_footer_branch
    %10 = sbr.rel target = $region3
  $region8: #{_forward_impl.6} parent=0 // loop_exit
    _

// kernel: _forward_impl.7
$region0: #{_forward_impl.7}
  #allocation0 [shape = 'u32[]', space=smem, size = 0x4, offset = 0x4, fixed_abs, tag = 'smem constant byte address 0x4 - core index']
  #allocation1 [shape = 'u32[144,128]{1,0:T(1,128)}', space=vmem, size = 0x12000, scoped, tag = 'internal scratch']
  %s0 = inlined_call_operand.vmem [shape: bf16[2,64,384], index: 0, kind: input, shape index: {}]
  %s1 = inlined_call_operand.vmem [shape: f32[64,1], index: 1, kind: input, shape index: {}]
  %s2 = inlined_call_operand.vmem [shape: f32[64,1], index: 2, kind: input, shape index: {}]
  %s3 = inlined_call_operand.vmem [shape: bf16[12,64], index: 3, kind: input, shape index: {}]
  %s4 = inlined_call_operand.vmem [shape: f32[12,1], index: 4, kind: input, shape index: {}]
  %s5 = inlined_call_operand.vmem [shape: bf16[2,12,384], index: 5, kind: output, shape index: {}]
  %s6 = sld [smem:[#allocation0]]
  $region53: #{_forward_impl.7} parent=0
    _
  %s8 = ssub.s32 1, %s6
  %s9 = scalar_select 0, %s8, %s6
  loop: start=0, step=1, limit=4
  $region2: #{_forward_impl.7} parent=0 // loop_pre_header
    _
  $region3: #{_forward_impl.7} parent=0 // loop_header
    %s11 = sphi 0, %s15
    %p12 = scmp.ge.s32.totalorder %s11, 4
    %s21 = sphi 0, %s23
    %s24 = sphi 0, %s21
    %s25 = sphi 0, %s24
    %s41 = sphi 0, %s25
    %s45 = sphi 0, %s45
    %s47 = sphi 0, %s45
    %s48 = sphi 0, %s47
    %s62 = sphi 0, %s48
    %s66 = sphi 0, %s66
    %s68 = sphi 0, %s66
    %s69 = sphi 0, %s68
    %s83 = sphi 0, %s69
    %s87 = sphi 0, %s87
    %s89 = sphi 0, %s87
    %s90 = sphi 0, %s89
    %s104 = sphi 0, %s90
    %s108 = sphi 0, %s108
    %s110 = sphi 0, %s108
    %s111 = sphi 0, %s110
    %s125 = sphi 0, %s111
    %s131 = sphi 0, %s133
    %s134 = sphi 0, %s131
    %s135 = sphi 0, %s134
    %s151 = sphi 0, %s135
  $region4: #{_forward_impl.7} parent=0 // loop_header_branch
    %14 = sbr.rel (%p12) target = $region8
  $region5: #{_forward_impl.7} parent=0 // loop_body
    %s16 = ssub.s32 %s11, 1
    %s17 = ssub.s32 %s11, 2
    %s18 = sadd.s32 %s11, 1
    %s19 = ssub.s32 %s11, %s18
    %p20 = scmp.eq.s32.totalorder %s19, 0
    %s22 = sadd.s32 %s21, 1
    %s23 = scalar_select %p20, %s21, %s22
    %p26 = pneg %p20
    %p27 = scmp.eq.s32.totalorder %s11, 1
    %p28 = por %p26, %p27
    %p29 = scmp.ne.s32.totalorder %s21, %s24
    %p30 = scmp.eq.s32.totalorder %s11, 0
    %p31 = por %p29, %p30
    %p32 = scmp.ne.s32.totalorder %s21, %s24
    %p33 = scmp.eq.s32.totalorder %s16, 1
    %p34 = por %p32, %p33
    %p35 = scmp.ne.s32.totalorder %s24, %s25
    %p36 = scmp.eq.s32.totalorder %s16, 0
    %p37 = por %p35, %p36
    %p38 = scmp.ne.s32.totalorder %s24, %s25
    %p39 = scmp.eq.s32.totalorder %s17, 1
    %p40 = por %p38, %p39
    %p42 = scmp.ne.s32.totalorder %s25, %s41
    %p43 = scmp.eq.s32.totalorder %s17, 0
    %p44 = por %p42, %p43
    %s46 = sadd.s32 %s45, 1
    %p49 = scmp.eq.s32.totalorder %s11, 1
    %p50 = scmp.ne.s32.totalorder %s45, %s47
    %p51 = scmp.eq.s32.totalorder %s11, 0
    %p52 = por %p50, %p51
    %p53 = scmp.ne.s32.totalorder %s45, %s47
    %p54 = scmp.eq.s32.totalorder %s16, 1
    %p55 = por %p53, %p54
    %p56 = scmp.ne.s32.totalorder %s47, %s48
    %p57 = scmp.eq.s32.totalorder %s16, 0
    %p58 = por %p56, %p57
    %p59 = scmp.ne.s32.totalorder %s47, %s48
    %p60 = scmp.eq.s32.totalorder %s17, 1
    %p61 = por %p59, %p60
    %p63 = scmp.ne.s32.totalorder %s48, %s62
    %p64 = scmp.eq.s32.totalorder %s17, 0
    %p65 = por %p63, %p64
    %s67 = sadd.s32 %s66, 1
    %p70 = scmp.eq.s32.totalorder %s11, 1
    %p71 = scmp.ne.s32.totalorder %s66, %s68
    %p72 = scmp.eq.s32.totalorder %s11, 0
    %p73 = por %p71, %p72
    %p74 = scmp.ne.s32.totalorder %s66, %s68
    %p75 = scmp.eq.s32.totalorder %s16, 1
    %p76 = por %p74, %p75
    %p77 = scmp.ne.s32.totalorder %s68, %s69
    %p78 = scmp.eq.s32.totalorder %s16, 0
    %p79 = por %p77, %p78
    %p80 = scmp.ne.s32.totalorder %s68, %s69
    %p81 = scmp.eq.s32.totalorder %s17, 1
    %p82 = por %p80, %p81
    %p84 = scmp.ne.s32.totalorder %s69, %s83
    %p85 = scmp.eq.s32.totalorder %s17, 0
    %p86 = por %p84, %p85
    %s88 = sadd.s32 %s87, 1
    %p91 = scmp.eq.s32.totalorder %s11, 1
    %p92 = scmp.ne.s32.totalorder %s87, %s89
    %p93 = scmp.eq.s32.totalorder %s11, 0
    %p94 = por %p92, %p93
    %p95 = scmp.ne.s32.totalorder %s87, %s89
    %p96 = scmp.eq.s32.totalorder %s16, 1
    %p97 = por %p95, %p96
    %p98 = scmp.ne.s32.totalorder %s89, %s90
    %p99 = scmp.eq.s32.totalorder %s16, 0
    %p100 = por %p98, %p99
    %p101 = scmp.ne.s32.totalorder %s89, %s90
    %p102 = scmp.eq.s32.totalorder %s17, 1
    %p103 = por %p101, %p102
    %p105 = scmp.ne.s32.totalorder %s90, %s104
    %p106 = scmp.eq.s32.totalorder %s17, 0
    %p107 = por %p105, %p106
    %s109 = sadd.s32 %s108, 1
    %p112 = scmp.eq.s32.totalorder %s11, 1
    %p113 = scmp.ne.s32.totalorder %s108, %s110
    %p114 = scmp.eq.s32.totalorder %s11, 0
    %p115 = por %p113, %p114
    %p116 = scmp.ne.s32.totalorder %s108, %s110
    %p117 = scmp.eq.s32.totalorder %s16, 1
    %p118 = por %p116, %p117
    %p119 = scmp.ne.s32.totalorder %s110, %s111
    %p120 = scmp.eq.s32.totalorder %s16, 0
    %p121 = por %p119, %p120
    %p122 = scmp.ne.s32.totalorder %s110, %s111
    %p123 = scmp.eq.s32.totalorder %s17, 1
    %p124 = por %p122, %p123
    %p126 = scmp.ne.s32.totalorder %s111, %s125
    %p127 = scmp.eq.s32.totalorder %s17, 0
    %p128 = por %p126, %p127
    %s129 = ssub.s32 %s11, %s18
    %p130 = scmp.eq.s32.totalorder %s129, 0
    %s132 = sadd.s32 %s131, 1
    %s133 = scalar_select %p130, %s131, %s132
    %p136 = pneg %p130
    %p137 = scmp.eq.s32.totalorder %s11, 1
    %p138 = por %p136, %p137
    %p139 = scmp.ne.s32.totalorder %s131, %s134
    %p140 = scmp.eq.s32.totalorder %s11, 0
    %p141 = por %p139, %p140
    %p142 = scmp.ne.s32.totalorder %s131, %s134
    %p143 = scmp.eq.s32.totalorder %s16, 1
    %p144 = por %p142, %p143
    %p145 = scmp.ne.s32.totalorder %s134, %s135
    %p146 = scmp.eq.s32.totalorder %s16, 0
    %p147 = por %p145, %p146
    %p148 = scmp.ne.s32.totalorder %s134, %s135
    %p149 = scmp.eq.s32.totalorder %s17, 1
    %p150 = por %p148, %p149
    %p152 = scmp.ne.s32.totalorder %s135, %s151
    %p153 = scmp.eq.s32.totalorder %s17, 0
    %p154 = por %p152, %p153
    %p155 = scmp.le.s32.totalorder 1, %s11
    %p156 = scmp.lt.s32.totalorder %s11, 3
    %p157 = pnand %p155, %p156
    %p158 = pneg %p157
    // Predicated region
    $region9: #{_forward_impl.7} parent=5 // pred_check
      _
    $region10: #{_forward_impl.7} parent=5 // pred_check_branch
      %160 = sbr.rel (%p157) target = $region12
    $region11: #{_forward_impl.7} parent=5 // pred_region
      %s161 = ssub.s32 %s11, 1
      // Predicated region
      $region13: #{_forward_impl.7} parent=11 // pred_check
        %p162 = pneg %p58
      $region14: #{_forward_impl.7} parent=11 // pred_check_branch
        %164 = sbr.rel (%p162) target = $region16
      $region15: #{_forward_impl.7} parent=11 // pred_region
        _
      $region16: #{_forward_impl.7} parent=11 // pred_fallthru
        _
      // Predicated region
      $region17: #{_forward_impl.7} parent=11 // pred_check
        %p165 = pneg %p79
      $region18: #{_forward_impl.7} parent=11 // pred_check_branch
        %167 = sbr.rel (%p165) target = $region20
      $region19: #{_forward_impl.7} parent=11 // pred_region
        _
      $region20: #{_forward_impl.7} parent=11 // pred_fallthru
        _
      // Predicated region
      $region21: #{_forward_impl.7} parent=11 // pred_check
        %p168 = pneg %p100
      $region22: #{_forward_impl.7} parent=11 // pred_check_branch
        %170 = sbr.rel (%p168) target = $region24
      $region23: #{_forward_impl.7} parent=11 // pred_region
        _
      $region24: #{_forward_impl.7} parent=11 // pred_fallthru
        _
      // Predicated region
      $region25: #{_forward_impl.7} parent=11 // pred_check
        %p171 = pneg %p121
      $region26: #{_forward_impl.7} parent=11 // pred_check_branch
        %173 = sbr.rel (%p171) target = $region28
      $region27: #{_forward_impl.7} parent=11 // pred_region
        _
      $region28: #{_forward_impl.7} parent=11 // pred_fallthru
        _
    $region12: #{_forward_impl.7} parent=5 // pred_fallthru
      _
    %p174 = scmp.lt.s32.totalorder %s11, 2
    // Predicated region
    $region29: #{_forward_impl.7} parent=5 // pred_check
      %p175 = pneg %p174
    $region30: #{_forward_impl.7} parent=5 // pred_check_branch
      %177 = sbr.rel (%p175) target = $region32
    $region31: #{_forward_impl.7} parent=5 // pred_region
      // Predicated region
      $region33: #{_forward_impl.7} parent=31 // pred_check
        %p178 = pneg %p31
      $region34: #{_forward_impl.7} parent=31 // pred_check_branch
        %180 = sbr.rel (%p178) target = $region36
      $region35: #{_forward_impl.7} parent=31 // pred_region
        %p181 = scmp.lt.s32.totalorder %s11, 1
        %s182 = scalar_select %p181, %s11, 1
        %s183 = smul.addr %s182, 24
        %s184 = smul.addr %s183, 4
        %s185 = scalar_lea.vmem %s0, %s184
      $region36: #{_forward_impl.7} parent=31 // pred_fallthru
        _
    $region32: #{_forward_impl.7} parent=5 // pred_fallthru
      _
    %p186 = scmp.le.s32.totalorder 1, %s11
    %p187 = scmp.lt.s32.totalorder %s11, 3
    %p188 = pnand %p186, %p187
    %p189 = pneg %p188
    // Predicated region
    $region37: #{_forward_impl.7} parent=5 // pred_check
      _
    $region38: #{_forward_impl.7} parent=5 // pred_check_branch
      %191 = sbr.rel (%p188) target = $region40
    $region39: #{_forward_impl.7} parent=5 // pred_region
      %s192 = ssub.s32 %s11, 1
      %p193 = scmp.lt.s32.totalorder %s16, 1
      %s194 = scalar_select %p193, %s16, 1
      %s195 = smul.addr %s194, 24
      %s196 = smul.addr %s195, 4
      %s197 = scalar_lea.vmem %s0, %s196
      %p198 = pneg %p37
      %p199 = pneg %p34
      %p200 = pneg %p58
      %p201 = pneg %p55
      %p202 = pneg %p79
      %p203 = pneg %p76
      %p204 = pneg %p100
      %p205 = pneg %p97
      %p206 = pneg %p121
      %p207 = pneg %p118
      %p208 = pneg %p147
      %p209 = pneg %p144
      %p210 = scmp.lt.s32.totalorder %s16, 1
      %s211 = scalar_select %p210, %s16, 1
      %s212 = smul.addr %s211, 6
      %s213 = smul.addr %s212, 4
      %s214 = scalar_lea.vmem %s5, %s213
      %p215 = scmp.lt.s32.totalorder %s16, 1
      %s216 = scalar_select %p215, %s16, 1
      %s217 = smul.addr %s216, 24
      %s218 = smul.addr %s217, 4
      %s219 = scalar_lea.vmem %s0, %s218
      %p220 = scmp.lt.s32.totalorder %s16, 1
      %s221 = scalar_select %p220, %s16, 1
      %s222 = smul.addr %s221, 6
      %s223 = smul.addr %s222, 4
      %s224 = scalar_lea.vmem %s5, %s223
      %v226 = vld [vmem:[%s219] sm:$0xff]
      %v227 = vld [vmem:[%s219 + $0x8] sm:$0xf]
      %v228 = vld [vmem:[%s219 + $0xc] sm:$0xff]
      %v229 = vld [vmem:[%s219 + $0x14] sm:$0xf]
      %v230 = vld [vmem:[%s219 + $0x18] sm:$0xff]
      %v231 = vld [vmem:[%s219 + $0x20] sm:$0xf]
      %v232 = vld [vmem:[%s219 + $0x24] sm:$0xff]
      %v233 = vld [vmem:[%s219 + $0x2c] sm:$0xf]
      %v234 = vld [vmem:[%s219 + $0x30] sm:$0xff]
      %v235 = vld [vmem:[%s219 + $0x38] sm:$0xf]
      %v236 = vld [vmem:[%s219 + $0x3c] sm:$0xff]
      %v237 = vld [vmem:[%s219 + $0x44] sm:$0xf]
      %v238 = vld [vmem:[%s219 + $0x48] sm:$0xff]
      %v239 = vld [vmem:[%s219 + $0x50] sm:$0xf]
      %v240 = vld [vmem:[%s219 + $0x54] sm:$0xff]
      %v241 = vld [vmem:[%s219 + $0x5c] sm:$0xf]
      %v242 = vunpack.c.l.bf16 %v226
      %v243 = vunpack.c.h.bf16 %v226
      %v244 = vunpack.c.l.bf16 %v227
      %v245 = vunpack.c.l.bf16 %v228
      %v246 = vunpack.c.h.bf16 %v228
      %v247 = vunpack.c.l.bf16 %v229
      %v248 = vunpack.c.l.bf16 %v230
      %v249 = vunpack.c.h.bf16 %v230
      %v250 = vunpack.c.l.bf16 %v231
      %v251 = vunpack.c.l.bf16 %v232
      %v252 = vunpack.c.h.bf16 %v232
      %v253 = vunpack.c.l.bf16 %v233
      %v254 = vunpack.c.l.bf16 %v234
      %v255 = vunpack.c.h.bf16 %v234
      %v256 = vunpack.c.l.bf16 %v235
      %v257 = vunpack.c.l.bf16 %v236
      %v258 = vunpack.c.h.bf16 %v236
      %v259 = vunpack.c.l.bf16 %v237
      %v260 = vunpack.c.l.bf16 %v238
      %v261 = vunpack.c.h.bf16 %v238
      %v262 = vunpack.c.l.bf16 %v239
      %v263 = vunpack.c.l.bf16 %v240
      %v264 = vunpack.c.h.bf16 %v240
      %v265 = vunpack.c.l.bf16 %v241
      %v266 = vld [vmem:[%s1] sm:$0xff]
      %v267 = vld [vmem:[%s1 + $0x8] sm:$0xff]
      %v268 = vld [vmem:[%s1 + $0x10] sm:$0xff]
      %v269 = vld [vmem:[%s1 + $0x18] sm:$0xff]
      %v270 = vld [vmem:[%s1 + $0x20] sm:$0xff]
      %v271 = vld [vmem:[%s1 + $0x28] sm:$0xff]
      %v272 = vld [vmem:[%s1 + $0x30] sm:$0xff]
      %v273 = vld [vmem:[%s1 + $0x38] sm:$0xff]
      %275 = vset.pattern.permute.xlu0 0
      %276 = vperm.xlu0 %275, %v266
      %v277 = vpop.permute.xlu0 %276
      %280 = vset.pattern.permute.xlu0 0
      %281 = vperm.xlu0 %280, %v267
      %v282 = vpop.permute.xlu0 %281
      %285 = vset.pattern.permute.xlu0 0
      %286 = vperm.xlu0 %285, %v268
      %v287 = vpop.permute.xlu0 %286
      %290 = vset.pattern.permute.xlu0 0
      %291 = vperm.xlu0 %290, %v269
      %v292 = vpop.permute.xlu0 %291
      %295 = vset.pattern.permute.xlu0 0
      %296 = vperm.xlu0 %295, %v270
      %v297 = vpop.permute.xlu0 %296
      %300 = vset.pattern.permute.xlu0 0
      %301 = vperm.xlu0 %300, %v271
      %v302 = vpop.permute.xlu0 %301
      %305 = vset.pattern.permute.xlu0 0
      %306 = vperm.xlu0 %305, %v272
      %v307 = vpop.permute.xlu0 %306
      %310 = vset.pattern.permute.xlu0 0
      %311 = vperm.xlu0 %310, %v273
      %v312 = vpop.permute.xlu0 %311
      %v314 = vmul.f32 %v242, %v277
      %v315 = vmul.f32 %v243, %v277
      %v316 = vmul.f32 %v244, %v277
      %v317 = vmul.f32 %v245, %v282
      %v318 = vmul.f32 %v246, %v282
      %v319 = vmul.f32 %v247, %v282
      %v320 = vmul.f32 %v248, %v287
      %v321 = vmul.f32 %v249, %v287
      %v322 = vmul.f32 %v250, %v287
      %v323 = vmul.f32 %v251, %v292
      %v324 = vmul.f32 %v252, %v292
      %v325 = vmul.f32 %v253, %v292
      %v326 = vmul.f32 %v254, %v297
      %v327 = vmul.f32 %v255, %v297
      %v328 = vmul.f32 %v256, %v297
      %v329 = vmul.f32 %v257, %v302
      %v330 = vmul.f32 %v258, %v302
      %v331 = vmul.f32 %v259, %v302
      %v332 = vmul.f32 %v260, %v307
      %v333 = vmul.f32 %v261, %v307
      %v334 = vmul.f32 %v262, %v307
      %v335 = vmul.f32 %v263, %v312
      %v336 = vmul.f32 %v264, %v312
      %v337 = vmul.f32 %v265, %v312
      %v338 = vld [vmem:[%s2] sm:$0xff]
      %v339 = vld [vmem:[%s2 + $0x8] sm:$0xff]
      %v340 = vld [vmem:[%s2 + $0x10] sm:$0xff]
      %v341 = vld [vmem:[%s2 + $0x18] sm:$0xff]
      %v342 = vld [vmem:[%s2 + $0x20] sm:$0xff]
      %v343 = vld [vmem:[%s2 + $0x28] sm:$0xff]
      %v344 = vld [vmem:[%s2 + $0x30] sm:$0xff]
      %v345 = vld [vmem:[%s2 + $0x38] sm:$0xff]
      %347 = vset.pattern.permute.xlu0 0
      %348 = vperm.xlu0 %347, %v338
      %v349 = vpop.permute.xlu0 %348
      %352 = vset.pattern.permute.xlu0 0
      %353 = vperm.xlu0 %352, %v339
      %v354 = vpop.permute.xlu0 %353
      %357 = vset.pattern.permute.xlu0 0
      %358 = vperm.xlu0 %357, %v340
      %v359 = vpop.permute.xlu0 %358
      %362 = vset.pattern.permute.xlu0 0
      %363 = vperm.xlu0 %362, %v341
      %v364 = vpop.permute.xlu0 %363
      %367 = vset.pattern.permute.xlu0 0
      %368 = vperm.xlu0 %367, %v342
      %v369 = vpop.permute.xlu0 %368
      %372 = vset.pattern.permute.xlu0 0
      %373 = vperm.xlu0 %372, %v343
      %v374 = vpop.permute.xlu0 %373
      %377 = vset.pattern.permute.xlu0 0
      %378 = vperm.xlu0 %377, %v344
      %v379 = vpop.permute.xlu0 %378
      %382 = vset.pattern.permute.xlu0 0
      %383 = vperm.xlu0 %382, %v345
      %v384 = vpop.permute.xlu0 %383
      %v386 = vadd.f32 %v314, %v349
      %v387 = vadd.f32 %v315, %v349
      %v388 = vadd.f32 %v316, %v349
      %v389 = vadd.f32 %v317, %v354
      %v390 = vadd.f32 %v318, %v354
      %v391 = vadd.f32 %v319, %v354
      %v392 = vadd.f32 %v320, %v359
      %v393 = vadd.f32 %v321, %v359
      %v394 = vadd.f32 %v322, %v359
      %v395 = vadd.f32 %v323, %v364
      %v396 = vadd.f32 %v324, %v364
      %v397 = vadd.f32 %v325, %v364
      %v398 = vadd.f32 %v326, %v369
      %v399 = vadd.f32 %v327, %v369
      %v400 = vadd.f32 %v328, %v369
      %v401 = vadd.f32 %v329, %v374
      %v402 = vadd.f32 %v330, %v374
      %v403 = vadd.f32 %v331, %v374
      %v404 = vadd.f32 %v332, %v379
      %v405 = vadd.f32 %v333, %v379
      %v406 = vadd.f32 %v334, %v379
      %v407 = vadd.f32 %v335, %v384
      %v408 = vadd.f32 %v336, %v384
      %v409 = vadd.f32 %v337, %v384
      %v410 = vmax.f32 %v386, 0.0
      %v411 = vmax.f32 %v387, 0.0
      %v412 = vmax.f32 %v388, 0.0
      %v413 = vmax.f32 %v389, 0.0
      %v414 = vmax.f32 %v390, 0.0
      %v415 = vmax.f32 %v391, 0.0
      %v416 = vmax.f32 %v392, 0.0
      %v417 = vmax.f32 %v393, 0.0
      %v418 = vmax.f32 %v394, 0.0
      %v419 = vmax.f32 %v395, 0.0
      %v420 = vmax.f32 %v396, 0.0
      %v421 = vmax.f32 %v397, 0.0
      %v422 = vmax.f32 %v398, 0.0
      %v423 = vmax.f32 %v399, 0.0
      %v424 = vmax.f32 %v400, 0.0
      %v425 = vmax.f32 %v401, 0.0
      %v426 = vmax.f32 %v402, 0.0
      %v427 = vmax.f32 %v403, 0.0
      %v428 = vmax.f32 %v404, 0.0
      %v429 = vmax.f32 %v405, 0.0
      %v430 = vmax.f32 %v406, 0.0
      %v431 = vmax.f32 %v407, 0.0
      %v432 = vmax.f32 %v408, 0.0
      %v433 = vmax.f32 %v409, 0.0
      %v434 = vpack.c.bf16 %v413, %v410
      %v435 = vpack.c.bf16 %v414, %v411
      %v436 = vpack.c.bf16 %v415, %v412
      %v437 = vpack.c.bf16 %v419, %v416
      %v438 = vpack.c.bf16 %v420, %v417
      %v439 = vpack.c.bf16 %v421, %v418
      %v440 = vpack.c.bf16 %v425, %v422
      %v441 = vpack.c.bf16 %v426, %v423
      %v442 = vpack.c.bf16 %v427, %v424
      %v443 = vpack.c.bf16 %v431, %v428
      %v444 = vpack.c.bf16 %v432, %v429
      %v445 = vpack.c.bf16 %v433, %v430
      %v446 = vld [vmem:[%s3] sm:$0xf]
      %v447 = vld [vmem:[%s3 + $0x4] sm:$0x3]
      %v448 = vld [vmem:[%s4] sm:$0xff]
      %v449 = vld [vmem:[%s4 + $0x8] sm:$0xf]
      %451 = vset.pattern.permute.xlu0 0
      %452 = vperm.xlu0 %451, %v448
      %v453 = vpop.permute.xlu0 %452
      %456 = vset.pattern.permute.xlu0 0
      %457 = vperm.xlu0 %456, %v449
      %v458 = vpop.permute.xlu0 %457
      %v462 = vunpack.c.l.b16 %v446
      %v463 = vunpack.c.l.b16 %v447
      %v464 = vpack.c.b16 %v463, %v462
      %vm465 = vcmask 523264
      %v467 = vsel %vm465, %v464, 0
      %469 = vmatprep.subr.bf16.mxu0 %v435
      %470 = vmatpush1.bf16.msra.mxu0 %v434
      %471 = vmatprep.subr.bf16.mxu0 %v438
      %472 = vmatpush1.bf16.msra.mxu0 %v437
      %473 = vmatprep.subr.bf16.mxu0 %v441
      %474 = vmatpush1.bf16.msra.mxu0 %v440
      %475 = vmatprep.subr.bf16.mxu0 %v444
      %476 = vmatpush1.bf16.msra.mxu0 %v443
      %477 = vmatprep.subr.bf16.mxu0 0
      %478 = vmatpush1.bf16.msra.mxu0 0
      %479 = vmatprep.subr.bf16.mxu0 0
      %480 = vmatpush1.bf16.msra.mxu0 0
      %481 = vmatprep.subr.bf16.mxu0 0
      %482 = vmatpush1.bf16.msra.mxu0 0
      %483 = vmatprep.subr.bf16.mxu0 0
      %484 = vmatpush1.bf16.msra.mxu0 0
      %485 = vmatprep.subr.bf16.mxu0 0
      %486 = vmatpush1.bf16.msra.mxu0 0
      %487 = vmatprep.subr.bf16.mxu0 0
      %488 = vmatpush1.bf16.msra.mxu0 0
      %489 = vmatprep.subr.bf16.mxu0 0
      %490 = vmatpush1.bf16.msra.mxu0 0
      %491 = vmatprep.subr.bf16.mxu0 0
      %492 = vmatpush1.bf16.msra.mxu0 0
      %493 = vmatprep.subr.bf16.mxu0 0
      %494 = vmatpush1.bf16.msra.mxu0 0
      %495 = vmatprep.subr.bf16.mxu0 0
      %496 = vmatpush1.bf16.msra.mxu0 0
      %497 = vmatprep.subr.bf16.mxu0 0
      %498 = vmatpush1.bf16.msra.mxu0 0
      %499 = vmatprep.subr.bf16.mxu0 0
      %500 = vmatpush1.bf16.msra.mxu0 0
      %501 = vmatprep.mubr.bf16.mxu0 0
      %502 = vmatmul.mubr.bf16.gmra.mrb[0].mxu0 %v467
      %v503 = vpop.f32.mrb[0].mxu0
      %v504 = vadd.f32 %v453, %v503
      %v505 = vpop.f32.mrb[0].mxu0
      %v506 = vadd.f32 %v453, %v505
      %v507 = vpop.f32.mrb[0].mxu0
      %v508 = vadd.f32 %v458, %v507
      %v509 = vpop.f32.mrb[0].mxu0
      %v510 = vadd.f32 %v458, %v509
      %511 = vdwg.mxu0
      %512 = vmatprep.subr.bf16.mxu0 0
      %513 = vmatpush1.bf16.msra.mxu0 %v436
      %514 = vmatprep.subr.bf16.mxu0 0
      %515 = vmatpush1.bf16.msra.mxu0 %v439
      %516 = vmatprep.subr.bf16.mxu0 0
      %517 = vmatpush1.bf16.msra.mxu0 %v442
      %518 = vmatprep.subr.bf16.mxu0 0
      %519 = vmatpush1.bf16.msra.mxu0 %v445
      %520 = vmatprep.subr.bf16.mxu0 0
      %521 = vmatpush1.bf16.msra.mxu0 0
      %522 = vmatprep.subr.bf16.mxu0 0
      %523 = vmatpush1.bf16.msra.mxu0 0
      %524 = vmatprep.subr.bf16.mxu0 0
      %525 = vmatpush1.bf16.msra.mxu0 0
      %526 = vmatprep.subr.bf16.mxu0 0
      %527 = vmatpush1.bf16.msra.mxu0 0
      %528 = vmatprep.subr.bf16.mxu0 0
      %529 = vmatpush1.bf16.msra.mxu0 0
      %530 = vmatprep.subr.bf16.mxu0 0
      %531 = vmatpush1.bf16.msra.mxu0 0
      %532 = vmatprep.subr.bf16.mxu0 0
      %533 = vmatpush1.bf16.msra.mxu0 0
      %534 = vmatprep.subr.bf16.mxu0 0
      %535 = vmatpush1.bf16.msra.mxu0 0
      %536 = vmatprep.subr.bf16.mxu0 0
      %537 = vmatpush1.bf16.msra.mxu0 0
      %538 = vmatprep.subr.bf16.mxu0 0
      %539 = vmatpush1.bf16.msra.mxu0 0
      %540 = vmatprep.subr.bf16.mxu0 0
      %541 = vmatpush1.bf16.msra.mxu0 0
      %542 = vmatprep.subr.bf16.mxu0 0
      %543 = vmatpush1.bf16.msra.mxu0 0
      %544 = vmatprep.mubr.bf16.mxu0 0
      %545 = vmatmul.mubr.bf16.gmra.mrb[0].mxu0 %v467
      %v546 = vpop.f32.mrb[0].mxu0
      %v547 = vadd.f32 %v453, %v546
      %v548 = vpop.f32.mrb[0].mxu0
      %v549 = vpop.f32.mrb[0].mxu0
      %v550 = vadd.f32 %v458, %v549
      %v551 = vpop.f32.mrb[0].mxu0
      %552 = vdwg.mxu0
      %v553 = vsub.f32 0.0, %v504
      %v554 = vsub.f32 0.0, %v506
      %v555 = vsub.f32 0.0, %v547
      %v556 = vsub.f32 0.0, %v508
      %v557 = vsub.f32 0.0, %v510
      %v558 = vsub.f32 0.0, %v550
      %v559 = vmul.f32 %v553, 1.442695
      %v560 = vpow.pop %v559
      %v561 = vmul.f32 %v554, 1.442695
      %v562 = vpow.pop %v561
      %v563 = vmul.f32 %v555, 1.442695
      %v564 = vpow.pop %v563
      %v565 = vmul.f32 %v556, 1.442695
      %v566 = vpow.pop %v565
      %v567 = vmul.f32 %v557, 1.442695
      %v568 = vpow.pop %v567
      %v569 = vmul.f32 %v558, 1.442695
      %v570 = vpow.pop %v569
      %v571 = vadd.f32 %v560, 1.0
      %v572 = vadd.f32 %v562, 1.0
      %v573 = vadd.f32 %v564, 1.0
      %v574 = vadd.f32 %v566, 1.0
      %v575 = vadd.f32 %v568, 1.0
      %v576 = vadd.f32 %v570, 1.0
      %v577 = vrcp.pop %v571
      %v578 = vmul.f32 1.0, %v577
      %v579 = vrcp.pop %v572
      %v580 = vmul.f32 1.0, %v579
      %v581 = vrcp.pop %v573
      %v582 = vmul.f32 1.0, %v581
      %v583 = vrcp.pop %v574
      %v584 = vmul.f32 1.0, %v583
      %v585 = vrcp.pop %v575
      %v586 = vmul.f32 1.0, %v585
      %v587 = vrcp.pop %v576
      %v588 = vmul.f32 1.0, %v587
      %v589 = vpack.c.bf16 %v584, %v578
      %v590 = vpack.c.bf16 %v586, %v580
      %v591 = vpack.c.bf16 %v588, %v582
      %v595 = vunpack.c.l.b16 %v589
      %v596 = vunpack.c.l.b16 %v590
      %v597 = vunpack.c.l.b16 %v591
      %v598 = vunpack.c.h.b16 %v589
      %v599 = vunpack.c.h.b16 %v590
      %v600 = vunpack.c.h.b16 %v591
      %v601 = vpack.c.b16 %v596, %v595
      %v602 = vpack.c.b16 %v597, %v597
      %v603 = vpack.c.b16 %v599, %v598
      %v604 = vpack.c.b16 %v600, %v600
      %609 = vst [vmem:[%s224] sm:$0xff] %v601
      %610 = vst [vmem:[%s224 + $0x8] sm:$0xf] %v602
      %611 = vst [vmem:[%s224 + $0xc] sm:$0x33] %v603
      %612 = vst [vmem:[%s224 + $0x14] sm:$0x3] %v604
      %p613 = scmp.lt.s32.totalorder %s16, 1
      %s614 = scalar_select %p613, %s16, 1
      %s615 = smul.addr %s614, 6
      %s616 = smul.addr %s615, 4
      %s617 = scalar_lea.vmem %s5, %s616
      // Predicated region
      $region41: #{_forward_impl.7} parent=39 // pred_check
        %p618 = pneg %p144
      $region42: #{_forward_impl.7} parent=39 // pred_check_branch
        %620 = sbr.rel (%p618) target = $region44
      $region43: #{_forward_impl.7} parent=39 // pred_region
        _
      $region44: #{_forward_impl.7} parent=39 // pred_fallthru
        _
    $region40: #{_forward_impl.7} parent=5 // pred_fallthru
      _
    %p621 = scmp.le.s32.totalorder 2, %s11
    // Predicated region
    $region45: #{_forward_impl.7} parent=5 // pred_check
      %p622 = pneg %p621
    $region46: #{_forward_impl.7} parent=5 // pred_check_branch
      %624 = sbr.rel (%p622) target = $region48
    $region47: #{_forward_impl.7} parent=5 // pred_region
      %s625 = ssub.s32 %s11, 2
      // Predicated region
      $region49: #{_forward_impl.7} parent=47 // pred_check
        %p626 = pneg %p150
      $region50: #{_forward_impl.7} parent=47 // pred_check_branch
        %628 = sbr.rel (%p626) target = $region52
      $region51: #{_forward_impl.7} parent=47 // pred_region
        %p629 = scmp.lt.s32.totalorder %s17, 1
        %s630 = scalar_select %p629, %s17, 1
        %s631 = smul.addr %s630, 6
        %s632 = smul.addr %s631, 4
        %s633 = scalar_lea.vmem %s5, %s632
      $region52: #{_forward_impl.7} parent=47 // pred_fallthru
        _
    $region48: #{_forward_impl.7} parent=5 // pred_fallthru
      _
  $region6: #{_forward_impl.7} parent=0 // loop_footer
    %s15 = sadd.s32 1, %s11
  $region7: #{_forward_impl.7} parent=0 // loop_footer_branch
    %10 = sbr.rel target = $region3
  $region8: #{_forward_impl.7} parent=0 // loop_exit
    _

</llo_original>
